<compile_context>
chip_gen: v6e
topology: v6e:2x2x1
jax: 0.10.0
libtpu: 0.0.40
codegen_flags: <defaults>
</compile_context>

<pallas_src>
import functools

import jax
import jax.numpy as jnp
import numpy as np
from jax import lax
from jax.experimental import pallas as pl
from jax.experimental.pallas import tpu as pltpu

# cfg-equivalent constants (standard faster-rcnn defaults)
ANCHOR_SCALES = (8, 16, 32)
ANCHOR_RATIOS = (0.5, 1.0, 2.0)
NUM_ANCHORS = len(ANCHOR_SCALES) * len(ANCHOR_RATIOS)   # 9
NC_SCORE = 2 * NUM_ANCHORS                              # 18
NC_BBOX = 4 * NUM_ANCHORS                               # 36

# Sublane-aligned padded head layout (all multiples of 8):
#   rows [0, 9)   : cls "s0"  (channels 0..8   of RPN_cls_score)
#   rows [16, 25) : cls "s1"  (channels 9..17  of RPN_cls_score)
#   rows [32, 68) : bbox      (36 channels of RPN_bbox_pred)
_CLS_HALF = 16                       # >= NUM_ANCHORS, multiple of 8
_CLS_SLAB = 2 * _CLS_HALF            # 32
_BBOX_SLAB = 40                      # 4*A = 36 padded to a multiple of 8
_HEAD_ROWS = _CLS_SLAB + _BBOX_SLAB  # 72


def _round_up(x, m):
    return (x + m - 1) // m * m


def _rpn_kernel(x_ref, wconv_ref, whead_ref, bhead_ref,
                cls_ref, prob_ref, bbox_ref, *, wp):
    """One (batch, spatial-tile) grid step; channels-first, flat spatial.

    x_ref:     (1, 1, Cin_p, TL + 2*wp + 2) bf16  halo'ed tile of the
                                                  zero-padded flattened image
    wconv_ref: (Cmid, 9*Cin_p + 8)          bf16  im2col RPN_Conv weight with
                                                  the conv bias folded into
                                                  column 9*Cin_p
    whead_ref: (72, Cmid)                   bf16  fused, sublane-aligned
                                                  cls/bbox head weight
    bhead_ref: (72, 1)                      f32   fused head bias
    outputs:   (1, 32|32|40, TL)            f32   padded cls / prob / bbox
                                                  row-slabs (wrapper crops)
    """
    tl = cls_ref.shape[-1]                         # lanes per tile (mult of 128)
    x = x_ref[0, 0]                                # (Cin_p, TW) bf16

    # --- im2col: sublane-stack the 9 lane-shifted tap windows + bias rows ----
    taps = [x[:, d:d + tl]
            for d in (ky * wp + kx for ky in range(3) for kx in range(3))]
    row = lax.broadcasted_iota(jnp.int32, (8, tl), 0)
    bias_rows = jnp.where(row == 0, 1.0, 0.0).astype(x.dtype)   # ones row -> folded conv bias
    xcat = jnp.concatenate(taps + [bias_rows], axis=0)          # (9*Cin_p + 8, TL)

    # --- 3x3 conv (+ folded bias) + ReLU: a single MXU matmul ----------------
    conv = jnp.dot(wconv_ref[...], xcat, preferred_element_type=jnp.float32)
    conv = jnp.maximum(conv, 0.0)                               # (Cmid, TL) f32

    # --- fused 1x1 cls + bbox heads ------------------------------------------
    head = jnp.dot(whead_ref[...], conv.astype(whead_ref.dtype),
                   preferred_element_type=jnp.float32) + bhead_ref[...]

    # --- paired 2-way softmax (channel a vs a+A) on aligned 16-row slabs -----
    s0 = head[0:_CLS_HALF]
    s1 = head[_CLS_HALF:_CLS_SLAB]
    m = jnp.maximum(s0, s1)
    e0 = jnp.exp(s0 - m)
    e1 = jnp.exp(s1 - m)
    inv = pl.reciprocal(e0 + e1, approx=True)                   # EUP, not VALU

    # --- aligned, unmasked row-slab stores ------------------------------------
    cls_ref[0] = head[0:_CLS_SLAB]
    prob_ref[0, 0:_CLS_HALF] = e0 * inv
    prob_ref[0, _CLS_HALF:_CLS_SLAB] = e1 * inv
    bbox_ref[0] = head[_CLS_SLAB:_HEAD_ROWS]


def rpn_forward(base_feat, params, *, tile_l=256):
    """Forward pass of _RPN (inference hot path).

    base_feat: (b, Cin, H, W) f32 (PyTorch NCHW convention)
    params:    PyTorch-layout weights
               wconv (Cmid, Cin, 3, 3), bconv (Cmid,),
               wcls (2A, Cmid), bcls (2A,), wbox (4A, Cmid), bbox_b (4A,)
    Returns rpn_cls_score, rpn_cls_prob, rpn_bbox_pred in NCHW plus zero losses.
    """
    wconv, bconv, wcls, bcls, wbox, bbox_b = params
    b, cin, H, W = base_feat.shape
    cmid = wconv.shape[0]
    A = NUM_ANCHORS

    wp = W + 2                          # padded width
    L = H * wp                          # flat output positions we care about
    cin_p = _round_up(cin, 8)           # sublane-aligned channel count

    # Spatial (flat) tiling: lane-dense tiles of TL (multiple of 128).
    TL = max(128, min(_round_up(tile_l, 128), _round_up(L, 128)))
    n_tiles = pl.cdiv(L, TL)
    L_pad = n_tiles * TL
    halo = 2 * wp + 2                   # max tap offset for the 3x3 window
    TW = TL + halo

    # --- input prep: halo pad + flatten + channel pad + bf16 cast -------------
    flat_needed = L_pad + halo
    bot_pad = max(2, -(-flat_needed // wp) - (H + 1))
    x = jnp.pad(base_feat, ((0, 0), (0, cin_p - cin), (1, bot_pad), (1, 1)))
    x = x.reshape(b, cin_p, (H + 1 + bot_pad) * wp).astype(jnp.bfloat16)
    # Overlapping (halo'ed) spatial tiles, materialized once by XLA so the
    # pallas grid can be ("parallel", "parallel") with plain Blocked specs.
    x_tiles = jnp.stack(
        [lax.dynamic_slice_in_dim(x, t * TL, TW, axis=2) for t in range(n_tiles)],
        axis=1)                                            # (b, n_tiles, cin_p, TW)

    # --- weight prep -----------------------------------------------------------
    # im2col conv weight, tap-major / channel-minor, conv bias folded in.
    w = jnp.pad(wconv, ((0, 0), (0, cin_p - cin), (0, 0), (0, 0)))
    w = jnp.transpose(w, (0, 2, 3, 1)).reshape(cmid, 9 * cin_p)
    bias_cols = jnp.zeros((cmid, 8), jnp.float32).at[:, 0].set(bconv)
    w_i2c = jnp.concatenate([w, bias_cols], axis=1).astype(jnp.bfloat16)
    K = 9 * cin_p + 8

    # Fused, sublane-aligned head weight/bias (see _CLS_HALF/_CLS_SLAB layout).
    whead = jnp.zeros((_HEAD_ROWS, cmid), jnp.float32)
    whead = whead.at[0:A].set(wcls[:A])
    whead = whead.at[_CLS_HALF:_CLS_HALF + A].set(wcls[A:])
    whead = whead.at[_CLS_SLAB:_CLS_SLAB + 4 * A].set(wbox)
    whead = whead.astype(jnp.bfloat16)
    bhead = jnp.zeros((_HEAD_ROWS,), jnp.float32)
    bhead = bhead.at[0:A].set(bcls[:A])
    bhead = bhead.at[_CLS_HALF:_CLS_HALF + A].set(bcls[A:])
    bhead = bhead.at[_CLS_SLAB:_CLS_SLAB + 4 * A].set(bbox_b)
    bhead = bhead.reshape(_HEAD_ROWS, 1)

    # --- pallas_call setup ------------------------------------------------------
    kernel = functools.partial(_rpn_kernel, wp=wp)
    out_shapes = (
        jax.ShapeDtypeStruct((b, _CLS_SLAB, L_pad), jnp.float32),
        jax.ShapeDtypeStruct((b, _CLS_SLAB, L_pad), jnp.float32),
        jax.ShapeDtypeStruct((b, _BBOX_SLAB, L_pad), jnp.float32),
    )
    flops = 2 * b * n_tiles * TL * cmid * (K + _HEAD_ROWS)
    transcendentals = b * n_tiles * TL * _CLS_SLAB
    bytes_accessed = int(
        x_tiles.size * 2 + w_i2c.size * 2 + whead.size * 2 + bhead.size * 4
        + sum(int(np.prod(s.shape)) * 4 for s in out_shapes))
    cost = pl.CostEstimate(flops=flops, transcendentals=transcendentals,
                           bytes_accessed=bytes_accessed)

    # Capacity-aware VMEM cap: ~64 MiB on v5e/v6e (128 MiB physical), ~48 MiB
    # on v7x (64 MiB physical) — relies on the TL tiling + Buffered(1) weights.
    try:
        vmem_cap = int(pltpu.get_tpu_info().vmem_capacity_bytes)
    except Exception:
        vmem_cap = 64 * 1024 * 1024
    vmem_limit = min(64 * 1024 * 1024, (3 * vmem_cap) // 4)

    def build_call(weight_pipeline_mode):
        def const_spec(shape):
            idx = lambda ib, it, _n=len(shape): (0,) * _n
            if weight_pipeline_mode is None:
                return pl.BlockSpec(shape, idx)
            return pl.BlockSpec(shape, idx, pipeline_mode=weight_pipeline_mode)

        grid_spec = pltpu.PrefetchScalarGridSpec(
            num_scalar_prefetch=0,
            grid=(b, n_tiles),
            in_specs=[
                pl.BlockSpec((1, 1, cin_p, TW), lambda ib, it: (ib, it, 0, 0)),
                const_spec((cmid, K)),          # im2col conv weight (+ bias col)
                const_spec((_HEAD_ROWS, cmid)),  # fused head weight
                const_spec((_HEAD_ROWS, 1)),     # fused head bias
            ],
            out_specs=[
                pl.BlockSpec((1, _CLS_SLAB, TL), lambda ib, it: (ib, 0, it)),
                pl.BlockSpec((1, _CLS_SLAB, TL), lambda ib, it: (ib, 0, it)),
                pl.BlockSpec((1, _BBOX_SLAB, TL), lambda ib, it: (ib, 0, it)),
            ],
        )
        return pl.pallas_call(
            kernel,
            out_shape=out_shapes,
            grid_spec=grid_spec,
            compiler_params=pltpu.CompilerParams(
                dimension_semantics=("parallel", "parallel"),
                vmem_limit_bytes=vmem_limit),
            cost_estimate=cost)

    try:
        # Single-buffer the loop-invariant weights (they have constant index
        # maps), halving their VMEM footprint at production sizes.
        cls_slab, prob_slab, bbox_slab = build_call(pl.Buffered(1))(
            x_tiles, w_i2c, whead, bhead)
    except Exception:
        # Fallback: default (double-buffered) pipelining if Buffered(1) is not
        # supported by this JAX/Mosaic build.
        cls_slab, prob_slab, bbox_slab = build_call(None)(
            x_tiles, w_i2c, whead, bhead)

    # --- crop spatial padding and restitch the padded channel layout ----------
    def to_nchw(slab):
        c = slab.shape[1]
        return slab[:, :, :L].reshape(b, c, H, wp)[:, :, :, :W]

    cls32 = to_nchw(cls_slab)
    prob32 = to_nchw(prob_slab)
    box40 = to_nchw(bbox_slab)
    rpn_cls_score = jnp.concatenate(
        [cls32[:, 0:A], cls32[:, _CLS_HALF:_CLS_HALF + A]], axis=1)
    rpn_cls_prob = jnp.concatenate(
        [prob32[:, 0:A], prob32[:, _CLS_HALF:_CLS_HALF + A]], axis=1)
    rpn_bbox_pred = box40[:, :4 * A]

    # TODO(synk): _ProposalLayer (anchor generation + bbox decode + NMS + top-N
    # roi selection) and _AnchorTargetLayer / training losses are data-dependent
    # sort/NMS ops with no clean Pallas equivalent; only the network hot path
    # (convs, ReLU, softmax) is implemented in-kernel.
    rpn_loss_cls = jnp.float32(0.0)
    rpn_loss_box = jnp.float32(0.0)
    return rpn_cls_score, rpn_cls_prob, rpn_bbox_pred, rpn_loss_cls, rpn_loss_box


def _reference_forward(base_feat, params):
    """Pure-JAX f32 reference reproducing the PyTorch semantics exactly."""
    wconv, bconv, wcls, bcls, wbox, bbox_b = params
    b, _, H, W = base_feat.shape
    dn = lax.conv_dimension_numbers(base_feat.shape, wconv.shape,
                                    ("NCHW", "OIHW", "NCHW"))
    conv = lax.conv_general_dilated(base_feat, wconv, (1, 1), "SAME",
                                    dimension_numbers=dn)
    conv = jnp.maximum(conv + bconv[None, :, None, None], 0.0)
    cls = jnp.einsum("bchw,dc->bdhw", conv, wcls) + bcls[None, :, None, None]
    box = jnp.einsum("bchw,dc->bdhw", conv, wbox) + bbox_b[None, :, None, None]
    # _RPN.reshape(x, 2) -> softmax(dim=1) -> reshape back
    r = cls.reshape(b, 2, NUM_ANCHORS * H, W)
    prob = jax.nn.softmax(r, axis=1).reshape(b, NC_SCORE, H, W)
    return cls, prob, box


if __name__ == "__main__":
    # small shapes: batch=2, din=8, spatial=16x16, hidden (RPN_Conv out)=512
    B, DIN, H, W = 2, 8, 16, 16
    CMID = 512

    key = jax.random.PRNGKey(0)
    k = jax.random.split(key, 7)
    base_feat = jax.random.normal(k[0], (B, DIN, H, W), dtype=jnp.float32)

    # PyTorch-layout parameters, normal_init std=0.01 as in faster-rcnn.
    wconv = jax.random.normal(k[1], (CMID, DIN, 3, 3), jnp.float32) * 0.01
    bconv = jax.random.normal(k[2], (CMID,), jnp.float32) * 0.01
    wcls = jax.random.normal(k[3], (NC_SCORE, CMID), jnp.float32) * 0.01
    bcls = jax.random.normal(k[4], (NC_SCORE,), jnp.float32) * 0.01
    wbox = jax.random.normal(k[5], (NC_BBOX, CMID), jnp.float32) * 0.01
    bbox_b = jax.random.normal(k[6], (NC_BBOX,), jnp.float32) * 0.01
    params = (wconv, bconv, wcls, bcls, wbox, bbox_b)

    outs = jax.block_until_ready(rpn_forward(base_feat, params))
    cls_score, cls_prob, bbox_pred, loss_cls, loss_box = outs

    ref_score, ref_prob, ref_box = _reference_forward(base_feat, params)
    # bf16 matmul inputs + approx reciprocal => loosened tolerances vs f32 ref.
    np.testing.assert_allclose(np.asarray(cls_score), np.asarray(ref_score),
                               rtol=3e-2, atol=3e-3)
    np.testing.assert_allclose(np.asarray(cls_prob), np.asarray(ref_prob),
                               rtol=3e-2, atol=3e-3)
    np.testing.assert_allclose(np.asarray(bbox_pred), np.asarray(ref_box),
                               rtol=3e-2, atol=3e-3)
    assert cls_score.shape == (B, NC_SCORE, H, W)
    assert cls_prob.shape == (B, NC_SCORE, H, W)
    assert bbox_pred.shape == (B, NC_BBOX, H, W)

    print("KERNEL_OK")
</pallas_src>

<mosaic_0001>
module attributes {stable_mosaic.version = 11 : i64} {
  func.func @_rpn_kernel(%arg0: i32, %arg1: i32, %arg2: memref<1x1x8x294xbf16, #tpu.memory_space<vmem>>, %arg3: memref<512x80xbf16, #tpu.memory_space<vmem>>, %arg4: memref<72x512xbf16, #tpu.memory_space<vmem>>, %arg5: memref<72x1xf32, #tpu.memory_space<vmem>>, %arg6: memref<1x32x256xf32, #tpu.memory_space<vmem>>, %arg7: memref<1x32x256xf32, #tpu.memory_space<vmem>>, %arg8: memref<1x40x256xf32, #tpu.memory_space<vmem>>) attributes {dimension_semantics = [#tpu.dimension_semantics<parallel>, #tpu.dimension_semantics<parallel>], iteration_bounds = array<i64: 2, 2>, scalar_prefetch = 0 : i64, scratch_operands = 0 : i64, tpu.core_type = #tpu.core_type<tc>, window_params = [{transform_indices = @transform_0, window_bounds = array<i64: 1, 1, 8, 294>}, {pipeline_mode = #tpu.pipeline_mode<synchronous>, transform_indices = @transform_1, window_bounds = array<i64: 512, 80>}, {pipeline_mode = #tpu.pipeline_mode<synchronous>, transform_indices = @transform_2, window_bounds = array<i64: 72, 512>}, {pipeline_mode = #tpu.pipeline_mode<synchronous>, transform_indices = @transform_3, window_bounds = array<i64: 72, 1>}, {transform_indices = @transform_4, window_bounds = array<i64: 1, 32, 256>}, {transform_indices = @transform_5, window_bounds = array<i64: 1, 32, 256>}, {transform_indices = @transform_6, window_bounds = array<i64: 1, 40, 256>}]} {
    %c0 = arith.constant 0 : index
    %c0_0 = arith.constant 0 : index
    %c0_1 = arith.constant 0 : index
    %c0_2 = arith.constant 0 : index
    %0 = vector.load %arg2[%c0, %c0_0, %c0_1, %c0_2] : memref<1x1x8x294xbf16, #tpu.memory_space<vmem>>, vector<1x1x8x294xbf16>
    %1 = vector.shape_cast %0 : vector<1x1x8x294xbf16> to vector<8x294xbf16>
    %2 = vector.extract_strided_slice %1 {offsets = [0, 0], sizes = [8, 256], strides = [1, 1]} : vector<8x294xbf16> to vector<8x256xbf16>
    %3 = vector.extract_strided_slice %1 {offsets = [0, 1], sizes = [8, 256], strides = [1, 1]} : vector<8x294xbf16> to vector<8x256xbf16>
    %4 = vector.extract_strided_slice %1 {offsets = [0, 2], sizes = [8, 256], strides = [1, 1]} : vector<8x294xbf16> to vector<8x256xbf16>
    %5 = vector.extract_strided_slice %1 {offsets = [0, 18], sizes = [8, 256], strides = [1, 1]} : vector<8x294xbf16> to vector<8x256xbf16>
    %6 = vector.extract_strided_slice %1 {offsets = [0, 19], sizes = [8, 256], strides = [1, 1]} : vector<8x294xbf16> to vector<8x256xbf16>
    %7 = vector.extract_strided_slice %1 {offsets = [0, 20], sizes = [8, 256], strides = [1, 1]} : vector<8x294xbf16> to vector<8x256xbf16>
    %8 = vector.extract_strided_slice %1 {offsets = [0, 36], sizes = [8, 256], strides = [1, 1]} : vector<8x294xbf16> to vector<8x256xbf16>
    %9 = vector.extract_strided_slice %1 {offsets = [0, 37], sizes = [8, 256], strides = [1, 1]} : vector<8x294xbf16> to vector<8x256xbf16>
    %10 = vector.extract_strided_slice %1 {offsets = [0, 38], sizes = [8, 256], strides = [1, 1]} : vector<8x294xbf16> to vector<8x256xbf16>
    %11 = tpu.iota {dimensions = array<i32: 0>} : vector<8x256xi32>
    %c0_i32 = arith.constant 0 : i32
    %12 = vector.broadcast %c0_i32 : i32 to vector<8x256xi32>
    %13 = arith.cmpi eq, %11, %12 : vector<8x256xi32>
    %cst = arith.constant 1.000000e+00 : f32
    %cst_3 = arith.constant 0.000000e+00 : f32
    %14 = vector.broadcast %cst : f32 to vector<8x256xf32>
    %15 = vector.broadcast %cst_3 : f32 to vector<8x256xf32>
    %16 = arith.select %13, %14, %15 : vector<8x256xi1>, vector<8x256xf32>
    %17 = arith.truncf %16 : vector<8x256xf32> to vector<8x256xbf16>
    %18 = tpu.concatenate %2, %3, %4, %5, %6, %7, %8, %9, %10, %17 in 0 : vector<8x256xbf16>, vector<8x256xbf16>, vector<8x256xbf16>, vector<8x256xbf16>, vector<8x256xbf16>, vector<8x256xbf16>, vector<8x256xbf16>, vector<8x256xbf16>, vector<8x256xbf16>, vector<8x256xbf16> -> vector<80x256xbf16>
    %c0_4 = arith.constant 0 : index
    %c0_5 = arith.constant 0 : index
    %19 = vector.load %arg3[%c0_4, %c0_5] : memref<512x80xbf16, #tpu.memory_space<vmem>>, vector<512x80xbf16>
    %cst_6 = arith.constant dense<0.000000e+00> : vector<512x256xf32>
    %20 = tpu.matmul %19, %18, %cst_6 {dimension_numbers = #tpu.dot_dimension_numbers<[1], [0], [0], [1], [0, 0, 1, 1], [], []>} : vector<512x80xbf16>, vector<80x256xbf16>, vector<512x256xf32> -> vector<512x256xf32>
    %cst_7 = arith.constant 0.000000e+00 : f32
    %21 = vector.broadcast %cst_7 : f32 to vector<512x256xf32>
    %22 = arith.maximumf %20, %21 : vector<512x256xf32>
    %c0_8 = arith.constant 0 : index
    %c0_9 = arith.constant 0 : index
    %23 = vector.load %arg4[%c0_8, %c0_9] : memref<72x512xbf16, #tpu.memory_space<vmem>>, vector<72x512xbf16>
    %24 = arith.truncf %22 : vector<512x256xf32> to vector<512x256xbf16>
    %cst_10 = arith.constant dense<0.000000e+00> : vector<72x256xf32>
    %25 = tpu.matmul %23, %24, %cst_10 {dimension_numbers = #tpu.dot_dimension_numbers<[1], [0], [0], [1], [0, 0, 1, 1], [], []>} : vector<72x512xbf16>, vector<512x256xbf16>, vector<72x256xf32> -> vector<72x256xf32>
    %c0_11 = arith.constant 0 : index
    %c0_12 = arith.constant 0 : index
    %26 = vector.load %arg5[%c0_11, %c0_12] : memref<72x1xf32, #tpu.memory_space<vmem>>, vector<72x1xf32>
    %27 = vector.broadcast %26 : vector<72x1xf32> to vector<72x256xf32>
    %28 = arith.addf %25, %27 : vector<72x256xf32>
    %29 = vector.extract_strided_slice %28 {offsets = [0, 0], sizes = [16, 256], strides = [1, 1]} : vector<72x256xf32> to vector<16x256xf32>
    %30 = vector.extract_strided_slice %28 {offsets = [16, 0], sizes = [16, 256], strides = [1, 1]} : vector<72x256xf32> to vector<16x256xf32>
    %31 = arith.maximumf %29, %30 : vector<16x256xf32>
    %32 = arith.subf %29, %31 : vector<16x256xf32>
    %33 = math.exp %32 : vector<16x256xf32>
    %34 = arith.subf %30, %31 : vector<16x256xf32>
    %35 = math.exp %34 : vector<16x256xf32>
    %36 = arith.addf %33, %35 : vector<16x256xf32>
    %37 = tpu.reciprocal %36 {approx = true} : vector<16x256xf32> -> vector<16x256xf32>
    %38 = vector.extract_strided_slice %28 {offsets = [0, 0], sizes = [32, 256], strides = [1, 1]} : vector<72x256xf32> to vector<32x256xf32>
    %c0_13 = arith.constant 0 : index
    %c0_14 = arith.constant 0 : index
    %c0_15 = arith.constant 0 : index
    %39 = vector.load %arg6[%c0_13, %c0_14, %c0_15] : memref<1x32x256xf32, #tpu.memory_space<vmem>>, vector<1x32x256xf32>
    %40 = vector.shape_cast %39 : vector<1x32x256xf32> to vector<32x256xf32>
    %41 = vector.shape_cast %38 : vector<32x256xf32> to vector<1x32x256xf32>
    tpu.vector_store %arg6[%c0_13, %c0_14, %c0_15], %41 {strides = array<i32>} : memref<1x32x256xf32, #tpu.memory_space<vmem>>, vector<1x32x256xf32>,
    %42 = arith.mulf %33, %37 : vector<16x256xf32>
    %c0_16 = arith.constant 0 : index
    %c0_17 = arith.constant 0 : index
    %c0_18 = arith.constant 0 : index
    %43 = vector.load %arg7[%c0_16, %c0_17, %c0_18] : memref<1x32x256xf32, #tpu.memory_space<vmem>>, vector<1x16x256xf32>
    %44 = vector.shape_cast %43 : vector<1x16x256xf32> to vector<16x256xf32>
    %45 = vector.shape_cast %42 : vector<16x256xf32> to vector<1x16x256xf32>
    tpu.vector_store %arg7[%c0_16, %c0_17, %c0_18], %45 {strides = array<i32>} : memref<1x32x256xf32, #tpu.memory_space<vmem>>, vector<1x16x256xf32>,
    %46 = arith.mulf %35, %37 : vector<16x256xf32>
    %c0_19 = arith.constant 0 : index
    %c16 = arith.constant 16 : index
    %c0_20 = arith.constant 0 : index
    %47 = vector.load %arg7[%c0_19, %c16, %c0_20] : memref<1x32x256xf32, #tpu.memory_space<vmem>>, vector<1x16x256xf32>
    %48 = vector.shape_cast %47 : vector<1x16x256xf32> to vector<16x256xf32>
    %49 = vector.shape_cast %46 : vector<16x256xf32> to vector<1x16x256xf32>
    tpu.vector_store %arg7[%c0_19, %c16, %c0_20], %49 {strides = array<i32>} : memref<1x32x256xf32, #tpu.memory_space<vmem>>, vector<1x16x256xf32>,
    %50 = vector.extract_strided_slice %28 {offsets = [32, 0], sizes = [40, 256], strides = [1, 1]} : vector<72x256xf32> to vector<40x256xf32>
    %c0_21 = arith.constant 0 : index
    %c0_22 = arith.constant 0 : index
    %c0_23 = arith.constant 0 : index
    %51 = vector.load %arg8[%c0_21, %c0_22, %c0_23] : memref<1x40x256xf32, #tpu.memory_space<vmem>>, vector<1x40x256xf32>
    %52 = vector.shape_cast %51 : vector<1x40x256xf32> to vector<40x256xf32>
    %53 = vector.shape_cast %50 : vector<40x256xf32> to vector<1x40x256xf32>
    tpu.vector_store %arg8[%c0_21, %c0_22, %c0_23], %53 {strides = array<i32>} : memref<1x40x256xf32, #tpu.memory_space<vmem>>, vector<1x40x256xf32>,
    return
  }
  func.func @transform_0(%arg0: i32, %arg1: i32) -> (i32, i32, i32, i32) {
    %c0_i32 = arith.constant 0 : i32
    %c0_i32_0 = arith.constant 0 : i32
    %c0_i32_1 = arith.constant 0 : i32
    return %arg0, %arg1, %c0_i32, %c0_i32_0 : i32, i32, i32, i32
  }
  func.func @transform_1(%arg0: i32, %arg1: i32) -> (i32, i32) {
    %c0_i32 = arith.constant 0 : i32
    %c0_i32_0 = arith.constant 0 : i32
    %c0_i32_1 = arith.constant 0 : i32
    return %c0_i32, %c0_i32_0 : i32, i32
  }
  func.func @transform_2(%arg0: i32, %arg1: i32) -> (i32, i32) {
    %c0_i32 = arith.constant 0 : i32
    %c0_i32_0 = arith.constant 0 : i32
    %c0_i32_1 = arith.constant 0 : i32
    return %c0_i32, %c0_i32_0 : i32, i32
  }
  func.func @transform_3(%arg0: i32, %arg1: i32) -> (i32, i32) {
    %c0_i32 = arith.constant 0 : i32
    %c0_i32_0 = arith.constant 0 : i32
    %c0_i32_1 = arith.constant 0 : i32
    return %c0_i32, %c0_i32_0 : i32, i32
  }
  func.func @transform_4(%arg0: i32, %arg1: i32) -> (i32, i32, i32) {
    %c0_i32 = arith.constant 0 : i32
    %c0_i32_0 = arith.constant 0 : i32
    return %arg0, %c0_i32, %arg1 : i32, i32, i32
  }
  func.func @transform_5(%arg0: i32, %arg1: i32) -> (i32, i32, i32) {
    %c0_i32 = arith.constant 0 : i32
    %c0_i32_0 = arith.constant 0 : i32
    return %arg0, %c0_i32, %arg1 : i32, i32, i32
  }
  func.func @transform_6(%arg0: i32, %arg1: i32) -> (i32, i32, i32) {
    %c0_i32 = arith.constant 0 : i32
    %c0_i32_0 = arith.constant 0 : i32
    return %arg0, %c0_i32, %arg1 : i32, i32, i32
  }
}

module attributes {stable_mosaic.version = 11 : i64} {
  func.func @_rpn_kernel(%arg0: i32, %arg1: i32, %arg2: memref<1x1x8x294xbf16, #tpu.memory_space<vmem>>, %arg3: memref<512x80xbf16, #tpu.memory_space<vmem>>, %arg4: memref<72x512xbf16, #tpu.memory_space<vmem>>, %arg5: memref<72x1xf32, #tpu.memory_space<vmem>>, %arg6: memref<1x32x256xf32, #tpu.memory_space<vmem>>, %arg7: memref<1x32x256xf32, #tpu.memory_space<vmem>>, %arg8: memref<1x40x256xf32, #tpu.memory_space<vmem>>) attributes {dimension_semantics = [#tpu.dimension_semantics<parallel>, #tpu.dimension_semantics<parallel>], iteration_bounds = array<i64: 2, 2>, scalar_prefetch = 0 : i64, scratch_operands = 0 : i64, tpu.core_type = #tpu.core_type<tc>, window_params = [{transform_indices = @transform_0, window_bounds = array<i64: 1, 1, 8, 294>}, {pipeline_mode = #tpu.pipeline_mode<synchronous>, transform_indices = @transform_1, window_bounds = array<i64: 512, 80>}, {pipeline_mode = #tpu.pipeline_mode<synchronous>, transform_indices = @transform_2, window_bounds = array<i64: 72, 512>}, {pipeline_mode = #tpu.pipeline_mode<synchronous>, transform_indices = @transform_3, window_bounds = array<i64: 72, 1>}, {transform_indices = @transform_4, window_bounds = array<i64: 1, 32, 256>}, {transform_indices = @transform_5, window_bounds = array<i64: 1, 32, 256>}, {transform_indices = @transform_6, window_bounds = array<i64: 1, 40, 256>}]} {
    %c0 = arith.constant 0 : index
    %c0_0 = arith.constant 0 : index
    %c0_1 = arith.constant 0 : index
    %c0_2 = arith.constant 0 : index
    %0 = vector.load %arg2[%c0, %c0_0, %c0_1, %c0_2] : memref<1x1x8x294xbf16, #tpu.memory_space<vmem>>, vector<1x1x8x294xbf16>
    %1 = vector.shape_cast %0 : vector<1x1x8x294xbf16> to vector<8x294xbf16>
    %2 = vector.extract_strided_slice %1 {offsets = [0, 0], sizes = [8, 256], strides = [1, 1]} : vector<8x294xbf16> to vector<8x256xbf16>
    %3 = vector.extract_strided_slice %1 {offsets = [0, 1], sizes = [8, 256], strides = [1, 1]} : vector<8x294xbf16> to vector<8x256xbf16>
    %4 = vector.extract_strided_slice %1 {offsets = [0, 2], sizes = [8, 256], strides = [1, 1]} : vector<8x294xbf16> to vector<8x256xbf16>
    %5 = vector.extract_strided_slice %1 {offsets = [0, 18], sizes = [8, 256], strides = [1, 1]} : vector<8x294xbf16> to vector<8x256xbf16>
    %6 = vector.extract_strided_slice %1 {offsets = [0, 19], sizes = [8, 256], strides = [1, 1]} : vector<8x294xbf16> to vector<8x256xbf16>
    %7 = vector.extract_strided_slice %1 {offsets = [0, 20], sizes = [8, 256], strides = [1, 1]} : vector<8x294xbf16> to vector<8x256xbf16>
    %8 = vector.extract_strided_slice %1 {offsets = [0, 36], sizes = [8, 256], strides = [1, 1]} : vector<8x294xbf16> to vector<8x256xbf16>
    %9 = vector.extract_strided_slice %1 {offsets = [0, 37], sizes = [8, 256], strides = [1, 1]} : vector<8x294xbf16> to vector<8x256xbf16>
    %10 = vector.extract_strided_slice %1 {offsets = [0, 38], sizes = [8, 256], strides = [1, 1]} : vector<8x294xbf16> to vector<8x256xbf16>
    %11 = tpu.iota {dimensions = array<i32: 0>} : vector<8x256xi32>
    %c0_i32 = arith.constant 0 : i32
    %12 = vector.broadcast %c0_i32 : i32 to vector<8x256xi32>
    %13 = arith.cmpi eq, %11, %12 : vector<8x256xi32>
    %cst = arith.constant 1.000000e+00 : f32
    %cst_3 = arith.constant 0.000000e+00 : f32
    %14 = vector.broadcast %cst : f32 to vector<8x256xf32>
    %15 = vector.broadcast %cst_3 : f32 to vector<8x256xf32>
    %16 = arith.select %13, %14, %15 : vector<8x256xi1>, vector<8x256xf32>
    %17 = arith.truncf %16 : vector<8x256xf32> to vector<8x256xbf16>
    %18 = tpu.concatenate %2, %3, %4, %5, %6, %7, %8, %9, %10, %17 in 0 : vector<8x256xbf16>, vector<8x256xbf16>, vector<8x256xbf16>, vector<8x256xbf16>, vector<8x256xbf16>, vector<8x256xbf16>, vector<8x256xbf16>, vector<8x256xbf16>, vector<8x256xbf16>, vector<8x256xbf16> -> vector<80x256xbf16>
    %c0_4 = arith.constant 0 : index
    %c0_5 = arith.constant 0 : index
    %19 = vector.load %arg3[%c0_4, %c0_5] : memref<512x80xbf16, #tpu.memory_space<vmem>>, vector<512x80xbf16>
    %cst_6 = arith.constant dense<0.000000e+00> : vector<512x256xf32>
    %20 = tpu.matmul %19, %18, %cst_6 {dimension_numbers = #tpu.dot_dimension_numbers<[1], [0], [0], [1], [0, 0, 1, 1], [], []>} : vector<512x80xbf16>, vector<80x256xbf16>, vector<512x256xf32> -> vector<512x256xf32>
    %cst_7 = arith.constant 0.000000e+00 : f32
    %21 = vector.broadcast %cst_7 : f32 to vector<512x256xf32>
    %22 = arith.maximumf %20, %21 : vector<512x256xf32>
    %c0_8 = arith.constant 0 : index
    %c0_9 = arith.constant 0 : index
    %23 = vector.load %arg4[%c0_8, %c0_9] : memref<72x512xbf16, #tpu.memory_space<vmem>>, vector<72x512xbf16>
    %24 = arith.truncf %22 : vector<512x256xf32> to vector<512x256xbf16>
    %cst_10 = arith.constant dense<0.000000e+00> : vector<72x256xf32>
    %25 = tpu.matmul %23, %24, %cst_10 {dimension_numbers = #tpu.dot_dimension_numbers<[1], [0], [0], [1], [0, 0, 1, 1], [], []>} : vector<72x512xbf16>, vector<512x256xbf16>, vector<72x256xf32> -> vector<72x256xf32>
    %c0_11 = arith.constant 0 : index
    %c0_12 = arith.constant 0 : index
    %26 = vector.load %arg5[%c0_11, %c0_12] : memref<72x1xf32, #tpu.memory_space<vmem>>, vector<72x1xf32>
    %27 = vector.broadcast %26 : vector<72x1xf32> to vector<72x256xf32>
    %28 = arith.addf %25, %27 : vector<72x256xf32>
    %29 = vector.extract_strided_slice %28 {offsets = [0, 0], sizes = [16, 256], strides = [1, 1]} : vector<72x256xf32> to vector<16x256xf32>
    %30 = vector.extract_strided_slice %28 {offsets = [16, 0], sizes = [16, 256], strides = [1, 1]} : vector<72x256xf32> to vector<16x256xf32>
    %31 = arith.maximumf %29, %30 : vector<16x256xf32>
    %32 = arith.subf %29, %31 : vector<16x256xf32>
    %33 = math.exp %32 : vector<16x256xf32>
    %34 = arith.subf %30, %31 : vector<16x256xf32>
    %35 = math.exp %34 : vector<16x256xf32>
    %36 = arith.addf %33, %35 : vector<16x256xf32>
    %37 = tpu.reciprocal %36 {approx = true} : vector<16x256xf32> -> vector<16x256xf32>
    %38 = vector.extract_strided_slice %28 {offsets = [0, 0], sizes = [32, 256], strides = [1, 1]} : vector<72x256xf32> to vector<32x256xf32>
    %c0_13 = arith.constant 0 : index
    %c0_14 = arith.constant 0 : index
    %c0_15 = arith.constant 0 : index
    %39 = vector.load %arg6[%c0_13, %c0_14, %c0_15] : memref<1x32x256xf32, #tpu.memory_space<vmem>>, vector<1x32x256xf32>
    %40 = vector.shape_cast %39 : vector<1x32x256xf32> to vector<32x256xf32>
    %41 = vector.shape_cast %38 : vector<32x256xf32> to vector<1x32x256xf32>
    tpu.vector_store %arg6[%c0_13, %c0_14, %c0_15], %41 {strides = array<i32>} : memref<1x32x256xf32, #tpu.memory_space<vmem>>, vector<1x32x256xf32>,
    %42 = arith.mulf %33, %37 : vector<16x256xf32>
    %c0_16 = arith.constant 0 : index
    %c0_17 = arith.constant 0 : index
    %c0_18 = arith.constant 0 : index
    %43 = vector.load %arg7[%c0_16, %c0_17, %c0_18] : memref<1x32x256xf32, #tpu.memory_space<vmem>>, vector<1x16x256xf32>
    %44 = vector.shape_cast %43 : vector<1x16x256xf32> to vector<16x256xf32>
    %45 = vector.shape_cast %42 : vector<16x256xf32> to vector<1x16x256xf32>
    tpu.vector_store %arg7[%c0_16, %c0_17, %c0_18], %45 {strides = array<i32>} : memref<1x32x256xf32, #tpu.memory_space<vmem>>, vector<1x16x256xf32>,
    %46 = arith.mulf %35, %37 : vector<16x256xf32>
    %c0_19 = arith.constant 0 : index
    %c16 = arith.constant 16 : index
    %c0_20 = arith.constant 0 : index
    %47 = vector.load %arg7[%c0_19, %c16, %c0_20] : memref<1x32x256xf32, #tpu.memory_space<vmem>>, vector<1x16x256xf32>
    %48 = vector.shape_cast %47 : vector<1x16x256xf32> to vector<16x256xf32>
    %49 = vector.shape_cast %46 : vector<16x256xf32> to vector<1x16x256xf32>
    tpu.vector_store %arg7[%c0_19, %c16, %c0_20], %49 {strides = array<i32>} : memref<1x32x256xf32, #tpu.memory_space<vmem>>, vector<1x16x256xf32>,
    %50 = vector.extract_strided_slice %28 {offsets = [32, 0], sizes = [40, 256], strides = [1, 1]} : vector<72x256xf32> to vector<40x256xf32>
    %c0_21 = arith.constant 0 : index
    %c0_22 = arith.constant 0 : index
    %c0_23 = arith.constant 0 : index
    %51 = vector.load %arg8[%c0_21, %c0_22, %c0_23] : memref<1x40x256xf32, #tpu.memory_space<vmem>>, vector<1x40x256xf32>
    %52 = vector.shape_cast %51 : vector<1x40x256xf32> to vector<40x256xf32>
    %53 = vector.shape_cast %50 : vector<40x256xf32> to vector<1x40x256xf32>
    tpu.vector_store %arg8[%c0_21, %c0_22, %c0_23], %53 {strides = array<i32>} : memref<1x40x256xf32, #tpu.memory_space<vmem>>, vector<1x40x256xf32>,
    return
  }
  func.func @transform_0(%arg0: i32, %arg1: i32) -> (i32, i32, i32, i32) {
    %c0_i32 = arith.constant 0 : i32
    %c0_i32_0 = arith.constant 0 : i32
    %c0_i32_1 = arith.constant 0 : i32
    return %arg0, %arg1, %c0_i32, %c0_i32_0 : i32, i32, i32, i32
  }
  func.func @transform_1(%arg0: i32, %arg1: i32) -> (i32, i32) {
    %c0_i32 = arith.constant 0 : i32
    %c0_i32_0 = arith.constant 0 : i32
    %c0_i32_1 = arith.constant 0 : i32
    return %c0_i32, %c0_i32_0 : i32, i32
  }
  func.func @transform_2(%arg0: i32, %arg1: i32) -> (i32, i32) {
    %c0_i32 = arith.constant 0 : i32
    %c0_i32_0 = arith.constant 0 : i32
    %c0_i32_1 = arith.constant 0 : i32
    return %c0_i32, %c0_i32_0 : i32, i32
  }
  func.func @transform_3(%arg0: i32, %arg1: i32) -> (i32, i32) {
    %c0_i32 = arith.constant 0 : i32
    %c0_i32_0 = arith.constant 0 : i32
    %c0_i32_1 = arith.constant 0 : i32
    return %c0_i32, %c0_i32_0 : i32, i32
  }
  func.func @transform_4(%arg0: i32, %arg1: i32) -> (i32, i32, i32) {
    %c0_i32 = arith.constant 0 : i32
    %c0_i32_0 = arith.constant 0 : i32
    return %arg0, %c0_i32, %arg1 : i32, i32, i32
  }
  func.func @transform_5(%arg0: i32, %arg1: i32) -> (i32, i32, i32) {
    %c0_i32 = arith.constant 0 : i32
    %c0_i32_0 = arith.constant 0 : i32
    return %arg0, %c0_i32, %arg1 : i32, i32, i32
  }
  func.func @transform_6(%arg0: i32, %arg1: i32) -> (i32, i32, i32) {
    %c0_i32 = arith.constant 0 : i32
    %c0_i32_0 = arith.constant 0 : i32
    return %arg0, %c0_i32, %arg1 : i32, i32, i32
  }
}

</mosaic_0001>

<llo_original>
// kernel: tpu_custom_call.1
$region0: #{tpu_custom_call.1}
  #allocation0 [shape = 'u32[]', space=smem, size = 0x4, offset = 0x4, fixed_abs, tag = 'smem constant byte address 0x4 - core index']
  #allocation1 [shape = 'u32[144,128]{1,0:T(1,128)}', space=vmem, size = 0x12000, scoped, tag = 'internal scratch']
  %s0 = inlined_call_operand.vmem [shape: bf16[2,2,8,294], index: 0, kind: input, shape index: {}]
  %s1 = inlined_call_operand.vmem [shape: bf16[512,80], index: 1, kind: input, shape index: {}]
  %s2 = inlined_call_operand.vmem [shape: bf16[72,512], index: 2, kind: input, shape index: {}]
  %s3 = inlined_call_operand.vmem [shape: f32[72,1], index: 3, kind: input, shape index: {}]
  %s4 = inlined_call_operand.hbm [shape: f32[2,32,512], index: 4, kind: output, shape index: {0}]
  %s5 = inlined_call_operand.hbm [shape: f32[2,32,512], index: 5, kind: output, shape index: {1}]
  %s6 = inlined_call_operand.hbm [shape: f32[2,40,512], index: 6, kind: output, shape index: {2}]
  %7 = xla_tuple %s4, %s5, %s6
  %s8 = sld [smem:[#allocation0]]
  $region65: #{tpu_custom_call.1} parent=0
    _
  %s10 = ssub.s32 1, %s8
  %s11 = scalar_select 0, %s10, %s8
  $region1: #{tpu_custom_call.1} parent=0
    #allocation2 [shape = 'u8[65536]{0}', space=vmem, size = 0x10000, scoped, tag = 'output window, operand 0']
    #allocation3 [shape = 's32[2]{0}', space=sflag, size = 0x8, scoped, tag = 'scoped memory for tpu_custom_call.1']
    #allocation4 [shape = 'u8[65536]{0}', space=vmem, size = 0x10000, scoped, tag = 'output window, operand 1']
    #allocation5 [shape = 's32[2]{0}', space=sflag, size = 0x8, scoped, tag = 'scoped memory for tpu_custom_call.1']
    #allocation6 [shape = 'u8[81920]{0}', space=vmem, size = 0x14000, scoped, tag = 'output window, operand 2']
    %12 = vsyncpa [#allocation3], 0
    %s13 = scalar_lea.sflag [#allocation3], 1
    %14 = vsyncpa %s13, 0
    %15 = vsyncpa [#allocation5], 0
    %s16 = scalar_lea.sflag [#allocation5], 1
    %17 = vsyncpa %s16, 0
    loop: start=0, step=1, limit=6
    $region2: #{tpu_custom_call.1} parent=1 // loop_pre_header
      _
    $region3: #{tpu_custom_call.1} parent=1 // loop_header
      %s19 = sphi 0, %s23
      %p20 = scmp.ge.s32.totalorder %s19, 6
      %s26 = sphi 0, %s38
      %s27 = sphi 0, %s34
      %s28 = sphi 0, %s26
      %s29 = sphi 0, %s27
      %s30 = sphi 0, %s28
      %s31 = sphi 0, %s29
      %s43 = sphi 0, %s45
      %s46 = sphi 0, %s43
      %s47 = sphi 0, %s46
      %s63 = sphi 0, %s47
      %s67 = sphi 0, %s67
      %s69 = sphi 0, %s67
      %s70 = sphi 0, %s69
      %s84 = sphi 0, %s70
      %s88 = sphi 0, %s88
      %s90 = sphi 0, %s88
      %s91 = sphi 0, %s90
      %s105 = sphi 0, %s91
      %s109 = sphi 0, %s109
      %s111 = sphi 0, %s109
      %s112 = sphi 0, %s111
      %s126 = sphi 0, %s112
      %s134 = sphi 0, %s136
      %s137 = sphi 0, %s134
      %s138 = sphi 0, %s137
      %s154 = sphi 0, %s138
      %s162 = sphi 0, %s164
      %s165 = sphi 0, %s162
      %s166 = sphi 0, %s165
      %s182 = sphi 0, %s166
      %s190 = sphi 0, %s192
      %s193 = sphi 0, %s190
      %s194 = sphi 0, %s193
      %s210 = sphi 0, %s194
    $region4: #{tpu_custom_call.1} parent=1 // loop_header_branch
      %22 = sbr.rel (%p20) target = $region8
    $region5: #{tpu_custom_call.1} parent=1 // loop_body
      %s24 = ssub.s32 %s19, 1
      %s25 = ssub.s32 %s19, 2
      %s32 = sadd.s32 1, %s27
      %p33 = scmp.ge.s32.totalorder %s32, 2
      %s34 = scalar_select %p33, 0, %s32
      %s35 = sadd.s32 1, %s26
      %s36 = scalar_select %p33, %s35, %s26
      %p37 = scmp.ge.s32.totalorder %s36, 2
      %s38 = scalar_select %p37, 0, %s36
      %s39 = ssub.s32 %s26, %s38
      %s40 = ssub.s32 %s27, %s34
      %s41 = sor.u32 %s39, %s40
      %p42 = scmp.eq.s32.totalorder %s41, 0
      %s44 = sadd.s32 %s43, 1
      %s45 = scalar_select %p42, %s43, %s44
      %p48 = pneg %p42
      %p49 = scmp.eq.s32.totalorder %s19, 3
      %p50 = por %p48, %p49
      %p51 = scmp.ne.s32.totalorder %s43, %s46
      %p52 = scmp.eq.s32.totalorder %s19, 0
      %p53 = por %p51, %p52
      %p54 = scmp.ne.s32.totalorder %s43, %s46
      %p55 = scmp.eq.s32.totalorder %s24, 3
      %p56 = por %p54, %p55
      %p57 = scmp.ne.s32.totalorder %s46, %s47
      %p58 = scmp.eq.s32.totalorder %s24, 0
      %p59 = por %p57, %p58
      %p60 = scmp.ne.s32.totalorder %s46, %s47
      %p61 = scmp.eq.s32.totalorder %s25, 3
      %p62 = por %p60, %p61
      %p64 = scmp.ne.s32.totalorder %s47, %s63
      %p65 = scmp.eq.s32.totalorder %s25, 0
      %p66 = por %p64, %p65
      %s68 = sadd.s32 %s67, 1
      %p71 = scmp.eq.s32.totalorder %s19, 3
      %p72 = scmp.ne.s32.totalorder %s67, %s69
      %p73 = scmp.eq.s32.totalorder %s19, 0
      %p74 = por %p72, %p73
      %p75 = scmp.ne.s32.totalorder %s67, %s69
      %p76 = scmp.eq.s32.totalorder %s24, 3
      %p77 = por %p75, %p76
      %p78 = scmp.ne.s32.totalorder %s69, %s70
      %p79 = scmp.eq.s32.totalorder %s24, 0
      %p80 = por %p78, %p79
      %p81 = scmp.ne.s32.totalorder %s69, %s70
      %p82 = scmp.eq.s32.totalorder %s25, 3
      %p83 = por %p81, %p82
      %p85 = scmp.ne.s32.totalorder %s70, %s84
      %p86 = scmp.eq.s32.totalorder %s25, 0
      %p87 = por %p85, %p86
      %s89 = sadd.s32 %s88, 1
      %p92 = scmp.eq.s32.totalorder %s19, 3
      %p93 = scmp.ne.s32.totalorder %s88, %s90
      %p94 = scmp.eq.s32.totalorder %s19, 0
      %p95 = por %p93, %p94
      %p96 = scmp.ne.s32.totalorder %s88, %s90
      %p97 = scmp.eq.s32.totalorder %s24, 3
      %p98 = por %p96, %p97
      %p99 = scmp.ne.s32.totalorder %s90, %s91
      %p100 = scmp.eq.s32.totalorder %s24, 0
      %p101 = por %p99, %p100
      %p102 = scmp.ne.s32.totalorder %s90, %s91
      %p103 = scmp.eq.s32.totalorder %s25, 3
      %p104 = por %p102, %p103
      %p106 = scmp.ne.s32.totalorder %s91, %s105
      %p107 = scmp.eq.s32.totalorder %s25, 0
      %p108 = por %p106, %p107
      %s110 = sadd.s32 %s109, 1
      %p113 = scmp.eq.s32.totalorder %s19, 3
      %p114 = scmp.ne.s32.totalorder %s109, %s111
      %p115 = scmp.eq.s32.totalorder %s19, 0
      %p116 = por %p114, %p115
      %p117 = scmp.ne.s32.totalorder %s109, %s111
      %p118 = scmp.eq.s32.totalorder %s24, 3
      %p119 = por %p117, %p118
      %p120 = scmp.ne.s32.totalorder %s111, %s112
      %p121 = scmp.eq.s32.totalorder %s24, 0
      %p122 = por %p120, %p121
      %p123 = scmp.ne.s32.totalorder %s111, %s112
      %p124 = scmp.eq.s32.totalorder %s25, 3
      %p125 = por %p123, %p124
      %p127 = scmp.ne.s32.totalorder %s112, %s126
      %p128 = scmp.eq.s32.totalorder %s25, 0
      %p129 = por %p127, %p128
      %s130 = ssub.s32 %s26, %s38
      %s131 = ssub.s32 %s27, %s34
      %s132 = sor.u32 %s130, %s131
      %p133 = scmp.eq.s32.totalorder %s132, 0
      %s135 = sadd.s32 %s134, 1
      %s136 = scalar_select %p133, %s134, %s135
      %p139 = pneg %p133
      %p140 = scmp.eq.s32.totalorder %s19, 3
      %p141 = por %p139, %p140
      %p142 = scmp.ne.s32.totalorder %s134, %s137
      %p143 = scmp.eq.s32.totalorder %s19, 0
      %p144 = por %p142, %p143
      %p145 = scmp.ne.s32.totalorder %s134, %s137
      %p146 = scmp.eq.s32.totalorder %s24, 3
      %p147 = por %p145, %p146
      %p148 = scmp.ne.s32.totalorder %s137, %s138
      %p149 = scmp.eq.s32.totalorder %s24, 0
      %p150 = por %p148, %p149
      %p151 = scmp.ne.s32.totalorder %s137, %s138
      %p152 = scmp.eq.s32.totalorder %s25, 3
      %p153 = por %p151, %p152
      %p155 = scmp.ne.s32.totalorder %s138, %s154
      %p156 = scmp.eq.s32.totalorder %s25, 0
      %p157 = por %p155, %p156
      %s158 = ssub.s32 %s26, %s38
      %s159 = ssub.s32 %s27, %s34
      %s160 = sor.u32 %s158, %s159
      %p161 = scmp.eq.s32.totalorder %s160, 0
      %s163 = sadd.s32 %s162, 1
      %s164 = scalar_select %p161, %s162, %s163
      %p167 = pneg %p161
      %p168 = scmp.eq.s32.totalorder %s19, 3
      %p169 = por %p167, %p168
      %p170 = scmp.ne.s32.totalorder %s162, %s165
      %p171 = scmp.eq.s32.totalorder %s19, 0
      %p172 = por %p170, %p171
      %p173 = scmp.ne.s32.totalorder %s162, %s165
      %p174 = scmp.eq.s32.totalorder %s24, 3
      %p175 = por %p173, %p174
      %p176 = scmp.ne.s32.totalorder %s165, %s166
      %p177 = scmp.eq.s32.totalorder %s24, 0
      %p178 = por %p176, %p177
      %p179 = scmp.ne.s32.totalorder %s165, %s166
      %p180 = scmp.eq.s32.totalorder %s25, 3
      %p181 = por %p179, %p180
      %p183 = scmp.ne.s32.totalorder %s166, %s182
      %p184 = scmp.eq.s32.totalorder %s25, 0
      %p185 = por %p183, %p184
      %s186 = ssub.s32 %s26, %s38
      %s187 = ssub.s32 %s27, %s34
      %s188 = sor.u32 %s186, %s187
      %p189 = scmp.eq.s32.totalorder %s188, 0
      %s191 = sadd.s32 %s190, 1
      %s192 = scalar_select %p189, %s190, %s191
      %p195 = pneg %p189
      %p196 = scmp.eq.s32.totalorder %s19, 3
      %p197 = por %p195, %p196
      %p198 = scmp.ne.s32.totalorder %s190, %s193
      %p199 = scmp.eq.s32.totalorder %s19, 0
      %p200 = por %p198, %p199
      %p201 = scmp.ne.s32.totalorder %s190, %s193
      %p202 = scmp.eq.s32.totalorder %s24, 3
      %p203 = por %p201, %p202
      %p204 = scmp.ne.s32.totalorder %s193, %s194
      %p205 = scmp.eq.s32.totalorder %s24, 0
      %p206 = por %p204, %p205
      %p207 = scmp.ne.s32.totalorder %s193, %s194
      %p208 = scmp.eq.s32.totalorder %s25, 3
      %p209 = por %p207, %p208
      %p211 = scmp.ne.s32.totalorder %s194, %s210
      %p212 = scmp.eq.s32.totalorder %s25, 0
      %p213 = por %p211, %p212
      %p214 = scmp.le.s32.totalorder 1, %s19
      %p215 = scmp.lt.s32.totalorder %s19, 5
      %p216 = pnand %p214, %p215
      %p217 = pneg %p216
      // Predicated region
      $region9: #{tpu_custom_call.1} parent=5 // pred_check
        _
      $region10: #{tpu_custom_call.1} parent=5 // pred_check_branch
        %219 = sbr.rel (%p216) target = $region12
      $region11: #{tpu_custom_call.1} parent=5 // pred_region
        %s220 = ssub.s32 %s19, 1
        // Predicated region
        $region13: #{tpu_custom_call.1} parent=11 // pred_check
          %p221 = pneg %p80
        $region14: #{tpu_custom_call.1} parent=11 // pred_check_branch
          %223 = sbr.rel (%p221) target = $region16
        $region15: #{tpu_custom_call.1} parent=11 // pred_region
          _
        $region16: #{tpu_custom_call.1} parent=11 // pred_fallthru
          _
        // Predicated region
        $region17: #{tpu_custom_call.1} parent=11 // pred_check
          %p224 = pneg %p101
        $region18: #{tpu_custom_call.1} parent=11 // pred_check_branch
          %226 = sbr.rel (%p224) target = $region20
        $region19: #{tpu_custom_call.1} parent=11 // pred_region
          _
        $region20: #{tpu_custom_call.1} parent=11 // pred_fallthru
          _
        // Predicated region
        $region21: #{tpu_custom_call.1} parent=11 // pred_check
          %p227 = pneg %p122
        $region22: #{tpu_custom_call.1} parent=11 // pred_check_branch
          %229 = sbr.rel (%p227) target = $region24
        $region23: #{tpu_custom_call.1} parent=11 // pred_region
          _
        $region24: #{tpu_custom_call.1} parent=11 // pred_fallthru
          _
      $region12: #{tpu_custom_call.1} parent=5 // pred_fallthru
        _
      %p230 = scmp.lt.s32.totalorder %s19, 4
      // Predicated region
      $region25: #{tpu_custom_call.1} parent=5 // pred_check
        %p231 = pneg %p230
      $region26: #{tpu_custom_call.1} parent=5 // pred_check_branch
        %233 = sbr.rel (%p231) target = $region28
      $region27: #{tpu_custom_call.1} parent=5 // pred_region
        // Predicated region
        $region29: #{tpu_custom_call.1} parent=27 // pred_check
          %p234 = pneg %p53
        $region30: #{tpu_custom_call.1} parent=27 // pred_check_branch
          %236 = sbr.rel (%p234) target = $region32
        $region31: #{tpu_custom_call.1} parent=27 // pred_region
          %p237 = scmp.lt.s32.totalorder %s26, 1
          %s238 = scalar_select %p237, %s26, 1
          %p239 = scmp.lt.s32.totalorder %s27, 1
          %s240 = scalar_select %p239, %s27, 1
          %s241 = smul.addr %s240, 3
          %s242 = smul.addr %s238, 6
          %s243 = sadd.s32 %s241, %s242
          %s244 = smul.addr %s243, 4
          %s245 = scalar_lea.vmem %s0, %s244
        $region32: #{tpu_custom_call.1} parent=27 // pred_fallthru
          _
      $region28: #{tpu_custom_call.1} parent=5 // pred_fallthru
        _
      %p246 = scmp.le.s32.totalorder 1, %s19
      %p247 = scmp.lt.s32.totalorder %s19, 5
      %p248 = pnand %p246, %p247
      %p249 = pneg %p248
      // Predicated region
      $region33: #{tpu_custom_call.1} parent=5 // pred_check
        _
      $region34: #{tpu_custom_call.1} parent=5 // pred_check_branch
        %251 = sbr.rel (%p248) target = $region36
      $region35: #{tpu_custom_call.1} parent=5 // pred_region
        %s252 = ssub.s32 %s19, 1
        %p253 = scmp.lt.s32.totalorder %s28, 1
        %s254 = scalar_select %p253, %s28, 1
        %p255 = scmp.lt.s32.totalorder %s29, 1
        %s256 = scalar_select %p255, %s29, 1
        %s257 = smul.addr %s256, 3
        %s258 = smul.addr %s254, 6
        %s259 = sadd.s32 %s257, %s258
        %s260 = smul.addr %s259, 4
        %s261 = scalar_lea.vmem %s0, %s260
        %p262 = pneg %p59
        %p263 = pneg %p56
        %p264 = pneg %p80
        %p265 = pneg %p77
        %p266 = pneg %p101
        %p267 = pneg %p98
        %p268 = pneg %p122
        %p269 = pneg %p119
        %p270 = pneg %p150
        %p271 = pneg %p147
        %s272 = sand.u32 %s137, 1
        %s273 = scalar_lea.sflag [#allocation3], %s272
        %s274 = sand.u32 %s137, 1
        %s275 = smul.addr %s274, 64
        %s276 = scalar_lea.vmem [#allocation2], %s275
        %p277 = pneg %p178
        %p278 = pneg %p175
        %s279 = sand.u32 %s24, 1
        %s280 = scalar_lea.sflag [#allocation5], %s279
        %s281 = sand.u32 %s165, 1
        %s282 = smul.addr %s281, 64
        %s283 = scalar_lea.vmem [#allocation4], %s282
        %p284 = pneg %p206
        %p285 = pneg %p203
        %s286 = sand.u32 %s24, 1
        %s287 = scalar_lea.sflag [#allocation5], %s286
        %s288 = sand.u32 %s193, 1
        %s289 = smul.addr %s288, 80
        %s290 = scalar_lea.vmem [#allocation6], %s289
        %p291 = scmp.lt.s32.totalorder %s28, 1
        %s292 = scalar_select %p291, %s28, 1
        %p293 = scmp.lt.s32.totalorder %s29, 1
        %s294 = scalar_select %p293, %s29, 1
        %s295 = smul.addr %s294, 3
        %s296 = smul.addr %s292, 6
        %s297 = sadd.s32 %s295, %s296
        %s298 = smul.addr %s297, 4
        %s299 = scalar_lea.vmem %s0, %s298
        %s300 = smul.u32 2, %s29
        %s301 = smul.u32 2, %s29
        %s302 = smul.u32 2, %s29
        %v304 = vld [vmem:[%s299] sm:$0xff]
        %v305 = vld [vmem:[%s299 + $0x8] sm:$0xf]
        %v306 = vlaneseq
        %v307 = vshrl.u32 %v306, 7
        %vm308 = vcmp.eq.s32.totalorder %v307, 0
        %v309 = vsel %vm308, 1.0, 0.0
        %v310 = vpack.c.bf16 %v309, %v309
        %v312 = vunpack.c.l.b16 %v304
        %v313 = vunpack.c.h.b16 %v304
        %v314 = vpack.c.b16 %v312, %v312
        %v315 = vpack.c.b16 %v313, %v313
        %v317 = vunpack.c.l.b16 %v305
        %v318 = vpack.c.b16 %v317, %v317
        %319 = vrot.lane.b32.xlu0 %v314, 127
        %v320 = vpop.permute.xlu0 %319
        %321 = vrot.lane.b32.xlu0 %v315, 127
        %v322 = vpop.permute.xlu0 %321
        %323 = vrot.lane.b32.xlu0 %v318, 127
        %v324 = vpop.permute.xlu0 %323
        %vm325 = vcmask 1039360
        %v326 = vsel %vm325, %v320, %v322
        %v327 = vsel %vm325, %v322, %v324
        %328 = vrot.lane.b32.xlu0 %v314, 126
        %v329 = vpop.permute.xlu0 %328
        %330 = vrot.lane.b32.xlu0 %v315, 126
        %v331 = vpop.permute.xlu0 %330
        %332 = vrot.lane.b32.xlu0 %v318, 126
        %v333 = vpop.permute.xlu0 %332
        %vm334 = vcmask 1031168
        %v335 = vsel %vm334, %v329, %v331
        %v336 = vsel %vm334, %v331, %v333
        %337 = vrot.lane.b32.xlu0 %v314, 110
        %v338 = vpop.permute.xlu0 %337
        %339 = vrot.lane.b32.xlu0 %v315, 110
        %v340 = vpop.permute.xlu0 %339
        %341 = vrot.lane.b32.xlu0 %v318, 110
        %v342 = vpop.permute.xlu0 %341
        %vm343 = vcmask 900096
        %v344 = vsel %vm343, %v338, %v340
        %v345 = vsel %vm343, %v340, %v342
        %346 = vrot.lane.b32.xlu0 %v314, 109
        %v347 = vpop.permute.xlu0 %346
        %348 = vrot.lane.b32.xlu0 %v315, 109
        %v349 = vpop.permute.xlu0 %348
        %350 = vrot.lane.b32.xlu0 %v318, 109
        %v351 = vpop.permute.xlu0 %350
        %vm352 = vcmask 891904
        %v353 = vsel %vm352, %v347, %v349
        %v354 = vsel %vm352, %v349, %v351
        %355 = vrot.lane.b32.xlu0 %v314, 108
        %v356 = vpop.permute.xlu0 %355
        %357 = vrot.lane.b32.xlu0 %v315, 108
        %v358 = vpop.permute.xlu0 %357
        %359 = vrot.lane.b32.xlu0 %v318, 108
        %v360 = vpop.permute.xlu0 %359
        %vm361 = vcmask 883712
        %v362 = vsel %vm361, %v356, %v358
        %v363 = vsel %vm361, %v358, %v360
        %364 = vrot.lane.b32.xlu0 %v314, 92
        %v365 = vpop.permute.xlu0 %364
        %366 = vrot.lane.b32.xlu0 %v315, 92
        %v367 = vpop.permute.xlu0 %366
        %368 = vrot.lane.b32.xlu0 %v318, 92
        %v369 = vpop.permute.xlu0 %368
        %vm370 = vcmask 752640
        %v371 = vsel %vm370, %v365, %v367
        %v372 = vsel %vm370, %v367, %v369
        %373 = vrot.lane.b32.xlu0 %v314, 91
        %v374 = vpop.permute.xlu0 %373
        %375 = vrot.lane.b32.xlu0 %v315, 91
        %v376 = vpop.permute.xlu0 %375
        %377 = vrot.lane.b32.xlu0 %v318, 91
        %v378 = vpop.permute.xlu0 %377
        %vm379 = vcmask 744448
        %v380 = vsel %vm379, %v374, %v376
        %v381 = vsel %vm379, %v376, %v378
        %382 = vrot.lane.b32.xlu0 %v314, 90
        %v383 = vpop.permute.xlu0 %382
        %384 = vrot.lane.b32.xlu0 %v315, 90
        %v385 = vpop.permute.xlu0 %384
        %386 = vrot.lane.b32.xlu0 %v318, 90
        %v387 = vpop.permute.xlu0 %386
        %vm388 = vcmask 736256
        %v389 = vsel %vm388, %v383, %v385
        %v390 = vsel %vm388, %v385, %v387
        %v392 = vrot.slane %v310, 4
        %vm393 = vcmask 1043456
        %v396 = vsel %vm393, %v314, %v326
        %v400 = vsel %vm393, %v315, %v327
        %v404 = vsel %vm393, %v335, %v344
        %v408 = vsel %vm393, %v336, %v345
        %v412 = vsel %vm393, %v353, %v362
        %v416 = vsel %vm393, %v354, %v363
        %v420 = vsel %vm393, %v371, %v380
        %v424 = vsel %vm393, %v372, %v381
        %v428 = vsel %vm393, %v389, %v392
        %v431 = vsel %vm393, %v390, %v392
        %v433 = vld [vmem:[%s1] sm:$0xf]
        %v434 = vld [vmem:[%s1 + $0x4] sm:$0xf]
        %v435 = vld [vmem:[%s1 + $0x8] sm:$0xf]
        %v436 = vld [vmem:[%s1 + $0xc] sm:$0xf]
        %v437 = vld [vmem:[%s1 + $0x10] sm:$0xf]
        %v438 = vld [vmem:[%s1 + $0x14] sm:$0xf]
        %v439 = vld [vmem:[%s1 + $0x18] sm:$0xf]
        %v440 = vld [vmem:[%s1 + $0x1c] sm:$0xf]
        %v441 = vld [vmem:[%s1 + $0x20] sm:$0xf]
        %v442 = vld [vmem:[%s1 + $0x24] sm:$0xf]
        %v443 = vld [vmem:[%s1 + $0x28] sm:$0xf]
        %v444 = vld [vmem:[%s1 + $0x2c] sm:$0xf]
        %v445 = vld [vmem:[%s1 + $0x30] sm:$0xf]
        %v446 = vld [vmem:[%s1 + $0x34] sm:$0xf]
        %v447 = vld [vmem:[%s1 + $0x38] sm:$0xf]
        %v448 = vld [vmem:[%s1 + $0x3c] sm:$0xf]
        %v449 = vld [vmem:[%s1 + $0x40] sm:$0xf]
        %v450 = vld [vmem:[%s1 + $0x44] sm:$0xf]
        %v451 = vld [vmem:[%s1 + $0x48] sm:$0xf]
        %v452 = vld [vmem:[%s1 + $0x4c] sm:$0xf]
        %v453 = vld [vmem:[%s1 + $0x50] sm:$0xf]
        %v454 = vld [vmem:[%s1 + $0x54] sm:$0xf]
        %v455 = vld [vmem:[%s1 + $0x58] sm:$0xf]
        %v456 = vld [vmem:[%s1 + $0x5c] sm:$0xf]
        %v457 = vld [vmem:[%s1 + $0x60] sm:$0xf]
        %v458 = vld [vmem:[%s1 + $0x64] sm:$0xf]
        %v459 = vld [vmem:[%s1 + $0x68] sm:$0xf]
        %v460 = vld [vmem:[%s1 + $0x6c] sm:$0xf]
        %v461 = vld [vmem:[%s1 + $0x70] sm:$0xf]
        %v462 = vld [vmem:[%s1 + $0x74] sm:$0xf]
        %v463 = vld [vmem:[%s1 + $0x78] sm:$0xf]
        %v464 = vld [vmem:[%s1 + $0x7c] sm:$0xf]
        %v465 = vld [vmem:[%s1 + $0x80] sm:$0xf]
        %v466 = vld [vmem:[%s1 + $0x84] sm:$0xf]
        %v467 = vld [vmem:[%s1 + $0x88] sm:$0xf]
        %v468 = vld [vmem:[%s1 + $0x8c] sm:$0xf]
        %v469 = vld [vmem:[%s1 + $0x90] sm:$0xf]
        %v470 = vld [vmem:[%s1 + $0x94] sm:$0xf]
        %v471 = vld [vmem:[%s1 + $0x98] sm:$0xf]
        %v472 = vld [vmem:[%s1 + $0x9c] sm:$0xf]
        %v473 = vld [vmem:[%s1 + $0xa0] sm:$0xf]
        %v474 = vld [vmem:[%s1 + $0xa4] sm:$0xf]
        %v475 = vld [vmem:[%s1 + $0xa8] sm:$0xf]
        %v476 = vld [vmem:[%s1 + $0xac] sm:$0xf]
        %v477 = vld [vmem:[%s1 + $0xb0] sm:$0xf]
        %v478 = vld [vmem:[%s1 + $0xb4] sm:$0xf]
        %v479 = vld [vmem:[%s1 + $0xb8] sm:$0xf]
        %v480 = vld [vmem:[%s1 + $0xbc] sm:$0xf]
        %v481 = vld [vmem:[%s1 + $0xc0] sm:$0xf]
        %v482 = vld [vmem:[%s1 + $0xc4] sm:$0xf]
        %v483 = vld [vmem:[%s1 + $0xc8] sm:$0xf]
        %v484 = vld [vmem:[%s1 + $0xcc] sm:$0xf]
        %v485 = vld [vmem:[%s1 + $0xd0] sm:$0xf]
        %v486 = vld [vmem:[%s1 + $0xd4] sm:$0xf]
        %v487 = vld [vmem:[%s1 + $0xd8] sm:$0xf]
        %v488 = vld [vmem:[%s1 + $0xdc] sm:$0xf]
        %v489 = vld [vmem:[%s1 + $0xe0] sm:$0xf]
        %v490 = vld [vmem:[%s1 + $0xe4] sm:$0xf]
        %v491 = vld [vmem:[%s1 + $0xe8] sm:$0xf]
        %v492 = vld [vmem:[%s1 + $0xec] sm:$0xf]
        %v493 = vld [vmem:[%s1 + $0xf0] sm:$0xf]
        %v494 = vld [vmem:[%s1 + $0xf4] sm:$0xf]
        %v495 = vld [vmem:[%s1 + $0xf8] sm:$0xf]
        %v496 = vld [vmem:[%s1 + $0xfc] sm:$0xf]
        %v561 = vunpack.c.l.b16 %v433
        %v562 = vunpack.c.l.b16 %v434
        %v563 = vunpack.c.l.b16 %v435
        %v564 = vunpack.c.l.b16 %v436
        %v565 = vunpack.c.l.b16 %v437
        %v566 = vunpack.c.l.b16 %v438
        %v567 = vunpack.c.l.b16 %v439
        %v568 = vunpack.c.l.b16 %v440
        %v569 = vunpack.c.l.b16 %v441
        %v570 = vunpack.c.l.b16 %v442
        %v571 = vunpack.c.l.b16 %v443
        %v572 = vunpack.c.l.b16 %v444
        %v573 = vunpack.c.l.b16 %v445
        %v574 = vunpack.c.l.b16 %v446
        %v575 = vunpack.c.l.b16 %v447
        %v576 = vunpack.c.l.b16 %v448
        %v577 = vunpack.c.l.b16 %v449
        %v578 = vunpack.c.l.b16 %v450
        %v579 = vunpack.c.l.b16 %v451
        %v580 = vunpack.c.l.b16 %v452
        %v581 = vunpack.c.l.b16 %v453
        %v582 = vunpack.c.l.b16 %v454
        %v583 = vunpack.c.l.b16 %v455
        %v584 = vunpack.c.l.b16 %v456
        %v585 = vunpack.c.l.b16 %v457
        %v586 = vunpack.c.l.b16 %v458
        %v587 = vunpack.c.l.b16 %v459
        %v588 = vunpack.c.l.b16 %v460
        %v589 = vunpack.c.l.b16 %v461
        %v590 = vunpack.c.l.b16 %v462
        %v591 = vunpack.c.l.b16 %v463
        %v592 = vunpack.c.l.b16 %v464
        %v593 = vunpack.c.l.b16 %v465
        %v594 = vunpack.c.l.b16 %v466
        %v595 = vunpack.c.l.b16 %v467
        %v596 = vunpack.c.l.b16 %v468
        %v597 = vunpack.c.l.b16 %v469
        %v598 = vunpack.c.l.b16 %v470
        %v599 = vunpack.c.l.b16 %v471
        %v600 = vunpack.c.l.b16 %v472
        %v601 = vunpack.c.l.b16 %v473
        %v602 = vunpack.c.l.b16 %v474
        %v603 = vunpack.c.l.b16 %v475
        %v604 = vunpack.c.l.b16 %v476
        %v605 = vunpack.c.l.b16 %v477
        %v606 = vunpack.c.l.b16 %v478
        %v607 = vunpack.c.l.b16 %v479
        %v608 = vunpack.c.l.b16 %v480
        %v609 = vunpack.c.l.b16 %v481
        %v610 = vunpack.c.l.b16 %v482
        %v611 = vunpack.c.l.b16 %v483
        %v612 = vunpack.c.l.b16 %v484
        %v613 = vunpack.c.l.b16 %v485
        %v614 = vunpack.c.l.b16 %v486
        %v615 = vunpack.c.l.b16 %v487
        %v616 = vunpack.c.l.b16 %v488
        %v617 = vunpack.c.l.b16 %v489
        %v618 = vunpack.c.l.b16 %v490
        %v619 = vunpack.c.l.b16 %v491
        %v620 = vunpack.c.l.b16 %v492
        %v621 = vunpack.c.l.b16 %v493
        %v622 = vunpack.c.l.b16 %v494
        %v623 = vunpack.c.l.b16 %v495
        %v624 = vunpack.c.l.b16 %v496
        %v625 = vpack.c.b16 %v562, %v561
        %v626 = vpack.c.b16 %v564, %v563
        %v627 = vpack.c.b16 %v566, %v565
        %v628 = vpack.c.b16 %v568, %v567
        %v629 = vpack.c.b16 %v570, %v569
        %v630 = vpack.c.b16 %v572, %v571
        %v631 = vpack.c.b16 %v574, %v573
        %v632 = vpack.c.b16 %v576, %v575
        %v633 = vpack.c.b16 %v578, %v577
        %v634 = vpack.c.b16 %v580, %v579
        %v635 = vpack.c.b16 %v582, %v581
        %v636 = vpack.c.b16 %v584, %v583
        %v637 = vpack.c.b16 %v586, %v585
        %v638 = vpack.c.b16 %v588, %v587
        %v639 = vpack.c.b16 %v590, %v589
        %v640 = vpack.c.b16 %v592, %v591
        %v641 = vpack.c.b16 %v594, %v593
        %v642 = vpack.c.b16 %v596, %v595
        %v643 = vpack.c.b16 %v598, %v597
        %v644 = vpack.c.b16 %v600, %v599
        %v645 = vpack.c.b16 %v602, %v601
        %v646 = vpack.c.b16 %v604, %v603
        %v647 = vpack.c.b16 %v606, %v605
        %v648 = vpack.c.b16 %v608, %v607
        %v649 = vpack.c.b16 %v610, %v609
        %v650 = vpack.c.b16 %v612, %v611
        %v651 = vpack.c.b16 %v614, %v613
        %v652 = vpack.c.b16 %v616, %v615
        %v653 = vpack.c.b16 %v618, %v617
        %v654 = vpack.c.b16 %v620, %v619
        %v655 = vpack.c.b16 %v622, %v621
        %v656 = vpack.c.b16 %v624, %v623
        %vm657 = vcmask 654336
        %v659 = vsel %vm657, %v625, 0
        %v662 = vsel %vm657, %v626, 0
        %v665 = vsel %vm657, %v627, 0
        %v668 = vsel %vm657, %v628, 0
        %v671 = vsel %vm657, %v629, 0
        %v674 = vsel %vm657, %v630, 0
        %v677 = vsel %vm657, %v631, 0
        %v680 = vsel %vm657, %v632, 0
        %v683 = vsel %vm657, %v633, 0
        %v686 = vsel %vm657, %v634, 0
        %v689 = vsel %vm657, %v635, 0
        %v692 = vsel %vm657, %v636, 0
        %v695 = vsel %vm657, %v637, 0
        %v698 = vsel %vm657, %v638, 0
        %v701 = vsel %vm657, %v639, 0
        %v704 = vsel %vm657, %v640, 0
        %v707 = vsel %vm657, %v641, 0
        %v710 = vsel %vm657, %v642, 0
        %v713 = vsel %vm657, %v643, 0
        %v716 = vsel %vm657, %v644, 0
        %v719 = vsel %vm657, %v645, 0
        %v722 = vsel %vm657, %v646, 0
        %v725 = vsel %vm657, %v647, 0
        %v728 = vsel %vm657, %v648, 0
        %v731 = vsel %vm657, %v649, 0
        %v734 = vsel %vm657, %v650, 0
        %v737 = vsel %vm657, %v651, 0
        %v740 = vsel %vm657, %v652, 0
        %v743 = vsel %vm657, %v653, 0
        %v746 = vsel %vm657, %v654, 0
        %v749 = vsel %vm657, %v655, 0
        %v752 = vsel %vm657, %v656, 0
        %754 = vmatprep.subr.bf16.mxu0 0
        %755 = vmatpush1.bf16.msra.mxu0 0
        %756 = vmatprep.subr.bf16.mxu0 0
        %757 = vmatpush1.bf16.msra.mxu0 0
        %758 = vmatprep.subr.bf16.mxu0 0
        %759 = vmatpush1.bf16.msra.mxu0 0
        %760 = vmatprep.subr.bf16.mxu0 %v431
        %761 = vmatpush1.bf16.msra.mxu0 %v428
        %762 = vmatprep.subr.bf16.mxu0 %v424
        %763 = vmatpush1.bf16.msra.mxu0 %v420
        %764 = vmatprep.subr.bf16.mxu0 %v416
        %765 = vmatpush1.bf16.msra.mxu0 %v412
        %766 = vmatprep.subr.bf16.mxu0 %v408
        %767 = vmatpush1.bf16.msra.mxu0 %v404
        %768 = vmatprep.subr.bf16.mxu0 %v400
        %769 = vmatpush1.bf16.msra.mxu0 %v396
        %770 = vmatprep.subr.bf16.mxu0 0
        %771 = vmatpush2.bf16.msra.mxu0 0
        %772 = vmatprep.subr.bf16.mxu0 0
        %773 = vmatpush2.bf16.msra.mxu0 0
        %774 = vmatprep.subr.bf16.mxu0 0
        %775 = vmatpush2.bf16.msra.mxu0 0
        %776 = vmatprep.subr.bf16.mxu0 0
        %777 = vmatpush2.bf16.msra.mxu0 0
        %778 = vmatprep.subr.bf16.mxu0 0
        %779 = vmatpush2.bf16.msra.mxu0 0
        %780 = vmatprep.subr.bf16.mxu0 0
        %781 = vmatpush2.bf16.msra.mxu0 0
        %782 = vmatprep.subr.bf16.mxu0 0
        %783 = vmatpush2.bf16.msra.mxu0 0
        %784 = vmatprep.subr.bf16.mxu0 0
        %785 = vmatpush2.bf16.msra.mxu0 0
        %786 = vmatprep.mubr.bf16.mxu0 0
        %787 = vmatmul.mubr.bf16.gmra.mxu0 %v659
        %v788 = vpop.f32.mrf.mxu0
        %v789 = vadd.f32 0.0, %v788
        %v790 = vpop.f32.mrf.mxu0
        %v791 = vadd.f32 0.0, %v790
        %v792 = vpop.f32.mrf.mxu0
        %v793 = vadd.f32 0.0, %v792
        %v794 = vpop.f32.mrf.mxu0
        %v795 = vadd.f32 0.0, %v794
        %796 = vmatprep.mubr.bf16.mxu0 0
        %797 = vmatmul.mubr.bf16.gmra.mxu0 %v662
        %v798 = vpop.f32.mrf.mxu0
        %v799 = vadd.f32 0.0, %v798
        %v800 = vpop.f32.mrf.mxu0
        %v801 = vadd.f32 0.0, %v800
        %v802 = vpop.f32.mrf.mxu0
        %v803 = vadd.f32 0.0, %v802
        %v804 = vpop.f32.mrf.mxu0
        %v805 = vadd.f32 0.0, %v804
        %806 = vmatprep.mubr.bf16.mxu0 0
        %807 = vmatmul.mubr.bf16.gmra.mxu0 %v665
        %v808 = vpop.f32.mrf.mxu0
        %v809 = vadd.f32 0.0, %v808
        %v810 = vpop.f32.mrf.mxu0
        %v811 = vadd.f32 0.0, %v810
        %v812 = vpop.f32.mrf.mxu0
        %v813 = vadd.f32 0.0, %v812
        %v814 = vpop.f32.mrf.mxu0
        %v815 = vadd.f32 0.0, %v814
        %816 = vmatprep.mubr.bf16.mxu0 0
        %817 = vmatmul.mubr.bf16.gmra.mxu0 %v668
        %v818 = vpop.f32.mrf.mxu0
        %v819 = vadd.f32 0.0, %v818
        %v820 = vpop.f32.mrf.mxu0
        %v821 = vadd.f32 0.0, %v820
        %v822 = vpop.f32.mrf.mxu0
        %v823 = vadd.f32 0.0, %v822
        %v824 = vpop.f32.mrf.mxu0
        %v825 = vadd.f32 0.0, %v824
        %826 = vmatprep.mubr.bf16.mxu0 0
        %827 = vmatmul.mubr.bf16.gmra.mxu0 %v671
        %v828 = vpop.f32.mrf.mxu0
        %v829 = vadd.f32 0.0, %v828
        %v830 = vpop.f32.mrf.mxu0
        %v831 = vadd.f32 0.0, %v830
        %v832 = vpop.f32.mrf.mxu0
        %v833 = vadd.f32 0.0, %v832
        %v834 = vpop.f32.mrf.mxu0
        %v835 = vadd.f32 0.0, %v834
        %836 = vmatprep.mubr.bf16.mxu0 0
        %837 = vmatmul.mubr.bf16.gmra.mxu0 %v674
        %v838 = vpop.f32.mrf.mxu0
        %v839 = vadd.f32 0.0, %v838
        %v840 = vpop.f32.mrf.mxu0
        %v841 = vadd.f32 0.0, %v840
        %v842 = vpop.f32.mrf.mxu0
        %v843 = vadd.f32 0.0, %v842
        %v844 = vpop.f32.mrf.mxu0
        %v845 = vadd.f32 0.0, %v844
        %846 = vmatprep.mubr.bf16.mxu0 0
        %847 = vmatmul.mubr.bf16.gmra.mxu0 %v677
        %v848 = vpop.f32.mrf.mxu0
        %v849 = vadd.f32 0.0, %v848
        %v850 = vpop.f32.mrf.mxu0
        %v851 = vadd.f32 0.0, %v850
        %v852 = vpop.f32.mrf.mxu0
        %v853 = vadd.f32 0.0, %v852
        %v854 = vpop.f32.mrf.mxu0
        %v855 = vadd.f32 0.0, %v854
        %856 = vmatprep.mubr.bf16.mxu0 0
        %857 = vmatmul.mubr.bf16.gmra.mxu0 %v680
        %v858 = vpop.f32.mrf.mxu0
        %v859 = vadd.f32 0.0, %v858
        %v860 = vpop.f32.mrf.mxu0
        %v861 = vadd.f32 0.0, %v860
        %v862 = vpop.f32.mrf.mxu0
        %v863 = vadd.f32 0.0, %v862
        %v864 = vpop.f32.mrf.mxu0
        %v865 = vadd.f32 0.0, %v864
        %866 = vmatprep.mubr.bf16.mxu0 0
        %867 = vmatmul.mubr.bf16.gmra.mxu0 %v683
        %v868 = vpop.f32.mrf.mxu0
        %v869 = vadd.f32 0.0, %v868
        %v870 = vpop.f32.mrf.mxu0
        %v871 = vadd.f32 0.0, %v870
        %v872 = vpop.f32.mrf.mxu0
        %v873 = vadd.f32 0.0, %v872
        %v874 = vpop.f32.mrf.mxu0
        %v875 = vadd.f32 0.0, %v874
        %876 = vmatprep.mubr.bf16.mxu0 0
        %877 = vmatmul.mubr.bf16.gmra.mxu0 %v686
        %v878 = vpop.f32.mrf.mxu0
        %v879 = vadd.f32 0.0, %v878
        %v880 = vpop.f32.mrf.mxu0
        %v881 = vadd.f32 0.0, %v880
        %v882 = vpop.f32.mrf.mxu0
        %v883 = vadd.f32 0.0, %v882
        %v884 = vpop.f32.mrf.mxu0
        %v885 = vadd.f32 0.0, %v884
        %886 = vmatprep.mubr.bf16.mxu0 0
        %887 = vmatmul.mubr.bf16.gmra.mxu0 %v689
        %v888 = vpop.f32.mrf.mxu0
        %v889 = vadd.f32 0.0, %v888
        %v890 = vpop.f32.mrf.mxu0
        %v891 = vadd.f32 0.0, %v890
        %v892 = vpop.f32.mrf.mxu0
        %v893 = vadd.f32 0.0, %v892
        %v894 = vpop.f32.mrf.mxu0
        %v895 = vadd.f32 0.0, %v894
        %896 = vmatprep.mubr.bf16.mxu0 0
        %897 = vmatmul.mubr.bf16.gmra.mxu0 %v692
        %v898 = vpop.f32.mrf.mxu0
        %v899 = vadd.f32 0.0, %v898
        %v900 = vpop.f32.mrf.mxu0
        %v901 = vadd.f32 0.0, %v900
        %v902 = vpop.f32.mrf.mxu0
        %v903 = vadd.f32 0.0, %v902
        %v904 = vpop.f32.mrf.mxu0
        %v905 = vadd.f32 0.0, %v904
        %906 = vmatprep.mubr.bf16.mxu0 0
        %907 = vmatmul.mubr.bf16.gmra.mxu0 %v695
        %v908 = vpop.f32.mrf.mxu0
        %v909 = vadd.f32 0.0, %v908
        %v910 = vpop.f32.mrf.mxu0
        %v911 = vadd.f32 0.0, %v910
        %v912 = vpop.f32.mrf.mxu0
        %v913 = vadd.f32 0.0, %v912
        %v914 = vpop.f32.mrf.mxu0
        %v915 = vadd.f32 0.0, %v914
        %916 = vmatprep.mubr.bf16.mxu0 0
        %917 = vmatmul.mubr.bf16.gmra.mxu0 %v698
        %v918 = vpop.f32.mrf.mxu0
        %v919 = vadd.f32 0.0, %v918
        %v920 = vpop.f32.mrf.mxu0
        %v921 = vadd.f32 0.0, %v920
        %v922 = vpop.f32.mrf.mxu0
        %v923 = vadd.f32 0.0, %v922
        %v924 = vpop.f32.mrf.mxu0
        %v925 = vadd.f32 0.0, %v924
        %926 = vmatprep.mubr.bf16.mxu0 0
        %927 = vmatmul.mubr.bf16.gmra.mxu0 %v701
        %v928 = vpop.f32.mrf.mxu0
        %v929 = vadd.f32 0.0, %v928
        %v930 = vpop.f32.mrf.mxu0
        %v931 = vadd.f32 0.0, %v930
        %v932 = vpop.f32.mrf.mxu0
        %v933 = vadd.f32 0.0, %v932
        %v934 = vpop.f32.mrf.mxu0
        %v935 = vadd.f32 0.0, %v934
        %936 = vmatprep.mubr.bf16.mxu0 0
        %937 = vmatmul.mubr.bf16.gmra.mxu0 %v704
        %v938 = vpop.f32.mrf.mxu0
        %v939 = vadd.f32 0.0, %v938
        %v940 = vpop.f32.mrf.mxu0
        %v941 = vadd.f32 0.0, %v940
        %v942 = vpop.f32.mrf.mxu0
        %v943 = vadd.f32 0.0, %v942
        %v944 = vpop.f32.mrf.mxu0
        %v945 = vadd.f32 0.0, %v944
        %946 = vmatprep.mubr.bf16.mxu0 0
        %947 = vmatmul.mubr.bf16.gmra.mxu0 %v707
        %v948 = vpop.f32.mrf.mxu0
        %v949 = vadd.f32 0.0, %v948
        %v950 = vpop.f32.mrf.mxu0
        %v951 = vadd.f32 0.0, %v950
        %v952 = vpop.f32.mrf.mxu0
        %v953 = vadd.f32 0.0, %v952
        %v954 = vpop.f32.mrf.mxu0
        %v955 = vadd.f32 0.0, %v954
        %956 = vmatprep.mubr.bf16.mxu0 0
        %957 = vmatmul.mubr.bf16.gmra.mxu0 %v710
        %v958 = vpop.f32.mrf.mxu0
        %v959 = vadd.f32 0.0, %v958
        %v960 = vpop.f32.mrf.mxu0
        %v961 = vadd.f32 0.0, %v960
        %v962 = vpop.f32.mrf.mxu0
        %v963 = vadd.f32 0.0, %v962
        %v964 = vpop.f32.mrf.mxu0
        %v965 = vadd.f32 0.0, %v964
        %966 = vmatprep.mubr.bf16.mxu0 0
        %967 = vmatmul.mubr.bf16.gmra.mxu0 %v713
        %v968 = vpop.f32.mrf.mxu0
        %v969 = vadd.f32 0.0, %v968
        %v970 = vpop.f32.mrf.mxu0
        %v971 = vadd.f32 0.0, %v970
        %v972 = vpop.f32.mrf.mxu0
        %v973 = vadd.f32 0.0, %v972
        %v974 = vpop.f32.mrf.mxu0
        %v975 = vadd.f32 0.0, %v974
        %976 = vmatprep.mubr.bf16.mxu0 0
        %977 = vmatmul.mubr.bf16.gmra.mxu0 %v716
        %v978 = vpop.f32.mrf.mxu0
        %v979 = vadd.f32 0.0, %v978
        %v980 = vpop.f32.mrf.mxu0
        %v981 = vadd.f32 0.0, %v980
        %v982 = vpop.f32.mrf.mxu0
        %v983 = vadd.f32 0.0, %v982
        %v984 = vpop.f32.mrf.mxu0
        %v985 = vadd.f32 0.0, %v984
        %986 = vmatprep.mubr.bf16.mxu0 0
        %987 = vmatmul.mubr.bf16.gmra.mxu0 %v719
        %v988 = vpop.f32.mrf.mxu0
        %v989 = vadd.f32 0.0, %v988
        %v990 = vpop.f32.mrf.mxu0
        %v991 = vadd.f32 0.0, %v990
        %v992 = vpop.f32.mrf.mxu0
        %v993 = vadd.f32 0.0, %v992
        %v994 = vpop.f32.mrf.mxu0
        %v995 = vadd.f32 0.0, %v994
        %996 = vmatprep.mubr.bf16.mxu0 0
        %997 = vmatmul.mubr.bf16.gmra.mxu0 %v722
        %v998 = vpop.f32.mrf.mxu0
        %v999 = vadd.f32 0.0, %v998
        %v1000 = vpop.f32.mrf.mxu0
        %v1001 = vadd.f32 0.0, %v1000
        %v1002 = vpop.f32.mrf.mxu0
        %v1003 = vadd.f32 0.0, %v1002
        %v1004 = vpop.f32.mrf.mxu0
        %v1005 = vadd.f32 0.0, %v1004
        %1006 = vmatprep.mubr.bf16.mxu0 0
        %1007 = vmatmul.mubr.bf16.gmra.mxu0 %v725
        %v1008 = vpop.f32.mrf.mxu0
        %v1009 = vadd.f32 0.0, %v1008
        %v1010 = vpop.f32.mrf.mxu0
        %v1011 = vadd.f32 0.0, %v1010
        %v1012 = vpop.f32.mrf.mxu0
        %v1013 = vadd.f32 0.0, %v1012
        %v1014 = vpop.f32.mrf.mxu0
        %v1015 = vadd.f32 0.0, %v1014
        %1016 = vmatprep.mubr.bf16.mxu0 0
        %1017 = vmatmul.mubr.bf16.gmra.mxu0 %v728
        %v1018 = vpop.f32.mrf.mxu0
        %v1019 = vadd.f32 0.0, %v1018
        %v1020 = vpop.f32.mrf.mxu0
        %v1021 = vadd.f32 0.0, %v1020
        %v1022 = vpop.f32.mrf.mxu0
        %v1023 = vadd.f32 0.0, %v1022
        %v1024 = vpop.f32.mrf.mxu0
        %v1025 = vadd.f32 0.0, %v1024
        %1026 = vmatprep.mubr.bf16.mxu0 0
        %1027 = vmatmul.mubr.bf16.gmra.mxu0 %v731
        %v1028 = vpop.f32.mrf.mxu0
        %v1029 = vadd.f32 0.0, %v1028
        %v1030 = vpop.f32.mrf.mxu0
        %v1031 = vadd.f32 0.0, %v1030
        %v1032 = vpop.f32.mrf.mxu0
        %v1033 = vadd.f32 0.0, %v1032
        %v1034 = vpop.f32.mrf.mxu0
        %v1035 = vadd.f32 0.0, %v1034
        %1036 = vmatprep.mubr.bf16.mxu0 0
        %1037 = vmatmul.mubr.bf16.gmra.mxu0 %v734
        %v1038 = vpop.f32.mrf.mxu0
        %v1039 = vadd.f32 0.0, %v1038
        %v1040 = vpop.f32.mrf.mxu0
        %v1041 = vadd.f32 0.0, %v1040
        %v1042 = vpop.f32.mrf.mxu0
        %v1043 = vadd.f32 0.0, %v1042
        %v1044 = vpop.f32.mrf.mxu0
        %v1045 = vadd.f32 0.0, %v1044
        %1046 = vmatprep.mubr.bf16.mxu0 0
        %1047 = vmatmul.mubr.bf16.gmra.mxu0 %v737
        %v1048 = vpop.f32.mrf.mxu0
        %v1049 = vadd.f32 0.0, %v1048
        %v1050 = vpop.f32.mrf.mxu0
        %v1051 = vadd.f32 0.0, %v1050
        %v1052 = vpop.f32.mrf.mxu0
        %v1053 = vadd.f32 0.0, %v1052
        %v1054 = vpop.f32.mrf.mxu0
        %v1055 = vadd.f32 0.0, %v1054
        %1056 = vmatprep.mubr.bf16.mxu0 0
        %1057 = vmatmul.mubr.bf16.gmra.mxu0 %v740
        %v1058 = vpop.f32.mrf.mxu0
        %v1059 = vadd.f32 0.0, %v1058
        %v1060 = vpop.f32.mrf.mxu0
        %v1061 = vadd.f32 0.0, %v1060
        %v1062 = vpop.f32.mrf.mxu0
        %v1063 = vadd.f32 0.0, %v1062
        %v1064 = vpop.f32.mrf.mxu0
        %v1065 = vadd.f32 0.0, %v1064
        %1066 = vmatprep.mubr.bf16.mxu0 0
        %1067 = vmatmul.mubr.bf16.gmra.mxu0 %v743
        %v1068 = vpop.f32.mrf.mxu0
        %v1069 = vadd.f32 0.0, %v1068
        %v1070 = vpop.f32.mrf.mxu0
        %v1071 = vadd.f32 0.0, %v1070
        %v1072 = vpop.f32.mrf.mxu0
        %v1073 = vadd.f32 0.0, %v1072
        %v1074 = vpop.f32.mrf.mxu0
        %v1075 = vadd.f32 0.0, %v1074
        %1076 = vmatprep.mubr.bf16.mxu0 0
        %1077 = vmatmul.mubr.bf16.gmra.mxu0 %v746
        %v1078 = vpop.f32.mrf.mxu0
        %v1079 = vadd.f32 0.0, %v1078
        %v1080 = vpop.f32.mrf.mxu0
        %v1081 = vadd.f32 0.0, %v1080
        %v1082 = vpop.f32.mrf.mxu0
        %v1083 = vadd.f32 0.0, %v1082
        %v1084 = vpop.f32.mrf.mxu0
        %v1085 = vadd.f32 0.0, %v1084
        %1086 = vmatprep.mubr.bf16.mxu0 0
        %1087 = vmatmul.mubr.bf16.gmra.mxu0 %v749
        %v1088 = vpop.f32.mrf.mxu0
        %v1089 = vadd.f32 0.0, %v1088
        %v1090 = vpop.f32.mrf.mxu0
        %v1091 = vadd.f32 0.0, %v1090
        %v1092 = vpop.f32.mrf.mxu0
        %v1093 = vadd.f32 0.0, %v1092
        %v1094 = vpop.f32.mrf.mxu0
        %v1095 = vadd.f32 0.0, %v1094
        %1096 = vmatprep.mubr.bf16.mxu0 0
        %1097 = vmatmul.mubr.bf16.gmra.mxu0 %v752
        %v1098 = vpop.f32.mrf.mxu0
        %v1099 = vadd.f32 0.0, %v1098
        %v1100 = vpop.f32.mrf.mxu0
        %v1101 = vadd.f32 0.0, %v1100
        %v1102 = vpop.f32.mrf.mxu0
        %v1103 = vadd.f32 0.0, %v1102
        %v1104 = vpop.f32.mrf.mxu0
        %v1105 = vadd.f32 0.0, %v1104
        %1106 = vdwg.mxu0
        %v1107 = vmax.f32 %v789, 0.0
        %v1108 = vmax.f32 %v791, 0.0
        %v1109 = vmax.f32 %v793, 0.0
        %v1110 = vmax.f32 %v795, 0.0
        %v1111 = vmax.f32 %v799, 0.0
        %v1112 = vmax.f32 %v801, 0.0
        %v1113 = vmax.f32 %v803, 0.0
        %v1114 = vmax.f32 %v805, 0.0
        %v1115 = vmax.f32 %v809, 0.0
        %v1116 = vmax.f32 %v811, 0.0
        %v1117 = vmax.f32 %v813, 0.0
        %v1118 = vmax.f32 %v815, 0.0
        %v1119 = vmax.f32 %v819, 0.0
        %v1120 = vmax.f32 %v821, 0.0
        %v1121 = vmax.f32 %v823, 0.0
        %v1122 = vmax.f32 %v825, 0.0
        %v1123 = vmax.f32 %v829, 0.0
        %v1124 = vmax.f32 %v831, 0.0
        %v1125 = vmax.f32 %v833, 0.0
        %v1126 = vmax.f32 %v835, 0.0
        %v1127 = vmax.f32 %v839, 0.0
        %v1128 = vmax.f32 %v841, 0.0
        %v1129 = vmax.f32 %v843, 0.0
        %v1130 = vmax.f32 %v845, 0.0
        %v1131 = vmax.f32 %v849, 0.0
        %v1132 = vmax.f32 %v851, 0.0
        %v1133 = vmax.f32 %v853, 0.0
        %v1134 = vmax.f32 %v855, 0.0
        %v1135 = vmax.f32 %v859, 0.0
        %v1136 = vmax.f32 %v861, 0.0
        %v1137 = vmax.f32 %v863, 0.0
        %v1138 = vmax.f32 %v865, 0.0
        %v1139 = vmax.f32 %v869, 0.0
        %v1140 = vmax.f32 %v871, 0.0
        %v1141 = vmax.f32 %v873, 0.0
        %v1142 = vmax.f32 %v875, 0.0
        %v1143 = vmax.f32 %v879, 0.0
        %v1144 = vmax.f32 %v881, 0.0
        %v1145 = vmax.f32 %v883, 0.0
        %v1146 = vmax.f32 %v885, 0.0
        %v1147 = vmax.f32 %v889, 0.0
        %v1148 = vmax.f32 %v891, 0.0
        %v1149 = vmax.f32 %v893, 0.0
        %v1150 = vmax.f32 %v895, 0.0
        %v1151 = vmax.f32 %v899, 0.0
        %v1152 = vmax.f32 %v901, 0.0
        %v1153 = vmax.f32 %v903, 0.0
        %v1154 = vmax.f32 %v905, 0.0
        %v1155 = vmax.f32 %v909, 0.0
        %v1156 = vmax.f32 %v911, 0.0
        %v1157 = vmax.f32 %v913, 0.0
        %v1158 = vmax.f32 %v915, 0.0
        %v1159 = vmax.f32 %v919, 0.0
        %v1160 = vmax.f32 %v921, 0.0
        %v1161 = vmax.f32 %v923, 0.0
        %v1162 = vmax.f32 %v925, 0.0
        %v1163 = vmax.f32 %v929, 0.0
        %v1164 = vmax.f32 %v931, 0.0
        %v1165 = vmax.f32 %v933, 0.0
        %v1166 = vmax.f32 %v935, 0.0
        %v1167 = vmax.f32 %v939, 0.0
        %v1168 = vmax.f32 %v941, 0.0
        %v1169 = vmax.f32 %v943, 0.0
        %v1170 = vmax.f32 %v945, 0.0
        %v1171 = vmax.f32 %v949, 0.0
        %v1172 = vmax.f32 %v951, 0.0
        %v1173 = vmax.f32 %v953, 0.0
        %v1174 = vmax.f32 %v955, 0.0
        %v1175 = vmax.f32 %v959, 0.0
        %v1176 = vmax.f32 %v961, 0.0
        %v1177 = vmax.f32 %v963, 0.0
        %v1178 = vmax.f32 %v965, 0.0
        %v1179 = vmax.f32 %v969, 0.0
        %v1180 = vmax.f32 %v971, 0.0
        %v1181 = vmax.f32 %v973, 0.0
        %v1182 = vmax.f32 %v975, 0.0
        %v1183 = vmax.f32 %v979, 0.0
        %v1184 = vmax.f32 %v981, 0.0
        %v1185 = vmax.f32 %v983, 0.0
        %v1186 = vmax.f32 %v985, 0.0
        %v1187 = vmax.f32 %v989, 0.0
        %v1188 = vmax.f32 %v991, 0.0
        %v1189 = vmax.f32 %v993, 0.0
        %v1190 = vmax.f32 %v995, 0.0
        %v1191 = vmax.f32 %v999, 0.0
        %v1192 = vmax.f32 %v1001, 0.0
        %v1193 = vmax.f32 %v1003, 0.0
        %v1194 = vmax.f32 %v1005, 0.0
        %v1195 = vmax.f32 %v1009, 0.0
        %v1196 = vmax.f32 %v1011, 0.0
        %v1197 = vmax.f32 %v1013, 0.0
        %v1198 = vmax.f32 %v1015, 0.0
        %v1199 = vmax.f32 %v1019, 0.0
        %v1200 = vmax.f32 %v1021, 0.0
        %v1201 = vmax.f32 %v1023, 0.0
        %v1202 = vmax.f32 %v1025, 0.0
        %v1203 = vmax.f32 %v1029, 0.0
        %v1204 = vmax.f32 %v1031, 0.0
        %v1205 = vmax.f32 %v1033, 0.0
        %v1206 = vmax.f32 %v1035, 0.0
        %v1207 = vmax.f32 %v1039, 0.0
        %v1208 = vmax.f32 %v1041, 0.0
        %v1209 = vmax.f32 %v1043, 0.0
        %v1210 = vmax.f32 %v1045, 0.0
        %v1211 = vmax.f32 %v1049, 0.0
        %v1212 = vmax.f32 %v1051, 0.0
        %v1213 = vmax.f32 %v1053, 0.0
        %v1214 = vmax.f32 %v1055, 0.0
        %v1215 = vmax.f32 %v1059, 0.0
        %v1216 = vmax.f32 %v1061, 0.0
        %v1217 = vmax.f32 %v1063, 0.0
        %v1218 = vmax.f32 %v1065, 0.0
        %v1219 = vmax.f32 %v1069, 0.0
        %v1220 = vmax.f32 %v1071, 0.0
        %v1221 = vmax.f32 %v1073, 0.0
        %v1222 = vmax.f32 %v1075, 0.0
        %v1223 = vmax.f32 %v1079, 0.0
        %v1224 = vmax.f32 %v1081, 0.0
        %v1225 = vmax.f32 %v1083, 0.0
        %v1226 = vmax.f32 %v1085, 0.0
        %v1227 = vmax.f32 %v1089, 0.0
        %v1228 = vmax.f32 %v1091, 0.0
        %v1229 = vmax.f32 %v1093, 0.0
        %v1230 = vmax.f32 %v1095, 0.0
        %v1231 = vmax.f32 %v1099, 0.0
        %v1232 = vmax.f32 %v1101, 0.0
        %v1233 = vmax.f32 %v1103, 0.0
        %v1234 = vmax.f32 %v1105, 0.0
        %v1235 = vld [vmem:[%s2] sm:$0xff]
        %v1236 = vld [vmem:[%s2 + $0x8] sm:$0xff]
        %v1237 = vld [vmem:[%s2 + $0x10] sm:$0xff]
        %v1238 = vld [vmem:[%s2 + $0x18] sm:$0xff]
        %v1239 = vld [vmem:[%s2 + $0x20] sm:$0xff]
        %v1240 = vld [vmem:[%s2 + $0x28] sm:$0xff]
        %v1241 = vld [vmem:[%s2 + $0x30] sm:$0xff]
        %v1242 = vld [vmem:[%s2 + $0x38] sm:$0xff]
        %v1243 = vld [vmem:[%s2 + $0x40] sm:$0xff]
        %v1244 = vld [vmem:[%s2 + $0x48] sm:$0xff]
        %v1245 = vld [vmem:[%s2 + $0x50] sm:$0xff]
        %v1246 = vld [vmem:[%s2 + $0x58] sm:$0xff]
        %v1247 = vld [vmem:[%s2 + $0x60] sm:$0xff]
        %v1248 = vld [vmem:[%s2 + $0x68] sm:$0xff]
        %v1249 = vld [vmem:[%s2 + $0x70] sm:$0xff]
        %v1250 = vld [vmem:[%s2 + $0x78] sm:$0xff]
        %v1251 = vld [vmem:[%s2 + $0x80] sm:$0xff]
        %v1252 = vld [vmem:[%s2 + $0x88] sm:$0xff]
        %v1253 = vpack.c.bf16 %v1109, %v1107
        %v1254 = vpack.c.bf16 %v1110, %v1108
        %v1255 = vpack.c.bf16 %v1113, %v1111
        %v1256 = vpack.c.bf16 %v1114, %v1112
        %v1257 = vpack.c.bf16 %v1117, %v1115
        %v1258 = vpack.c.bf16 %v1118, %v1116
        %v1259 = vpack.c.bf16 %v1121, %v1119
        %v1260 = vpack.c.bf16 %v1122, %v1120
        %v1261 = vpack.c.bf16 %v1125, %v1123
        %v1262 = vpack.c.bf16 %v1126, %v1124
        %v1263 = vpack.c.bf16 %v1129, %v1127
        %v1264 = vpack.c.bf16 %v1130, %v1128
        %v1265 = vpack.c.bf16 %v1133, %v1131
        %v1266 = vpack.c.bf16 %v1134, %v1132
        %v1267 = vpack.c.bf16 %v1137, %v1135
        %v1268 = vpack.c.bf16 %v1138, %v1136
        %v1269 = vpack.c.bf16 %v1141, %v1139
        %v1270 = vpack.c.bf16 %v1142, %v1140
        %v1271 = vpack.c.bf16 %v1145, %v1143
        %v1272 = vpack.c.bf16 %v1146, %v1144
        %v1273 = vpack.c.bf16 %v1149, %v1147
        %v1274 = vpack.c.bf16 %v1150, %v1148
        %v1275 = vpack.c.bf16 %v1153, %v1151
        %v1276 = vpack.c.bf16 %v1154, %v1152
        %v1277 = vpack.c.bf16 %v1157, %v1155
        %v1278 = vpack.c.bf16 %v1158, %v1156
        %v1279 = vpack.c.bf16 %v1161, %v1159
        %v1280 = vpack.c.bf16 %v1162, %v1160
        %v1281 = vpack.c.bf16 %v1165, %v1163
        %v1282 = vpack.c.bf16 %v1166, %v1164
        %v1283 = vpack.c.bf16 %v1169, %v1167
        %v1284 = vpack.c.bf16 %v1170, %v1168
        %v1285 = vpack.c.bf16 %v1173, %v1171
        %v1286 = vpack.c.bf16 %v1174, %v1172
        %v1287 = vpack.c.bf16 %v1177, %v1175
        %v1288 = vpack.c.bf16 %v1178, %v1176
        %v1289 = vpack.c.bf16 %v1181, %v1179
        %v1290 = vpack.c.bf16 %v1182, %v1180
        %v1291 = vpack.c.bf16 %v1185, %v1183
        %v1292 = vpack.c.bf16 %v1186, %v1184
        %v1293 = vpack.c.bf16 %v1189, %v1187
        %v1294 = vpack.c.bf16 %v1190, %v1188
        %v1295 = vpack.c.bf16 %v1193, %v1191
        %v1296 = vpack.c.bf16 %v1194, %v1192
        %v1297 = vpack.c.bf16 %v1197, %v1195
        %v1298 = vpack.c.bf16 %v1198, %v1196
        %v1299 = vpack.c.bf16 %v1201, %v1199
        %v1300 = vpack.c.bf16 %v1202, %v1200
        %v1301 = vpack.c.bf16 %v1205, %v1203
        %v1302 = vpack.c.bf16 %v1206, %v1204
        %v1303 = vpack.c.bf16 %v1209, %v1207
        %v1304 = vpack.c.bf16 %v1210, %v1208
        %v1305 = vpack.c.bf16 %v1213, %v1211
        %v1306 = vpack.c.bf16 %v1214, %v1212
        %v1307 = vpack.c.bf16 %v1217, %v1215
        %v1308 = vpack.c.bf16 %v1218, %v1216
        %v1309 = vpack.c.bf16 %v1221, %v1219
        %v1310 = vpack.c.bf16 %v1222, %v1220
        %v1311 = vpack.c.bf16 %v1225, %v1223
        %v1312 = vpack.c.bf16 %v1226, %v1224
        %v1313 = vpack.c.bf16 %v1229, %v1227
        %v1314 = vpack.c.bf16 %v1230, %v1228
        %v1315 = vpack.c.bf16 %v1233, %v1231
        %v1316 = vpack.c.bf16 %v1234, %v1232
        %v1317 = vld [vmem:[%s3] sm:$0xff]
        %v1318 = vld [vmem:[%s3 + $0x8] sm:$0xff]
        %v1319 = vld [vmem:[%s3 + $0x10] sm:$0xff]
        %v1320 = vld [vmem:[%s3 + $0x18] sm:$0xff]
        %v1321 = vld [vmem:[%s3 + $0x20] sm:$0xff]
        %v1322 = vld [vmem:[%s3 + $0x28] sm:$0xff]
        %v1323 = vld [vmem:[%s3 + $0x30] sm:$0xff]
        %v1324 = vld [vmem:[%s3 + $0x38] sm:$0xff]
        %v1325 = vld [vmem:[%s3 + $0x40] sm:$0xff]
        %1327 = vset.pattern.permute.xlu0 0
        %1328 = vperm.xlu0 %1327, %v1317
        %v1329 = vpop.permute.xlu0 %1328
        %1332 = vset.pattern.permute.xlu0 0
        %1333 = vperm.xlu0 %1332, %v1318
        %v1334 = vpop.permute.xlu0 %1333
        %1337 = vset.pattern.permute.xlu0 0
        %1338 = vperm.xlu0 %1337, %v1319
        %v1339 = vpop.permute.xlu0 %1338
        %1342 = vset.pattern.permute.xlu0 0
        %1343 = vperm.xlu0 %1342, %v1320
        %v1344 = vpop.permute.xlu0 %1343
        %1347 = vset.pattern.permute.xlu0 0
        %1348 = vperm.xlu0 %1347, %v1321
        %v1349 = vpop.permute.xlu0 %1348
        %1352 = vset.pattern.permute.xlu0 0
        %1353 = vperm.xlu0 %1352, %v1322
        %v1354 = vpop.permute.xlu0 %1353
        %1357 = vset.pattern.permute.xlu0 0
        %1358 = vperm.xlu0 %1357, %v1323
        %v1359 = vpop.permute.xlu0 %1358
        %1362 = vset.pattern.permute.xlu0 0
        %1363 = vperm.xlu0 %1362, %v1324
        %v1364 = vpop.permute.xlu0 %1363
        %1367 = vset.pattern.permute.xlu0 0
        %1368 = vperm.xlu0 %1367, %v1325
        %v1369 = vpop.permute.xlu0 %1368
        %v1389 = vunpack.c.l.b16 %v1235
        %v1390 = vunpack.c.h.b16 %v1235
        %v1391 = vunpack.c.l.b16 %v1236
        %v1392 = vunpack.c.h.b16 %v1236
        %v1393 = vunpack.c.l.b16 %v1237
        %v1394 = vunpack.c.h.b16 %v1237
        %v1395 = vunpack.c.l.b16 %v1238
        %v1396 = vunpack.c.h.b16 %v1238
        %v1397 = vunpack.c.l.b16 %v1239
        %v1398 = vunpack.c.h.b16 %v1239
        %v1399 = vunpack.c.l.b16 %v1240
        %v1400 = vunpack.c.h.b16 %v1240
        %v1401 = vunpack.c.l.b16 %v1241
        %v1402 = vunpack.c.h.b16 %v1241
        %v1403 = vunpack.c.l.b16 %v1242
        %v1404 = vunpack.c.h.b16 %v1242
        %v1405 = vunpack.c.l.b16 %v1243
        %v1406 = vunpack.c.h.b16 %v1243
        %v1407 = vunpack.c.l.b16 %v1244
        %v1408 = vunpack.c.h.b16 %v1244
        %v1409 = vunpack.c.l.b16 %v1245
        %v1410 = vunpack.c.h.b16 %v1245
        %v1411 = vunpack.c.l.b16 %v1246
        %v1412 = vunpack.c.h.b16 %v1246
        %v1413 = vunpack.c.l.b16 %v1247
        %v1414 = vunpack.c.h.b16 %v1247
        %v1415 = vunpack.c.l.b16 %v1248
        %v1416 = vunpack.c.h.b16 %v1248
        %v1417 = vunpack.c.l.b16 %v1249
        %v1418 = vunpack.c.h.b16 %v1249
        %v1419 = vunpack.c.l.b16 %v1250
        %v1420 = vunpack.c.h.b16 %v1250
        %v1421 = vunpack.c.l.b16 %v1251
        %v1422 = vunpack.c.h.b16 %v1251
        %v1423 = vunpack.c.l.b16 %v1252
        %v1424 = vunpack.c.h.b16 %v1252
        %v1425 = vpack.c.b16 %v1393, %v1389
        %v1426 = vpack.c.b16 %v1394, %v1390
        %v1427 = vpack.c.b16 %v1395, %v1391
        %v1428 = vpack.c.b16 %v1396, %v1392
        %v1429 = vpack.c.b16 %v1401, %v1397
        %v1430 = vpack.c.b16 %v1402, %v1398
        %v1431 = vpack.c.b16 %v1403, %v1399
        %v1432 = vpack.c.b16 %v1404, %v1400
        %v1433 = vpack.c.b16 %v1409, %v1405
        %v1434 = vpack.c.b16 %v1410, %v1406
        %v1435 = vpack.c.b16 %v1411, %v1407
        %v1436 = vpack.c.b16 %v1412, %v1408
        %v1437 = vpack.c.b16 %v1417, %v1413
        %v1438 = vpack.c.b16 %v1418, %v1414
        %v1439 = vpack.c.b16 %v1419, %v1415
        %v1440 = vpack.c.b16 %v1420, %v1416
        %v1441 = vpack.c.b16 %v1421, %v1421
        %v1442 = vpack.c.b16 %v1422, %v1422
        %v1443 = vpack.c.b16 %v1423, %v1423
        %v1444 = vpack.c.b16 %v1424, %v1424
        %1465 = vmatprep.subr.bf16.mxu0 %v1268
        %1466 = vmatpush1.bf16.msra.mxu0 %v1267
        %1467 = vmatprep.subr.bf16.mxu0 %v1266
        %1468 = vmatpush1.bf16.msra.mxu0 %v1265
        %1469 = vmatprep.subr.bf16.mxu0 %v1264
        %1470 = vmatpush1.bf16.msra.mxu0 %v1263
        %1471 = vmatprep.subr.bf16.mxu0 %v1262
        %1472 = vmatpush1.bf16.msra.mxu0 %v1261
        %1473 = vmatprep.subr.bf16.mxu0 %v1260
        %1474 = vmatpush1.bf16.msra.mxu0 %v1259
        %1475 = vmatprep.subr.bf16.mxu0 %v1258
        %1476 = vmatpush1.bf16.msra.mxu0 %v1257
        %1477 = vmatprep.subr.bf16.mxu0 %v1256
        %1478 = vmatpush1.bf16.msra.mxu0 %v1255
        %1479 = vmatprep.subr.bf16.mxu0 %v1254
        %1480 = vmatpush1.bf16.msra.mxu0 %v1253
        %1481 = vmatprep.subr.bf16.mxu0 %v1284
        %1482 = vmatpush2.bf16.msra.mxu0 %v1283
        %1483 = vmatprep.subr.bf16.mxu0 %v1282
        %1484 = vmatpush2.bf16.msra.mxu0 %v1281
        %1485 = vmatprep.subr.bf16.mxu0 %v1280
        %1486 = vmatpush2.bf16.msra.mxu0 %v1279
        %1487 = vmatprep.subr.bf16.mxu0 %v1278
        %1488 = vmatpush2.bf16.msra.mxu0 %v1277
        %1489 = vmatprep.subr.bf16.mxu0 %v1276
        %1490 = vmatpush2.bf16.msra.mxu0 %v1275
        %1491 = vmatprep.subr.bf16.mxu0 %v1274
        %1492 = vmatpush2.bf16.msra.mxu0 %v1273
        %1493 = vmatprep.subr.bf16.mxu0 %v1272
        %1494 = vmatpush2.bf16.msra.mxu0 %v1271
        %1495 = vmatprep.subr.bf16.mxu0 %v1270
        %1496 = vmatpush2.bf16.msra.mxu0 %v1269
        %1497 = vmatprep.mubr.bf16.mxu0 %v1426
        %1498 = vmatmul.mubr.bf16.gmra.mxu0 %v1425
        %v1499 = vpop.f32.mrf.mxu0
        %v1500 = vadd.f32 %v1329, %v1499
        %v1501 = vpop.f32.mrf.mxu0
        %v1502 = vadd.f32 %v1329, %v1501
        %v1503 = vpop.f32.mrf.mxu0
        %v1504 = vadd.f32 %v1334, %v1503
        %v1505 = vpop.f32.mrf.mxu0
        %v1506 = vadd.f32 %v1334, %v1505
        %1507 = vmatprep.mubr.bf16.mxu0 %v1430
        %1508 = vmatmul.mubr.bf16.gmra.mxu0 %v1429
        %v1509 = vpop.f32.mrf.mxu0
        %v1510 = vadd.f32 %v1339, %v1509
        %v1511 = vpop.f32.mrf.mxu0
        %v1512 = vadd.f32 %v1339, %v1511
        %v1513 = vpop.f32.mrf.mxu0
        %v1514 = vadd.f32 %v1344, %v1513
        %v1515 = vpop.f32.mrf.mxu0
        %v1516 = vadd.f32 %v1344, %v1515
        %1517 = vmatprep.mubr.bf16.mxu0 %v1434
        %1518 = vmatmul.mubr.bf16.gmra.mxu0 %v1433
        %v1519 = vpop.f32.mrf.mxu0
        %v1520 = vadd.f32 %v1349, %v1519
        %v1521 = vpop.f32.mrf.mxu0
        %v1522 = vadd.f32 %v1349, %v1521
        %v1523 = vpop.f32.mrf.mxu0
        %v1524 = vadd.f32 %v1354, %v1523
        %v1525 = vpop.f32.mrf.mxu0
        %v1526 = vadd.f32 %v1354, %v1525
        %1527 = vmatprep.mubr.bf16.mxu0 %v1438
        %1528 = vmatmul.mubr.bf16.gmra.mxu0 %v1437
        %v1529 = vpop.f32.mrf.mxu0
        %v1530 = vadd.f32 %v1359, %v1529
        %v1531 = vpop.f32.mrf.mxu0
        %v1532 = vadd.f32 %v1359, %v1531
        %v1533 = vpop.f32.mrf.mxu0
        %v1534 = vadd.f32 %v1364, %v1533
        %v1535 = vpop.f32.mrf.mxu0
        %v1536 = vadd.f32 %v1364, %v1535
        %1537 = vmatprep.mubr.bf16.mxu0 %v1442
        %1538 = vmatmul.mubr.bf16.gmra.mxu0 %v1441
        %v1539 = vpop.f32.mrf.mxu0
        %v1540 = vadd.f32 %v1369, %v1539
        %v1541 = vpop.f32.mrf.mxu0
        %v1542 = vadd.f32 %v1369, %v1541
        %v1543 = vpop.f32.mrf.mxu0
        %v1544 = vpop.f32.mrf.mxu0
        %1545 = vdwg.mxu0
        %1546 = vmatprep.subr.bf16.mxu0 %v1300
        %1547 = vmatpush1.bf16.msra.mxu0 %v1299
        %1548 = vmatprep.subr.bf16.mxu0 %v1298
        %1549 = vmatpush1.bf16.msra.mxu0 %v1297
        %1550 = vmatprep.subr.bf16.mxu0 %v1296
        %1551 = vmatpush1.bf16.msra.mxu0 %v1295
        %1552 = vmatprep.subr.bf16.mxu0 %v1294
        %1553 = vmatpush1.bf16.msra.mxu0 %v1293
        %1554 = vmatprep.subr.bf16.mxu0 %v1292
        %1555 = vmatpush1.bf16.msra.mxu0 %v1291
        %1556 = vmatprep.subr.bf16.mxu0 %v1290
        %1557 = vmatpush1.bf16.msra.mxu0 %v1289
        %1558 = vmatprep.subr.bf16.mxu0 %v1288
        %1559 = vmatpush1.bf16.msra.mxu0 %v1287
        %1560 = vmatprep.subr.bf16.mxu0 %v1286
        %1561 = vmatpush1.bf16.msra.mxu0 %v1285
        %1562 = vmatprep.subr.bf16.mxu0 %v1316
        %1563 = vmatpush2.bf16.msra.mxu0 %v1315
        %1564 = vmatprep.subr.bf16.mxu0 %v1314
        %1565 = vmatpush2.bf16.msra.mxu0 %v1313
        %1566 = vmatprep.subr.bf16.mxu0 %v1312
        %1567 = vmatpush2.bf16.msra.mxu0 %v1311
        %1568 = vmatprep.subr.bf16.mxu0 %v1310
        %1569 = vmatpush2.bf16.msra.mxu0 %v1309
        %1570 = vmatprep.subr.bf16.mxu0 %v1308
        %1571 = vmatpush2.bf16.msra.mxu0 %v1307
        %1572 = vmatprep.subr.bf16.mxu0 %v1306
        %1573 = vmatpush2.bf16.msra.mxu0 %v1305
        %1574 = vmatprep.subr.bf16.mxu0 %v1304
        %1575 = vmatpush2.bf16.msra.mxu0 %v1303
        %1576 = vmatprep.subr.bf16.mxu0 %v1302
        %1577 = vmatpush2.bf16.msra.mxu0 %v1301
        %1578 = vmatprep.mubr.bf16.mxu0 %v1428
        %1579 = vmatmul.mubr.bf16.gmra.mxu0 %v1427
        %v1580 = vpop.f32.mrf.mxu0
        %v1581 = vadd.f32 %v1500, %v1580
        %v1582 = vpop.f32.mrf.mxu0
        %v1583 = vadd.f32 %v1502, %v1582
        %v1584 = vpop.f32.mrf.mxu0
        %v1585 = vadd.f32 %v1504, %v1584
        %v1586 = vpop.f32.mrf.mxu0
        %v1587 = vadd.f32 %v1506, %v1586
        %1588 = vmatprep.mubr.bf16.mxu0 %v1432
        %1589 = vmatmul.mubr.bf16.gmra.mxu0 %v1431
        %v1590 = vpop.f32.mrf.mxu0
        %v1591 = vadd.f32 %v1510, %v1590
        %v1592 = vpop.f32.mrf.mxu0
        %v1593 = vadd.f32 %v1512, %v1592
        %v1594 = vpop.f32.mrf.mxu0
        %v1595 = vadd.f32 %v1514, %v1594
        %v1596 = vpop.f32.mrf.mxu0
        %v1597 = vadd.f32 %v1516, %v1596
        %1598 = vmatprep.mubr.bf16.mxu0 %v1436
        %1599 = vmatmul.mubr.bf16.gmra.mxu0 %v1435
        %v1600 = vpop.f32.mrf.mxu0
        %v1601 = vadd.f32 %v1520, %v1600
        %v1602 = vpop.f32.mrf.mxu0
        %v1603 = vadd.f32 %v1522, %v1602
        %v1604 = vpop.f32.mrf.mxu0
        %v1605 = vadd.f32 %v1524, %v1604
        %v1606 = vpop.f32.mrf.mxu0
        %v1607 = vadd.f32 %v1526, %v1606
        %1608 = vmatprep.mubr.bf16.mxu0 %v1440
        %1609 = vmatmul.mubr.bf16.gmra.mxu0 %v1439
        %v1610 = vpop.f32.mrf.mxu0
        %v1611 = vadd.f32 %v1530, %v1610
        %v1612 = vpop.f32.mrf.mxu0
        %v1613 = vadd.f32 %v1532, %v1612
        %v1614 = vpop.f32.mrf.mxu0
        %v1615 = vadd.f32 %v1534, %v1614
        %v1616 = vpop.f32.mrf.mxu0
        %v1617 = vadd.f32 %v1536, %v1616
        %1618 = vmatprep.mubr.bf16.mxu0 %v1444
        %1619 = vmatmul.mubr.bf16.gmra.mxu0 %v1443
        %v1620 = vpop.f32.mrf.mxu0
        %v1621 = vadd.f32 %v1540, %v1620
        %v1622 = vpop.f32.mrf.mxu0
        %v1623 = vadd.f32 %v1542, %v1622
        %v1624 = vpop.f32.mrf.mxu0
        %v1625 = vpop.f32.mrf.mxu0
        %1626 = vdwg.mxu0
        %v1627 = vmax.f32 %v1581, %v1591
        %v1628 = vmax.f32 %v1583, %v1593
        %v1629 = vmax.f32 %v1585, %v1595
        %v1630 = vmax.f32 %v1587, %v1597
        %v1631 = vsub.f32 %v1581, %v1627
        %v1632 = vsub.f32 %v1583, %v1628
        %v1633 = vsub.f32 %v1585, %v1629
        %v1634 = vsub.f32 %v1587, %v1630
        %v1635 = vmul.f32 %v1631, 1.442695
        %v1636 = vpow.pop %v1635
        %v1637 = vmul.f32 %v1632, 1.442695
        %v1638 = vpow.pop %v1637
        %v1639 = vmul.f32 %v1633, 1.442695
        %v1640 = vpow.pop %v1639
        %v1641 = vmul.f32 %v1634, 1.442695
        %v1642 = vpow.pop %v1641
        %v1643 = vsub.f32 %v1591, %v1627
        %v1644 = vsub.f32 %v1593, %v1628
        %v1645 = vsub.f32 %v1595, %v1629
        %v1646 = vsub.f32 %v1597, %v1630
        %v1647 = vmul.f32 %v1643, 1.442695
        %v1648 = vpow.pop %v1647
        %v1649 = vmul.f32 %v1644, 1.442695
        %v1650 = vpow.pop %v1649
        %v1651 = vmul.f32 %v1645, 1.442695
        %v1652 = vpow.pop %v1651
        %v1653 = vmul.f32 %v1646, 1.442695
        %v1654 = vpow.pop %v1653
        %v1655 = vadd.f32 %v1636, %v1648
        %v1656 = vadd.f32 %v1638, %v1650
        %v1657 = vadd.f32 %v1640, %v1652
        %v1658 = vadd.f32 %v1642, %v1654
        %v1659 = vrcp.pop %v1655
        %v1660 = vrcp.pop %v1656
        %v1661 = vrcp.pop %v1657
        %v1662 = vrcp.pop %v1658
        %1663 = vst [vmem:[%s276] sm:$0xff] %v1581
        %1664 = vst [vmem:[%s276 + $0x8] sm:$0xff] %v1583
        %1665 = vst [vmem:[%s276 + $0x10] sm:$0xff] %v1585
        %1666 = vst [vmem:[%s276 + $0x18] sm:$0xff] %v1587
        %1667 = vst [vmem:[%s276 + $0x20] sm:$0xff] %v1591
        %1668 = vst [vmem:[%s276 + $0x28] sm:$0xff] %v1593
        %1669 = vst [vmem:[%s276 + $0x30] sm:$0xff] %v1595
        %1670 = vst [vmem:[%s276 + $0x38] sm:$0xff] %v1597
        %v1671 = vmul.f32 %v1636, %v1659
        %v1672 = vmul.f32 %v1638, %v1660
        %v1673 = vmul.f32 %v1640, %v1661
        %v1674 = vmul.f32 %v1642, %v1662
        %1675 = vst [vmem:[%s283] sm:$0xff] %v1671
        %1676 = vst [vmem:[%s283 + $0x8] sm:$0xff] %v1672
        %1677 = vst [vmem:[%s283 + $0x10] sm:$0xff] %v1673
        %1678 = vst [vmem:[%s283 + $0x18] sm:$0xff] %v1674
        %v1679 = vmul.f32 %v1648, %v1659
        %v1680 = vmul.f32 %v1650, %v1660
        %v1681 = vmul.f32 %v1652, %v1661
        %v1682 = vmul.f32 %v1654, %v1662
        %1683 = vst [vmem:[%s283 + $0x20] sm:$0xff] %v1679
        %1684 = vst [vmem:[%s283 + $0x28] sm:$0xff] %v1680
        %1685 = vst [vmem:[%s283 + $0x30] sm:$0xff] %v1681
        %1686 = vst [vmem:[%s283 + $0x38] sm:$0xff] %v1682
        %1687 = vst [vmem:[%s290] sm:$0xff] %v1601
        %1688 = vst [vmem:[%s290 + $0x8] sm:$0xff] %v1603
        %1689 = vst [vmem:[%s290 + $0x10] sm:$0xff] %v1605
        %1690 = vst [vmem:[%s290 + $0x18] sm:$0xff] %v1607
        %1691 = vst [vmem:[%s290 + $0x20] sm:$0xff] %v1611
        %1692 = vst [vmem:[%s290 + $0x28] sm:$0xff] %v1613
        %1693 = vst [vmem:[%s290 + $0x30] sm:$0xff] %v1615
        %1694 = vst [vmem:[%s290 + $0x38] sm:$0xff] %v1617
        %1695 = vst [vmem:[%s290 + $0x40] sm:$0xff] %v1621
        %1696 = vst [vmem:[%s290 + $0x48] sm:$0xff] %v1623
        %s1697 = sand.u32 %s137, 1
        %s1698 = scalar_lea.sflag [#allocation3], %s1697
        %s1699 = sand.u32 %s137, 1
        %s1700 = smul.addr %s1699, 64
        %s1701 = scalar_lea.vmem [#allocation2], %s1700
        %s1702 = sand.u32 %s24, 1
        %s1703 = scalar_lea.sflag [#allocation5], %s1702
        %s1704 = sand.u32 %s165, 1
        %s1705 = smul.addr %s1704, 64
        %s1706 = scalar_lea.vmem [#allocation4], %s1705
        %s1707 = sand.u32 %s24, 1
        %s1708 = scalar_lea.sflag [#allocation5], %s1707
        %s1709 = sand.u32 %s193, 1
        %s1710 = smul.addr %s1709, 80
        %s1711 = scalar_lea.vmem [#allocation6], %s1710
        // Predicated region
        $region37: #{tpu_custom_call.1} parent=35 // pred_check
          %p1712 = pneg %p147
        $region38: #{tpu_custom_call.1} parent=35 // pred_check_branch
          %1714 = sbr.rel (%p1712) target = $region40
        $region39: #{tpu_custom_call.1} parent=35 // pred_region
          %s1715 = smul.u32 2, %s29
          %s1717 = ssub.s32 1024, 1024
          %1718 = vsyncadd %s1698, %s1717
          %s1719 = smul.addr %s28, 16
          %s1720 = sadd.s32 %s1715, %s1719
          %s1721 = smul.addr %s1720, 128
          %s1722 = scalar_lea.hbm %s4, %s1721
          %s1723 = sshll.u32 %s1701, 4
          %s1724 = int_to_ptr.vmem [resolvable:$true] %s1723
          %1729 = dma.vmem_to_hbm [thread:$0]  %s1724, 1024, %s1722, %s1698, 256, 512, 16
        $region40: #{tpu_custom_call.1} parent=35 // pred_fallthru
          _
        // Predicated region
        $region41: #{tpu_custom_call.1} parent=35 // pred_check
          %p1730 = pneg %p175
        $region42: #{tpu_custom_call.1} parent=35 // pred_check_branch
          %1732 = sbr.rel (%p1730) target = $region44
        $region43: #{tpu_custom_call.1} parent=35 // pred_region
          %s1733 = smul.u32 2, %s29
          %s1735 = ssub.s32 1024, 1024
          %1736 = vsyncadd %s1703, %s1735
          %s1737 = smul.addr %s28, 16
          %s1738 = sadd.s32 %s1733, %s1737
          %s1739 = smul.addr %s1738, 128
          %s1740 = scalar_lea.hbm %s5, %s1739
          %s1741 = sshll.u32 %s1706, 4
          %s1742 = int_to_ptr.vmem [resolvable:$true] %s1741
          %1747 = dma.vmem_to_hbm [thread:$0]  %s1742, 1024, %s1740, %s1703, 256, 512, 16
        $region44: #{tpu_custom_call.1} parent=35 // pred_fallthru
          _
        // Predicated region
        $region45: #{tpu_custom_call.1} parent=35 // pred_check
          %p1748 = pneg %p203
        $region46: #{tpu_custom_call.1} parent=35 // pred_check_branch
          %1750 = sbr.rel (%p1748) target = $region48
        $region47: #{tpu_custom_call.1} parent=35 // pred_region
          %s1751 = smul.u32 2, %s29
          %s1753 = ssub.s32 1280, 1280
          %1754 = vsyncadd %s1708, %s1753
          %s1755 = smul.addr %s28, 20
          %s1756 = sadd.s32 %s1751, %s1755
          %s1757 = smul.addr %s1756, 128
          %s1758 = scalar_lea.hbm %s6, %s1757
          %s1759 = sshll.u32 %s1711, 4
          %s1760 = int_to_ptr.vmem [resolvable:$true] %s1759
          %1765 = dma.vmem_to_hbm [thread:$0]  %s1760, 1280, %s1758, %s1708, 256, 512, 16
        $region48: #{tpu_custom_call.1} parent=35 // pred_fallthru
          _
      $region36: #{tpu_custom_call.1} parent=5 // pred_fallthru
        _
      %p1766 = scmp.le.s32.totalorder 2, %s19
      // Predicated region
      $region49: #{tpu_custom_call.1} parent=5 // pred_check
        %p1767 = pneg %p1766
      $region50: #{tpu_custom_call.1} parent=5 // pred_check_branch
        %1769 = sbr.rel (%p1767) target = $region52
      $region51: #{tpu_custom_call.1} parent=5 // pred_region
        %s1770 = ssub.s32 %s19, 2
        // Predicated region
        $region53: #{tpu_custom_call.1} parent=51 // pred_check
          %p1771 = pneg %p153
        $region54: #{tpu_custom_call.1} parent=51 // pred_check_branch
          %1773 = sbr.rel (%p1771) target = $region56
        $region55: #{tpu_custom_call.1} parent=51 // pred_region
          %s1774 = sand.u32 %s138, 1
          %s1775 = scalar_lea.sflag [#allocation3], %s1774
          %s1776 = sand.u32 %s138, 1
          %s1777 = smul.addr %s1776, 64
          %s1778 = scalar_lea.vmem [#allocation2], %s1777
          %1779 = dma.done %s1775, 1024
        $region56: #{tpu_custom_call.1} parent=51 // pred_fallthru
          _
        // Predicated region
        $region57: #{tpu_custom_call.1} parent=51 // pred_check
          %p1780 = pneg %p181
        $region58: #{tpu_custom_call.1} parent=51 // pred_check_branch
          %1782 = sbr.rel (%p1780) target = $region60
        $region59: #{tpu_custom_call.1} parent=51 // pred_region
          %s1783 = sand.u32 %s25, 1
          %s1784 = scalar_lea.sflag [#allocation5], %s1783
          %s1785 = sand.u32 %s166, 1
          %s1786 = smul.addr %s1785, 64
          %s1787 = scalar_lea.vmem [#allocation4], %s1786
          %1788 = dma.done %s1784, 1024
        $region60: #{tpu_custom_call.1} parent=51 // pred_fallthru
          _
        // Predicated region
        $region61: #{tpu_custom_call.1} parent=51 // pred_check
          %p1789 = pneg %p209
        $region62: #{tpu_custom_call.1} parent=51 // pred_check_branch
          %1791 = sbr.rel (%p1789) target = $region64
        $region63: #{tpu_custom_call.1} parent=51 // pred_region
          %s1792 = sand.u32 %s25, 1
          %s1793 = scalar_lea.sflag [#allocation5], %s1792
          %s1794 = sand.u32 %s194, 1
          %s1795 = smul.addr %s1794, 80
          %s1796 = scalar_lea.vmem [#allocation6], %s1795
          %1797 = dma.done %s1793, 1280
        $region64: #{tpu_custom_call.1} parent=51 // pred_fallthru
          _
      $region52: #{tpu_custom_call.1} parent=5 // pred_fallthru
        _
    $region6: #{tpu_custom_call.1} parent=1 // loop_footer
      %s23 = sadd.s32 1, %s19
    $region7: #{tpu_custom_call.1} parent=1 // loop_footer_branch
      %18 = sbr.rel target = $region3
    $region8: #{tpu_custom_call.1} parent=1 // loop_exit
      _
    %1798 = vsyncpa [#allocation3], 1
    %s1799 = scalar_lea.sflag [#allocation3], 1
    %1800 = vsyncpa %s1799, 1
    %1801 = vsyncpa [#allocation5], 1
    %s1802 = scalar_lea.sflag [#allocation5], 1
    %1803 = vsyncpa %s1802, 1

// kernel: tpu_custom_call.1
$region0: #{tpu_custom_call.1}
  #allocation0 [shape = 'u32[]', space=smem, size = 0x4, offset = 0x4, fixed_abs, tag = 'smem constant byte address 0x4 - core index']
  #allocation1 [shape = 'u32[144,128]{1,0:T(1,128)}', space=vmem, size = 0x12000, scoped, tag = 'internal scratch']
  %s0 = inlined_call_operand.vmem [shape: bf16[2,2,8,294], index: 0, kind: input, shape index: {}]
  %s1 = inlined_call_operand.vmem [shape: bf16[512,80], index: 1, kind: input, shape index: {}]
  %s2 = inlined_call_operand.vmem [shape: bf16[72,512], index: 2, kind: input, shape index: {}]
  %s3 = inlined_call_operand.vmem [shape: f32[72,1], index: 3, kind: input, shape index: {}]
  %s4 = inlined_call_operand.hbm [shape: f32[2,32,512], index: 4, kind: output, shape index: {0}]
  %s5 = inlined_call_operand.hbm [shape: f32[2,32,512], index: 5, kind: output, shape index: {1}]
  %s6 = inlined_call_operand.hbm [shape: f32[2,40,512], index: 6, kind: output, shape index: {2}]
  %7 = xla_tuple %s4, %s5, %s6
  %s8 = sld [smem:[#allocation0]]
  $region65: #{tpu_custom_call.1} parent=0
    _
  %s10 = ssub.s32 1, %s8
  %s11 = scalar_select 0, %s10, %s8
  $region1: #{tpu_custom_call.1} parent=0
    #allocation2 [shape = 'u8[65536]{0}', space=vmem, size = 0x10000, scoped, tag = 'output window, operand 0']
    #allocation3 [shape = 's32[2]{0}', space=sflag, size = 0x8, scoped, tag = 'scoped memory for tpu_custom_call.1']
    #allocation4 [shape = 'u8[65536]{0}', space=vmem, size = 0x10000, scoped, tag = 'output window, operand 1']
    #allocation5 [shape = 's32[2]{0}', space=sflag, size = 0x8, scoped, tag = 'scoped memory for tpu_custom_call.1']
    #allocation6 [shape = 'u8[81920]{0}', space=vmem, size = 0x14000, scoped, tag = 'output window, operand 2']
    %12 = vsyncpa [#allocation3], 0
    %s13 = scalar_lea.sflag [#allocation3], 1
    %14 = vsyncpa %s13, 0
    %15 = vsyncpa [#allocation5], 0
    %s16 = scalar_lea.sflag [#allocation5], 1
    %17 = vsyncpa %s16, 0
    loop: start=0, step=1, limit=6
    $region2: #{tpu_custom_call.1} parent=1 // loop_pre_header
      _
    $region3: #{tpu_custom_call.1} parent=1 // loop_header
      %s19 = sphi 0, %s23
      %p20 = scmp.ge.s32.totalorder %s19, 6
      %s26 = sphi 0, %s38
      %s27 = sphi 0, %s34
      %s28 = sphi 0, %s26
      %s29 = sphi 0, %s27
      %s30 = sphi 0, %s28
      %s31 = sphi 0, %s29
      %s43 = sphi 0, %s45
      %s46 = sphi 0, %s43
      %s47 = sphi 0, %s46
      %s63 = sphi 0, %s47
      %s67 = sphi 0, %s67
      %s69 = sphi 0, %s67
      %s70 = sphi 0, %s69
      %s84 = sphi 0, %s70
      %s88 = sphi 0, %s88
      %s90 = sphi 0, %s88
      %s91 = sphi 0, %s90
      %s105 = sphi 0, %s91
      %s109 = sphi 0, %s109
      %s111 = sphi 0, %s109
      %s112 = sphi 0, %s111
      %s126 = sphi 0, %s112
      %s134 = sphi 0, %s136
      %s137 = sphi 0, %s134
      %s138 = sphi 0, %s137
      %s154 = sphi 0, %s138
      %s162 = sphi 0, %s164
      %s165 = sphi 0, %s162
      %s166 = sphi 0, %s165
      %s182 = sphi 0, %s166
      %s190 = sphi 0, %s192
      %s193 = sphi 0, %s190
      %s194 = sphi 0, %s193
      %s210 = sphi 0, %s194
    $region4: #{tpu_custom_call.1} parent=1 // loop_header_branch
      %22 = sbr.rel (%p20) target = $region8
    $region5: #{tpu_custom_call.1} parent=1 // loop_body
      %s24 = ssub.s32 %s19, 1
      %s25 = ssub.s32 %s19, 2
      %s32 = sadd.s32 1, %s27
      %p33 = scmp.ge.s32.totalorder %s32, 2
      %s34 = scalar_select %p33, 0, %s32
      %s35 = sadd.s32 1, %s26
      %s36 = scalar_select %p33, %s35, %s26
      %p37 = scmp.ge.s32.totalorder %s36, 2
      %s38 = scalar_select %p37, 0, %s36
      %s39 = ssub.s32 %s26, %s38
      %s40 = ssub.s32 %s27, %s34
      %s41 = sor.u32 %s39, %s40
      %p42 = scmp.eq.s32.totalorder %s41, 0
      %s44 = sadd.s32 %s43, 1
      %s45 = scalar_select %p42, %s43, %s44
      %p48 = pneg %p42
      %p49 = scmp.eq.s32.totalorder %s19, 3
      %p50 = por %p48, %p49
      %p51 = scmp.ne.s32.totalorder %s43, %s46
      %p52 = scmp.eq.s32.totalorder %s19, 0
      %p53 = por %p51, %p52
      %p54 = scmp.ne.s32.totalorder %s43, %s46
      %p55 = scmp.eq.s32.totalorder %s24, 3
      %p56 = por %p54, %p55
      %p57 = scmp.ne.s32.totalorder %s46, %s47
      %p58 = scmp.eq.s32.totalorder %s24, 0
      %p59 = por %p57, %p58
      %p60 = scmp.ne.s32.totalorder %s46, %s47
      %p61 = scmp.eq.s32.totalorder %s25, 3
      %p62 = por %p60, %p61
      %p64 = scmp.ne.s32.totalorder %s47, %s63
      %p65 = scmp.eq.s32.totalorder %s25, 0
      %p66 = por %p64, %p65
      %s68 = sadd.s32 %s67, 1
      %p71 = scmp.eq.s32.totalorder %s19, 3
      %p72 = scmp.ne.s32.totalorder %s67, %s69
      %p73 = scmp.eq.s32.totalorder %s19, 0
      %p74 = por %p72, %p73
      %p75 = scmp.ne.s32.totalorder %s67, %s69
      %p76 = scmp.eq.s32.totalorder %s24, 3
      %p77 = por %p75, %p76
      %p78 = scmp.ne.s32.totalorder %s69, %s70
      %p79 = scmp.eq.s32.totalorder %s24, 0
      %p80 = por %p78, %p79
      %p81 = scmp.ne.s32.totalorder %s69, %s70
      %p82 = scmp.eq.s32.totalorder %s25, 3
      %p83 = por %p81, %p82
      %p85 = scmp.ne.s32.totalorder %s70, %s84
      %p86 = scmp.eq.s32.totalorder %s25, 0
      %p87 = por %p85, %p86
      %s89 = sadd.s32 %s88, 1
      %p92 = scmp.eq.s32.totalorder %s19, 3
      %p93 = scmp.ne.s32.totalorder %s88, %s90
      %p94 = scmp.eq.s32.totalorder %s19, 0
      %p95 = por %p93, %p94
      %p96 = scmp.ne.s32.totalorder %s88, %s90
      %p97 = scmp.eq.s32.totalorder %s24, 3
      %p98 = por %p96, %p97
      %p99 = scmp.ne.s32.totalorder %s90, %s91
      %p100 = scmp.eq.s32.totalorder %s24, 0
      %p101 = por %p99, %p100
      %p102 = scmp.ne.s32.totalorder %s90, %s91
      %p103 = scmp.eq.s32.totalorder %s25, 3
      %p104 = por %p102, %p103
      %p106 = scmp.ne.s32.totalorder %s91, %s105
      %p107 = scmp.eq.s32.totalorder %s25, 0
      %p108 = por %p106, %p107
      %s110 = sadd.s32 %s109, 1
      %p113 = scmp.eq.s32.totalorder %s19, 3
      %p114 = scmp.ne.s32.totalorder %s109, %s111
      %p115 = scmp.eq.s32.totalorder %s19, 0
      %p116 = por %p114, %p115
      %p117 = scmp.ne.s32.totalorder %s109, %s111
      %p118 = scmp.eq.s32.totalorder %s24, 3
      %p119 = por %p117, %p118
      %p120 = scmp.ne.s32.totalorder %s111, %s112
      %p121 = scmp.eq.s32.totalorder %s24, 0
      %p122 = por %p120, %p121
      %p123 = scmp.ne.s32.totalorder %s111, %s112
      %p124 = scmp.eq.s32.totalorder %s25, 3
      %p125 = por %p123, %p124
      %p127 = scmp.ne.s32.totalorder %s112, %s126
      %p128 = scmp.eq.s32.totalorder %s25, 0
      %p129 = por %p127, %p128
      %s130 = ssub.s32 %s26, %s38
      %s131 = ssub.s32 %s27, %s34
      %s132 = sor.u32 %s130, %s131
      %p133 = scmp.eq.s32.totalorder %s132, 0
      %s135 = sadd.s32 %s134, 1
      %s136 = scalar_select %p133, %s134, %s135
      %p139 = pneg %p133
      %p140 = scmp.eq.s32.totalorder %s19, 3
      %p141 = por %p139, %p140
      %p142 = scmp.ne.s32.totalorder %s134, %s137
      %p143 = scmp.eq.s32.totalorder %s19, 0
      %p144 = por %p142, %p143
      %p145 = scmp.ne.s32.totalorder %s134, %s137
      %p146 = scmp.eq.s32.totalorder %s24, 3
      %p147 = por %p145, %p146
      %p148 = scmp.ne.s32.totalorder %s137, %s138
      %p149 = scmp.eq.s32.totalorder %s24, 0
      %p150 = por %p148, %p149
      %p151 = scmp.ne.s32.totalorder %s137, %s138
      %p152 = scmp.eq.s32.totalorder %s25, 3
      %p153 = por %p151, %p152
      %p155 = scmp.ne.s32.totalorder %s138, %s154
      %p156 = scmp.eq.s32.totalorder %s25, 0
      %p157 = por %p155, %p156
      %s158 = ssub.s32 %s26, %s38
      %s159 = ssub.s32 %s27, %s34
      %s160 = sor.u32 %s158, %s159
      %p161 = scmp.eq.s32.totalorder %s160, 0
      %s163 = sadd.s32 %s162, 1
      %s164 = scalar_select %p161, %s162, %s163
      %p167 = pneg %p161
      %p168 = scmp.eq.s32.totalorder %s19, 3
      %p169 = por %p167, %p168
      %p170 = scmp.ne.s32.totalorder %s162, %s165
      %p171 = scmp.eq.s32.totalorder %s19, 0
      %p172 = por %p170, %p171
      %p173 = scmp.ne.s32.totalorder %s162, %s165
      %p174 = scmp.eq.s32.totalorder %s24, 3
      %p175 = por %p173, %p174
      %p176 = scmp.ne.s32.totalorder %s165, %s166
      %p177 = scmp.eq.s32.totalorder %s24, 0
      %p178 = por %p176, %p177
      %p179 = scmp.ne.s32.totalorder %s165, %s166
      %p180 = scmp.eq.s32.totalorder %s25, 3
      %p181 = por %p179, %p180
      %p183 = scmp.ne.s32.totalorder %s166, %s182
      %p184 = scmp.eq.s32.totalorder %s25, 0
      %p185 = por %p183, %p184
      %s186 = ssub.s32 %s26, %s38
      %s187 = ssub.s32 %s27, %s34
      %s188 = sor.u32 %s186, %s187
      %p189 = scmp.eq.s32.totalorder %s188, 0
      %s191 = sadd.s32 %s190, 1
      %s192 = scalar_select %p189, %s190, %s191
      %p195 = pneg %p189
      %p196 = scmp.eq.s32.totalorder %s19, 3
      %p197 = por %p195, %p196
      %p198 = scmp.ne.s32.totalorder %s190, %s193
      %p199 = scmp.eq.s32.totalorder %s19, 0
      %p200 = por %p198, %p199
      %p201 = scmp.ne.s32.totalorder %s190, %s193
      %p202 = scmp.eq.s32.totalorder %s24, 3
      %p203 = por %p201, %p202
      %p204 = scmp.ne.s32.totalorder %s193, %s194
      %p205 = scmp.eq.s32.totalorder %s24, 0
      %p206 = por %p204, %p205
      %p207 = scmp.ne.s32.totalorder %s193, %s194
      %p208 = scmp.eq.s32.totalorder %s25, 3
      %p209 = por %p207, %p208
      %p211 = scmp.ne.s32.totalorder %s194, %s210
      %p212 = scmp.eq.s32.totalorder %s25, 0
      %p213 = por %p211, %p212
      %p214 = scmp.le.s32.totalorder 1, %s19
      %p215 = scmp.lt.s32.totalorder %s19, 5
      %p216 = pnand %p214, %p215
      %p217 = pneg %p216
      // Predicated region
      $region9: #{tpu_custom_call.1} parent=5 // pred_check
        _
      $region10: #{tpu_custom_call.1} parent=5 // pred_check_branch
        %219 = sbr.rel (%p216) target = $region12
      $region11: #{tpu_custom_call.1} parent=5 // pred_region
        %s220 = ssub.s32 %s19, 1
        // Predicated region
        $region13: #{tpu_custom_call.1} parent=11 // pred_check
          %p221 = pneg %p80
        $region14: #{tpu_custom_call.1} parent=11 // pred_check_branch
          %223 = sbr.rel (%p221) target = $region16
        $region15: #{tpu_custom_call.1} parent=11 // pred_region
          _
        $region16: #{tpu_custom_call.1} parent=11 // pred_fallthru
          _
        // Predicated region
        $region17: #{tpu_custom_call.1} parent=11 // pred_check
          %p224 = pneg %p101
        $region18: #{tpu_custom_call.1} parent=11 // pred_check_branch
          %226 = sbr.rel (%p224) target = $region20
        $region19: #{tpu_custom_call.1} parent=11 // pred_region
          _
        $region20: #{tpu_custom_call.1} parent=11 // pred_fallthru
          _
        // Predicated region
        $region21: #{tpu_custom_call.1} parent=11 // pred_check
          %p227 = pneg %p122
        $region22: #{tpu_custom_call.1} parent=11 // pred_check_branch
          %229 = sbr.rel (%p227) target = $region24
        $region23: #{tpu_custom_call.1} parent=11 // pred_region
          _
        $region24: #{tpu_custom_call.1} parent=11 // pred_fallthru
          _
      $region12: #{tpu_custom_call.1} parent=5 // pred_fallthru
        _
      %p230 = scmp.lt.s32.totalorder %s19, 4
      // Predicated region
      $region25: #{tpu_custom_call.1} parent=5 // pred_check
        %p231 = pneg %p230
      $region26: #{tpu_custom_call.1} parent=5 // pred_check_branch
        %233 = sbr.rel (%p231) target = $region28
      $region27: #{tpu_custom_call.1} parent=5 // pred_region
        // Predicated region
        $region29: #{tpu_custom_call.1} parent=27 // pred_check
          %p234 = pneg %p53
        $region30: #{tpu_custom_call.1} parent=27 // pred_check_branch
          %236 = sbr.rel (%p234) target = $region32
        $region31: #{tpu_custom_call.1} parent=27 // pred_region
          %p237 = scmp.lt.s32.totalorder %s26, 1
          %s238 = scalar_select %p237, %s26, 1
          %p239 = scmp.lt.s32.totalorder %s27, 1
          %s240 = scalar_select %p239, %s27, 1
          %s241 = smul.addr %s240, 3
          %s242 = smul.addr %s238, 6
          %s243 = sadd.s32 %s241, %s242
          %s244 = smul.addr %s243, 4
          %s245 = scalar_lea.vmem %s0, %s244
        $region32: #{tpu_custom_call.1} parent=27 // pred_fallthru
          _
      $region28: #{tpu_custom_call.1} parent=5 // pred_fallthru
        _
      %p246 = scmp.le.s32.totalorder 1, %s19
      %p247 = scmp.lt.s32.totalorder %s19, 5
      %p248 = pnand %p246, %p247
      %p249 = pneg %p248
      // Predicated region
      $region33: #{tpu_custom_call.1} parent=5 // pred_check
        _
      $region34: #{tpu_custom_call.1} parent=5 // pred_check_branch
        %251 = sbr.rel (%p248) target = $region36
      $region35: #{tpu_custom_call.1} parent=5 // pred_region
        %s252 = ssub.s32 %s19, 1
        %p253 = scmp.lt.s32.totalorder %s28, 1
        %s254 = scalar_select %p253, %s28, 1
        %p255 = scmp.lt.s32.totalorder %s29, 1
        %s256 = scalar_select %p255, %s29, 1
        %s257 = smul.addr %s256, 3
        %s258 = smul.addr %s254, 6
        %s259 = sadd.s32 %s257, %s258
        %s260 = smul.addr %s259, 4
        %s261 = scalar_lea.vmem %s0, %s260
        %p262 = pneg %p59
        %p263 = pneg %p56
        %p264 = pneg %p80
        %p265 = pneg %p77
        %p266 = pneg %p101
        %p267 = pneg %p98
        %p268 = pneg %p122
        %p269 = pneg %p119
        %p270 = pneg %p150
        %p271 = pneg %p147
        %s272 = sand.u32 %s137, 1
        %s273 = scalar_lea.sflag [#allocation3], %s272
        %s274 = sand.u32 %s137, 1
        %s275 = smul.addr %s274, 64
        %s276 = scalar_lea.vmem [#allocation2], %s275
        %p277 = pneg %p178
        %p278 = pneg %p175
        %s279 = sand.u32 %s24, 1
        %s280 = scalar_lea.sflag [#allocation5], %s279
        %s281 = sand.u32 %s165, 1
        %s282 = smul.addr %s281, 64
        %s283 = scalar_lea.vmem [#allocation4], %s282
        %p284 = pneg %p206
        %p285 = pneg %p203
        %s286 = sand.u32 %s24, 1
        %s287 = scalar_lea.sflag [#allocation5], %s286
        %s288 = sand.u32 %s193, 1
        %s289 = smul.addr %s288, 80
        %s290 = scalar_lea.vmem [#allocation6], %s289
        %p291 = scmp.lt.s32.totalorder %s28, 1
        %s292 = scalar_select %p291, %s28, 1
        %p293 = scmp.lt.s32.totalorder %s29, 1
        %s294 = scalar_select %p293, %s29, 1
        %s295 = smul.addr %s294, 3
        %s296 = smul.addr %s292, 6
        %s297 = sadd.s32 %s295, %s296
        %s298 = smul.addr %s297, 4
        %s299 = scalar_lea.vmem %s0, %s298
        %s300 = smul.u32 2, %s29
        %s301 = smul.u32 2, %s29
        %s302 = smul.u32 2, %s29
        %v304 = vld [vmem:[%s299] sm:$0xff]
        %v305 = vld [vmem:[%s299 + $0x8] sm:$0xf]
        %v306 = vlaneseq
        %v307 = vshrl.u32 %v306, 7
        %vm308 = vcmp.eq.s32.totalorder %v307, 0
        %v309 = vsel %vm308, 1.0, 0.0
        %v310 = vpack.c.bf16 %v309, %v309
        %v312 = vunpack.c.l.b16 %v304
        %v313 = vunpack.c.h.b16 %v304
        %v314 = vpack.c.b16 %v312, %v312
        %v315 = vpack.c.b16 %v313, %v313
        %v317 = vunpack.c.l.b16 %v305
        %v318 = vpack.c.b16 %v317, %v317
        %319 = vrot.lane.b32.xlu0 %v314, 127
        %v320 = vpop.permute.xlu0 %319
        %321 = vrot.lane.b32.xlu0 %v315, 127
        %v322 = vpop.permute.xlu0 %321
        %323 = vrot.lane.b32.xlu0 %v318, 127
        %v324 = vpop.permute.xlu0 %323
        %vm325 = vcmask 1039360
        %v326 = vsel %vm325, %v320, %v322
        %v327 = vsel %vm325, %v322, %v324
        %328 = vrot.lane.b32.xlu0 %v314, 126
        %v329 = vpop.permute.xlu0 %328
        %330 = vrot.lane.b32.xlu0 %v315, 126
        %v331 = vpop.permute.xlu0 %330
        %332 = vrot.lane.b32.xlu0 %v318, 126
        %v333 = vpop.permute.xlu0 %332
        %vm334 = vcmask 1031168
        %v335 = vsel %vm334, %v329, %v331
        %v336 = vsel %vm334, %v331, %v333
        %337 = vrot.lane.b32.xlu0 %v314, 110
        %v338 = vpop.permute.xlu0 %337
        %339 = vrot.lane.b32.xlu0 %v315, 110
        %v340 = vpop.permute.xlu0 %339
        %341 = vrot.lane.b32.xlu0 %v318, 110
        %v342 = vpop.permute.xlu0 %341
        %vm343 = vcmask 900096
        %v344 = vsel %vm343, %v338, %v340
        %v345 = vsel %vm343, %v340, %v342
        %346 = vrot.lane.b32.xlu0 %v314, 109
        %v347 = vpop.permute.xlu0 %346
        %348 = vrot.lane.b32.xlu0 %v315, 109
        %v349 = vpop.permute.xlu0 %348
        %350 = vrot.lane.b32.xlu0 %v318, 109
        %v351 = vpop.permute.xlu0 %350
        %vm352 = vcmask 891904
        %v353 = vsel %vm352, %v347, %v349
        %v354 = vsel %vm352, %v349, %v351
        %355 = vrot.lane.b32.xlu0 %v314, 108
        %v356 = vpop.permute.xlu0 %355
        %357 = vrot.lane.b32.xlu0 %v315, 108
        %v358 = vpop.permute.xlu0 %357
        %359 = vrot.lane.b32.xlu0 %v318, 108
        %v360 = vpop.permute.xlu0 %359
        %vm361 = vcmask 883712
        %v362 = vsel %vm361, %v356, %v358
        %v363 = vsel %vm361, %v358, %v360
        %364 = vrot.lane.b32.xlu0 %v314, 92
        %v365 = vpop.permute.xlu0 %364
        %366 = vrot.lane.b32.xlu0 %v315, 92
        %v367 = vpop.permute.xlu0 %366
        %368 = vrot.lane.b32.xlu0 %v318, 92
        %v369 = vpop.permute.xlu0 %368
        %vm370 = vcmask 752640
        %v371 = vsel %vm370, %v365, %v367
        %v372 = vsel %vm370, %v367, %v369
        %373 = vrot.lane.b32.xlu0 %v314, 91
        %v374 = vpop.permute.xlu0 %373
        %375 = vrot.lane.b32.xlu0 %v315, 91
        %v376 = vpop.permute.xlu0 %375
        %377 = vrot.lane.b32.xlu0 %v318, 91
        %v378 = vpop.permute.xlu0 %377
        %vm379 = vcmask 744448
        %v380 = vsel %vm379, %v374, %v376
        %v381 = vsel %vm379, %v376, %v378
        %382 = vrot.lane.b32.xlu0 %v314, 90
        %v383 = vpop.permute.xlu0 %382
        %384 = vrot.lane.b32.xlu0 %v315, 90
        %v385 = vpop.permute.xlu0 %384
        %386 = vrot.lane.b32.xlu0 %v318, 90
        %v387 = vpop.permute.xlu0 %386
        %vm388 = vcmask 736256
        %v389 = vsel %vm388, %v383, %v385
        %v390 = vsel %vm388, %v385, %v387
        %v392 = vrot.slane %v310, 4
        %vm393 = vcmask 1043456
        %v396 = vsel %vm393, %v314, %v326
        %v400 = vsel %vm393, %v315, %v327
        %v404 = vsel %vm393, %v335, %v344
        %v408 = vsel %vm393, %v336, %v345
        %v412 = vsel %vm393, %v353, %v362
        %v416 = vsel %vm393, %v354, %v363
        %v420 = vsel %vm393, %v371, %v380
        %v424 = vsel %vm393, %v372, %v381
        %v428 = vsel %vm393, %v389, %v392
        %v431 = vsel %vm393, %v390, %v392
        %v433 = vld [vmem:[%s1] sm:$0xf]
        %v434 = vld [vmem:[%s1 + $0x4] sm:$0xf]
        %v435 = vld [vmem:[%s1 + $0x8] sm:$0xf]
        %v436 = vld [vmem:[%s1 + $0xc] sm:$0xf]
        %v437 = vld [vmem:[%s1 + $0x10] sm:$0xf]
        %v438 = vld [vmem:[%s1 + $0x14] sm:$0xf]
        %v439 = vld [vmem:[%s1 + $0x18] sm:$0xf]
        %v440 = vld [vmem:[%s1 + $0x1c] sm:$0xf]
        %v441 = vld [vmem:[%s1 + $0x20] sm:$0xf]
        %v442 = vld [vmem:[%s1 + $0x24] sm:$0xf]
        %v443 = vld [vmem:[%s1 + $0x28] sm:$0xf]
        %v444 = vld [vmem:[%s1 + $0x2c] sm:$0xf]
        %v445 = vld [vmem:[%s1 + $0x30] sm:$0xf]
        %v446 = vld [vmem:[%s1 + $0x34] sm:$0xf]
        %v447 = vld [vmem:[%s1 + $0x38] sm:$0xf]
        %v448 = vld [vmem:[%s1 + $0x3c] sm:$0xf]
        %v449 = vld [vmem:[%s1 + $0x40] sm:$0xf]
        %v450 = vld [vmem:[%s1 + $0x44] sm:$0xf]
        %v451 = vld [vmem:[%s1 + $0x48] sm:$0xf]
        %v452 = vld [vmem:[%s1 + $0x4c] sm:$0xf]
        %v453 = vld [vmem:[%s1 + $0x50] sm:$0xf]
        %v454 = vld [vmem:[%s1 + $0x54] sm:$0xf]
        %v455 = vld [vmem:[%s1 + $0x58] sm:$0xf]
        %v456 = vld [vmem:[%s1 + $0x5c] sm:$0xf]
        %v457 = vld [vmem:[%s1 + $0x60] sm:$0xf]
        %v458 = vld [vmem:[%s1 + $0x64] sm:$0xf]
        %v459 = vld [vmem:[%s1 + $0x68] sm:$0xf]
        %v460 = vld [vmem:[%s1 + $0x6c] sm:$0xf]
        %v461 = vld [vmem:[%s1 + $0x70] sm:$0xf]
        %v462 = vld [vmem:[%s1 + $0x74] sm:$0xf]
        %v463 = vld [vmem:[%s1 + $0x78] sm:$0xf]
        %v464 = vld [vmem:[%s1 + $0x7c] sm:$0xf]
        %v465 = vld [vmem:[%s1 + $0x80] sm:$0xf]
        %v466 = vld [vmem:[%s1 + $0x84] sm:$0xf]
        %v467 = vld [vmem:[%s1 + $0x88] sm:$0xf]
        %v468 = vld [vmem:[%s1 + $0x8c] sm:$0xf]
        %v469 = vld [vmem:[%s1 + $0x90] sm:$0xf]
        %v470 = vld [vmem:[%s1 + $0x94] sm:$0xf]
        %v471 = vld [vmem:[%s1 + $0x98] sm:$0xf]
        %v472 = vld [vmem:[%s1 + $0x9c] sm:$0xf]
        %v473 = vld [vmem:[%s1 + $0xa0] sm:$0xf]
        %v474 = vld [vmem:[%s1 + $0xa4] sm:$0xf]
        %v475 = vld [vmem:[%s1 + $0xa8] sm:$0xf]
        %v476 = vld [vmem:[%s1 + $0xac] sm:$0xf]
        %v477 = vld [vmem:[%s1 + $0xb0] sm:$0xf]
        %v478 = vld [vmem:[%s1 + $0xb4] sm:$0xf]
        %v479 = vld [vmem:[%s1 + $0xb8] sm:$0xf]
        %v480 = vld [vmem:[%s1 + $0xbc] sm:$0xf]
        %v481 = vld [vmem:[%s1 + $0xc0] sm:$0xf]
        %v482 = vld [vmem:[%s1 + $0xc4] sm:$0xf]
        %v483 = vld [vmem:[%s1 + $0xc8] sm:$0xf]
        %v484 = vld [vmem:[%s1 + $0xcc] sm:$0xf]
        %v485 = vld [vmem:[%s1 + $0xd0] sm:$0xf]
        %v486 = vld [vmem:[%s1 + $0xd4] sm:$0xf]
        %v487 = vld [vmem:[%s1 + $0xd8] sm:$0xf]
        %v488 = vld [vmem:[%s1 + $0xdc] sm:$0xf]
        %v489 = vld [vmem:[%s1 + $0xe0] sm:$0xf]
        %v490 = vld [vmem:[%s1 + $0xe4] sm:$0xf]
        %v491 = vld [vmem:[%s1 + $0xe8] sm:$0xf]
        %v492 = vld [vmem:[%s1 + $0xec] sm:$0xf]
        %v493 = vld [vmem:[%s1 + $0xf0] sm:$0xf]
        %v494 = vld [vmem:[%s1 + $0xf4] sm:$0xf]
        %v495 = vld [vmem:[%s1 + $0xf8] sm:$0xf]
        %v496 = vld [vmem:[%s1 + $0xfc] sm:$0xf]
        %v561 = vunpack.c.l.b16 %v433
        %v562 = vunpack.c.l.b16 %v434
        %v563 = vunpack.c.l.b16 %v435
        %v564 = vunpack.c.l.b16 %v436
        %v565 = vunpack.c.l.b16 %v437
        %v566 = vunpack.c.l.b16 %v438
        %v567 = vunpack.c.l.b16 %v439
        %v568 = vunpack.c.l.b16 %v440
        %v569 = vunpack.c.l.b16 %v441
        %v570 = vunpack.c.l.b16 %v442
        %v571 = vunpack.c.l.b16 %v443
        %v572 = vunpack.c.l.b16 %v444
        %v573 = vunpack.c.l.b16 %v445
        %v574 = vunpack.c.l.b16 %v446
        %v575 = vunpack.c.l.b16 %v447
        %v576 = vunpack.c.l.b16 %v448
        %v577 = vunpack.c.l.b16 %v449
        %v578 = vunpack.c.l.b16 %v450
        %v579 = vunpack.c.l.b16 %v451
        %v580 = vunpack.c.l.b16 %v452
        %v581 = vunpack.c.l.b16 %v453
        %v582 = vunpack.c.l.b16 %v454
        %v583 = vunpack.c.l.b16 %v455
        %v584 = vunpack.c.l.b16 %v456
        %v585 = vunpack.c.l.b16 %v457
        %v586 = vunpack.c.l.b16 %v458
        %v587 = vunpack.c.l.b16 %v459
        %v588 = vunpack.c.l.b16 %v460
        %v589 = vunpack.c.l.b16 %v461
        %v590 = vunpack.c.l.b16 %v462
        %v591 = vunpack.c.l.b16 %v463
        %v592 = vunpack.c.l.b16 %v464
        %v593 = vunpack.c.l.b16 %v465
        %v594 = vunpack.c.l.b16 %v466
        %v595 = vunpack.c.l.b16 %v467
        %v596 = vunpack.c.l.b16 %v468
        %v597 = vunpack.c.l.b16 %v469
        %v598 = vunpack.c.l.b16 %v470
        %v599 = vunpack.c.l.b16 %v471
        %v600 = vunpack.c.l.b16 %v472
        %v601 = vunpack.c.l.b16 %v473
        %v602 = vunpack.c.l.b16 %v474
        %v603 = vunpack.c.l.b16 %v475
        %v604 = vunpack.c.l.b16 %v476
        %v605 = vunpack.c.l.b16 %v477
        %v606 = vunpack.c.l.b16 %v478
        %v607 = vunpack.c.l.b16 %v479
        %v608 = vunpack.c.l.b16 %v480
        %v609 = vunpack.c.l.b16 %v481
        %v610 = vunpack.c.l.b16 %v482
        %v611 = vunpack.c.l.b16 %v483
        %v612 = vunpack.c.l.b16 %v484
        %v613 = vunpack.c.l.b16 %v485
        %v614 = vunpack.c.l.b16 %v486
        %v615 = vunpack.c.l.b16 %v487
        %v616 = vunpack.c.l.b16 %v488
        %v617 = vunpack.c.l.b16 %v489
        %v618 = vunpack.c.l.b16 %v490
        %v619 = vunpack.c.l.b16 %v491
        %v620 = vunpack.c.l.b16 %v492
        %v621 = vunpack.c.l.b16 %v493
        %v622 = vunpack.c.l.b16 %v494
        %v623 = vunpack.c.l.b16 %v495
        %v624 = vunpack.c.l.b16 %v496
        %v625 = vpack.c.b16 %v562, %v561
        %v626 = vpack.c.b16 %v564, %v563
        %v627 = vpack.c.b16 %v566, %v565
        %v628 = vpack.c.b16 %v568, %v567
        %v629 = vpack.c.b16 %v570, %v569
        %v630 = vpack.c.b16 %v572, %v571
        %v631 = vpack.c.b16 %v574, %v573
        %v632 = vpack.c.b16 %v576, %v575
        %v633 = vpack.c.b16 %v578, %v577
        %v634 = vpack.c.b16 %v580, %v579
        %v635 = vpack.c.b16 %v582, %v581
        %v636 = vpack.c.b16 %v584, %v583
        %v637 = vpack.c.b16 %v586, %v585
        %v638 = vpack.c.b16 %v588, %v587
        %v639 = vpack.c.b16 %v590, %v589
        %v640 = vpack.c.b16 %v592, %v591
        %v641 = vpack.c.b16 %v594, %v593
        %v642 = vpack.c.b16 %v596, %v595
        %v643 = vpack.c.b16 %v598, %v597
        %v644 = vpack.c.b16 %v600, %v599
        %v645 = vpack.c.b16 %v602, %v601
        %v646 = vpack.c.b16 %v604, %v603
        %v647 = vpack.c.b16 %v606, %v605
        %v648 = vpack.c.b16 %v608, %v607
        %v649 = vpack.c.b16 %v610, %v609
        %v650 = vpack.c.b16 %v612, %v611
        %v651 = vpack.c.b16 %v614, %v613
        %v652 = vpack.c.b16 %v616, %v615
        %v653 = vpack.c.b16 %v618, %v617
        %v654 = vpack.c.b16 %v620, %v619
        %v655 = vpack.c.b16 %v622, %v621
        %v656 = vpack.c.b16 %v624, %v623
        %vm657 = vcmask 654336
        %v659 = vsel %vm657, %v625, 0
        %v662 = vsel %vm657, %v626, 0
        %v665 = vsel %vm657, %v627, 0
        %v668 = vsel %vm657, %v628, 0
        %v671 = vsel %vm657, %v629, 0
        %v674 = vsel %vm657, %v630, 0
        %v677 = vsel %vm657, %v631, 0
        %v680 = vsel %vm657, %v632, 0
        %v683 = vsel %vm657, %v633, 0
        %v686 = vsel %vm657, %v634, 0
        %v689 = vsel %vm657, %v635, 0
        %v692 = vsel %vm657, %v636, 0
        %v695 = vsel %vm657, %v637, 0
        %v698 = vsel %vm657, %v638, 0
        %v701 = vsel %vm657, %v639, 0
        %v704 = vsel %vm657, %v640, 0
        %v707 = vsel %vm657, %v641, 0
        %v710 = vsel %vm657, %v642, 0
        %v713 = vsel %vm657, %v643, 0
        %v716 = vsel %vm657, %v644, 0
        %v719 = vsel %vm657, %v645, 0
        %v722 = vsel %vm657, %v646, 0
        %v725 = vsel %vm657, %v647, 0
        %v728 = vsel %vm657, %v648, 0
        %v731 = vsel %vm657, %v649, 0
        %v734 = vsel %vm657, %v650, 0
        %v737 = vsel %vm657, %v651, 0
        %v740 = vsel %vm657, %v652, 0
        %v743 = vsel %vm657, %v653, 0
        %v746 = vsel %vm657, %v654, 0
        %v749 = vsel %vm657, %v655, 0
        %v752 = vsel %vm657, %v656, 0
        %754 = vmatprep.subr.bf16.mxu0 0
        %755 = vmatpush1.bf16.msra.mxu0 0
        %756 = vmatprep.subr.bf16.mxu0 0
        %757 = vmatpush1.bf16.msra.mxu0 0
        %758 = vmatprep.subr.bf16.mxu0 0
        %759 = vmatpush1.bf16.msra.mxu0 0
        %760 = vmatprep.subr.bf16.mxu0 %v431
        %761 = vmatpush1.bf16.msra.mxu0 %v428
        %762 = vmatprep.subr.bf16.mxu0 %v424
        %763 = vmatpush1.bf16.msra.mxu0 %v420
        %764 = vmatprep.subr.bf16.mxu0 %v416
        %765 = vmatpush1.bf16.msra.mxu0 %v412
        %766 = vmatprep.subr.bf16.mxu0 %v408
        %767 = vmatpush1.bf16.msra.mxu0 %v404
        %768 = vmatprep.subr.bf16.mxu0 %v400
        %769 = vmatpush1.bf16.msra.mxu0 %v396
        %770 = vmatprep.subr.bf16.mxu0 0
        %771 = vmatpush2.bf16.msra.mxu0 0
        %772 = vmatprep.subr.bf16.mxu0 0
        %773 = vmatpush2.bf16.msra.mxu0 0
        %774 = vmatprep.subr.bf16.mxu0 0
        %775 = vmatpush2.bf16.msra.mxu0 0
        %776 = vmatprep.subr.bf16.mxu0 0
        %777 = vmatpush2.bf16.msra.mxu0 0
        %778 = vmatprep.subr.bf16.mxu0 0
        %779 = vmatpush2.bf16.msra.mxu0 0
        %780 = vmatprep.subr.bf16.mxu0 0
        %781 = vmatpush2.bf16.msra.mxu0 0
        %782 = vmatprep.subr.bf16.mxu0 0
        %783 = vmatpush2.bf16.msra.mxu0 0
        %784 = vmatprep.subr.bf16.mxu0 0
        %785 = vmatpush2.bf16.msra.mxu0 0
        %786 = vmatprep.mubr.bf16.mxu0 0
        %787 = vmatmul.mubr.bf16.gmra.mxu0 %v659
        %v788 = vpop.f32.mrf.mxu0
        %v789 = vadd.f32 0.0, %v788
        %v790 = vpop.f32.mrf.mxu0
        %v791 = vadd.f32 0.0, %v790
        %v792 = vpop.f32.mrf.mxu0
        %v793 = vadd.f32 0.0, %v792
        %v794 = vpop.f32.mrf.mxu0
        %v795 = vadd.f32 0.0, %v794
        %796 = vmatprep.mubr.bf16.mxu0 0
        %797 = vmatmul.mubr.bf16.gmra.mxu0 %v662
        %v798 = vpop.f32.mrf.mxu0
        %v799 = vadd.f32 0.0, %v798
        %v800 = vpop.f32.mrf.mxu0
        %v801 = vadd.f32 0.0, %v800
        %v802 = vpop.f32.mrf.mxu0
        %v803 = vadd.f32 0.0, %v802
        %v804 = vpop.f32.mrf.mxu0
        %v805 = vadd.f32 0.0, %v804
        %806 = vmatprep.mubr.bf16.mxu0 0
        %807 = vmatmul.mubr.bf16.gmra.mxu0 %v665
        %v808 = vpop.f32.mrf.mxu0
        %v809 = vadd.f32 0.0, %v808
        %v810 = vpop.f32.mrf.mxu0
        %v811 = vadd.f32 0.0, %v810
        %v812 = vpop.f32.mrf.mxu0
        %v813 = vadd.f32 0.0, %v812
        %v814 = vpop.f32.mrf.mxu0
        %v815 = vadd.f32 0.0, %v814
        %816 = vmatprep.mubr.bf16.mxu0 0
        %817 = vmatmul.mubr.bf16.gmra.mxu0 %v668
        %v818 = vpop.f32.mrf.mxu0
        %v819 = vadd.f32 0.0, %v818
        %v820 = vpop.f32.mrf.mxu0
        %v821 = vadd.f32 0.0, %v820
        %v822 = vpop.f32.mrf.mxu0
        %v823 = vadd.f32 0.0, %v822
        %v824 = vpop.f32.mrf.mxu0
        %v825 = vadd.f32 0.0, %v824
        %826 = vmatprep.mubr.bf16.mxu0 0
        %827 = vmatmul.mubr.bf16.gmra.mxu0 %v671
        %v828 = vpop.f32.mrf.mxu0
        %v829 = vadd.f32 0.0, %v828
        %v830 = vpop.f32.mrf.mxu0
        %v831 = vadd.f32 0.0, %v830
        %v832 = vpop.f32.mrf.mxu0
        %v833 = vadd.f32 0.0, %v832
        %v834 = vpop.f32.mrf.mxu0
        %v835 = vadd.f32 0.0, %v834
        %836 = vmatprep.mubr.bf16.mxu0 0
        %837 = vmatmul.mubr.bf16.gmra.mxu0 %v674
        %v838 = vpop.f32.mrf.mxu0
        %v839 = vadd.f32 0.0, %v838
        %v840 = vpop.f32.mrf.mxu0
        %v841 = vadd.f32 0.0, %v840
        %v842 = vpop.f32.mrf.mxu0
        %v843 = vadd.f32 0.0, %v842
        %v844 = vpop.f32.mrf.mxu0
        %v845 = vadd.f32 0.0, %v844
        %846 = vmatprep.mubr.bf16.mxu0 0
        %847 = vmatmul.mubr.bf16.gmra.mxu0 %v677
        %v848 = vpop.f32.mrf.mxu0
        %v849 = vadd.f32 0.0, %v848
        %v850 = vpop.f32.mrf.mxu0
        %v851 = vadd.f32 0.0, %v850
        %v852 = vpop.f32.mrf.mxu0
        %v853 = vadd.f32 0.0, %v852
        %v854 = vpop.f32.mrf.mxu0
        %v855 = vadd.f32 0.0, %v854
        %856 = vmatprep.mubr.bf16.mxu0 0
        %857 = vmatmul.mubr.bf16.gmra.mxu0 %v680
        %v858 = vpop.f32.mrf.mxu0
        %v859 = vadd.f32 0.0, %v858
        %v860 = vpop.f32.mrf.mxu0
        %v861 = vadd.f32 0.0, %v860
        %v862 = vpop.f32.mrf.mxu0
        %v863 = vadd.f32 0.0, %v862
        %v864 = vpop.f32.mrf.mxu0
        %v865 = vadd.f32 0.0, %v864
        %866 = vmatprep.mubr.bf16.mxu0 0
        %867 = vmatmul.mubr.bf16.gmra.mxu0 %v683
        %v868 = vpop.f32.mrf.mxu0
        %v869 = vadd.f32 0.0, %v868
        %v870 = vpop.f32.mrf.mxu0
        %v871 = vadd.f32 0.0, %v870
        %v872 = vpop.f32.mrf.mxu0
        %v873 = vadd.f32 0.0, %v872
        %v874 = vpop.f32.mrf.mxu0
        %v875 = vadd.f32 0.0, %v874
        %876 = vmatprep.mubr.bf16.mxu0 0
        %877 = vmatmul.mubr.bf16.gmra.mxu0 %v686
        %v878 = vpop.f32.mrf.mxu0
        %v879 = vadd.f32 0.0, %v878
        %v880 = vpop.f32.mrf.mxu0
        %v881 = vadd.f32 0.0, %v880
        %v882 = vpop.f32.mrf.mxu0
        %v883 = vadd.f32 0.0, %v882
        %v884 = vpop.f32.mrf.mxu0
        %v885 = vadd.f32 0.0, %v884
        %886 = vmatprep.mubr.bf16.mxu0 0
        %887 = vmatmul.mubr.bf16.gmra.mxu0 %v689
        %v888 = vpop.f32.mrf.mxu0
        %v889 = vadd.f32 0.0, %v888
        %v890 = vpop.f32.mrf.mxu0
        %v891 = vadd.f32 0.0, %v890
        %v892 = vpop.f32.mrf.mxu0
        %v893 = vadd.f32 0.0, %v892
        %v894 = vpop.f32.mrf.mxu0
        %v895 = vadd.f32 0.0, %v894
        %896 = vmatprep.mubr.bf16.mxu0 0
        %897 = vmatmul.mubr.bf16.gmra.mxu0 %v692
        %v898 = vpop.f32.mrf.mxu0
        %v899 = vadd.f32 0.0, %v898
        %v900 = vpop.f32.mrf.mxu0
        %v901 = vadd.f32 0.0, %v900
        %v902 = vpop.f32.mrf.mxu0
        %v903 = vadd.f32 0.0, %v902
        %v904 = vpop.f32.mrf.mxu0
        %v905 = vadd.f32 0.0, %v904
        %906 = vmatprep.mubr.bf16.mxu0 0
        %907 = vmatmul.mubr.bf16.gmra.mxu0 %v695
        %v908 = vpop.f32.mrf.mxu0
        %v909 = vadd.f32 0.0, %v908
        %v910 = vpop.f32.mrf.mxu0
        %v911 = vadd.f32 0.0, %v910
        %v912 = vpop.f32.mrf.mxu0
        %v913 = vadd.f32 0.0, %v912
        %v914 = vpop.f32.mrf.mxu0
        %v915 = vadd.f32 0.0, %v914
        %916 = vmatprep.mubr.bf16.mxu0 0
        %917 = vmatmul.mubr.bf16.gmra.mxu0 %v698
        %v918 = vpop.f32.mrf.mxu0
        %v919 = vadd.f32 0.0, %v918
        %v920 = vpop.f32.mrf.mxu0
        %v921 = vadd.f32 0.0, %v920
        %v922 = vpop.f32.mrf.mxu0
        %v923 = vadd.f32 0.0, %v922
        %v924 = vpop.f32.mrf.mxu0
        %v925 = vadd.f32 0.0, %v924
        %926 = vmatprep.mubr.bf16.mxu0 0
        %927 = vmatmul.mubr.bf16.gmra.mxu0 %v701
        %v928 = vpop.f32.mrf.mxu0
        %v929 = vadd.f32 0.0, %v928
        %v930 = vpop.f32.mrf.mxu0
        %v931 = vadd.f32 0.0, %v930
        %v932 = vpop.f32.mrf.mxu0
        %v933 = vadd.f32 0.0, %v932
        %v934 = vpop.f32.mrf.mxu0
        %v935 = vadd.f32 0.0, %v934
        %936 = vmatprep.mubr.bf16.mxu0 0
        %937 = vmatmul.mubr.bf16.gmra.mxu0 %v704
        %v938 = vpop.f32.mrf.mxu0
        %v939 = vadd.f32 0.0, %v938
        %v940 = vpop.f32.mrf.mxu0
        %v941 = vadd.f32 0.0, %v940
        %v942 = vpop.f32.mrf.mxu0
        %v943 = vadd.f32 0.0, %v942
        %v944 = vpop.f32.mrf.mxu0
        %v945 = vadd.f32 0.0, %v944
        %946 = vmatprep.mubr.bf16.mxu0 0
        %947 = vmatmul.mubr.bf16.gmra.mxu0 %v707
        %v948 = vpop.f32.mrf.mxu0
        %v949 = vadd.f32 0.0, %v948
        %v950 = vpop.f32.mrf.mxu0
        %v951 = vadd.f32 0.0, %v950
        %v952 = vpop.f32.mrf.mxu0
        %v953 = vadd.f32 0.0, %v952
        %v954 = vpop.f32.mrf.mxu0
        %v955 = vadd.f32 0.0, %v954
        %956 = vmatprep.mubr.bf16.mxu0 0
        %957 = vmatmul.mubr.bf16.gmra.mxu0 %v710
        %v958 = vpop.f32.mrf.mxu0
        %v959 = vadd.f32 0.0, %v958
        %v960 = vpop.f32.mrf.mxu0
        %v961 = vadd.f32 0.0, %v960
        %v962 = vpop.f32.mrf.mxu0
        %v963 = vadd.f32 0.0, %v962
        %v964 = vpop.f32.mrf.mxu0
        %v965 = vadd.f32 0.0, %v964
        %966 = vmatprep.mubr.bf16.mxu0 0
        %967 = vmatmul.mubr.bf16.gmra.mxu0 %v713
        %v968 = vpop.f32.mrf.mxu0
        %v969 = vadd.f32 0.0, %v968
        %v970 = vpop.f32.mrf.mxu0
        %v971 = vadd.f32 0.0, %v970
        %v972 = vpop.f32.mrf.mxu0
        %v973 = vadd.f32 0.0, %v972
        %v974 = vpop.f32.mrf.mxu0
        %v975 = vadd.f32 0.0, %v974
        %976 = vmatprep.mubr.bf16.mxu0 0
        %977 = vmatmul.mubr.bf16.gmra.mxu0 %v716
        %v978 = vpop.f32.mrf.mxu0
        %v979 = vadd.f32 0.0, %v978
        %v980 = vpop.f32.mrf.mxu0
        %v981 = vadd.f32 0.0, %v980
        %v982 = vpop.f32.mrf.mxu0
        %v983 = vadd.f32 0.0, %v982
        %v984 = vpop.f32.mrf.mxu0
        %v985 = vadd.f32 0.0, %v984
        %986 = vmatprep.mubr.bf16.mxu0 0
        %987 = vmatmul.mubr.bf16.gmra.mxu0 %v719
        %v988 = vpop.f32.mrf.mxu0
        %v989 = vadd.f32 0.0, %v988
        %v990 = vpop.f32.mrf.mxu0
        %v991 = vadd.f32 0.0, %v990
        %v992 = vpop.f32.mrf.mxu0
        %v993 = vadd.f32 0.0, %v992
        %v994 = vpop.f32.mrf.mxu0
        %v995 = vadd.f32 0.0, %v994
        %996 = vmatprep.mubr.bf16.mxu0 0
        %997 = vmatmul.mubr.bf16.gmra.mxu0 %v722
        %v998 = vpop.f32.mrf.mxu0
        %v999 = vadd.f32 0.0, %v998
        %v1000 = vpop.f32.mrf.mxu0
        %v1001 = vadd.f32 0.0, %v1000
        %v1002 = vpop.f32.mrf.mxu0
        %v1003 = vadd.f32 0.0, %v1002
        %v1004 = vpop.f32.mrf.mxu0
        %v1005 = vadd.f32 0.0, %v1004
        %1006 = vmatprep.mubr.bf16.mxu0 0
        %1007 = vmatmul.mubr.bf16.gmra.mxu0 %v725
        %v1008 = vpop.f32.mrf.mxu0
        %v1009 = vadd.f32 0.0, %v1008
        %v1010 = vpop.f32.mrf.mxu0
        %v1011 = vadd.f32 0.0, %v1010
        %v1012 = vpop.f32.mrf.mxu0
        %v1013 = vadd.f32 0.0, %v1012
        %v1014 = vpop.f32.mrf.mxu0
        %v1015 = vadd.f32 0.0, %v1014
        %1016 = vmatprep.mubr.bf16.mxu0 0
        %1017 = vmatmul.mubr.bf16.gmra.mxu0 %v728
        %v1018 = vpop.f32.mrf.mxu0
        %v1019 = vadd.f32 0.0, %v1018
        %v1020 = vpop.f32.mrf.mxu0
        %v1021 = vadd.f32 0.0, %v1020
        %v1022 = vpop.f32.mrf.mxu0
        %v1023 = vadd.f32 0.0, %v1022
        %v1024 = vpop.f32.mrf.mxu0
        %v1025 = vadd.f32 0.0, %v1024
        %1026 = vmatprep.mubr.bf16.mxu0 0
        %1027 = vmatmul.mubr.bf16.gmra.mxu0 %v731
        %v1028 = vpop.f32.mrf.mxu0
        %v1029 = vadd.f32 0.0, %v1028
        %v1030 = vpop.f32.mrf.mxu0
        %v1031 = vadd.f32 0.0, %v1030
        %v1032 = vpop.f32.mrf.mxu0
        %v1033 = vadd.f32 0.0, %v1032
        %v1034 = vpop.f32.mrf.mxu0
        %v1035 = vadd.f32 0.0, %v1034
        %1036 = vmatprep.mubr.bf16.mxu0 0
        %1037 = vmatmul.mubr.bf16.gmra.mxu0 %v734
        %v1038 = vpop.f32.mrf.mxu0
        %v1039 = vadd.f32 0.0, %v1038
        %v1040 = vpop.f32.mrf.mxu0
        %v1041 = vadd.f32 0.0, %v1040
        %v1042 = vpop.f32.mrf.mxu0
        %v1043 = vadd.f32 0.0, %v1042
        %v1044 = vpop.f32.mrf.mxu0
        %v1045 = vadd.f32 0.0, %v1044
        %1046 = vmatprep.mubr.bf16.mxu0 0
        %1047 = vmatmul.mubr.bf16.gmra.mxu0 %v737
        %v1048 = vpop.f32.mrf.mxu0
        %v1049 = vadd.f32 0.0, %v1048
        %v1050 = vpop.f32.mrf.mxu0
        %v1051 = vadd.f32 0.0, %v1050
        %v1052 = vpop.f32.mrf.mxu0
        %v1053 = vadd.f32 0.0, %v1052
        %v1054 = vpop.f32.mrf.mxu0
        %v1055 = vadd.f32 0.0, %v1054
        %1056 = vmatprep.mubr.bf16.mxu0 0
        %1057 = vmatmul.mubr.bf16.gmra.mxu0 %v740
        %v1058 = vpop.f32.mrf.mxu0
        %v1059 = vadd.f32 0.0, %v1058
        %v1060 = vpop.f32.mrf.mxu0
        %v1061 = vadd.f32 0.0, %v1060
        %v1062 = vpop.f32.mrf.mxu0
        %v1063 = vadd.f32 0.0, %v1062
        %v1064 = vpop.f32.mrf.mxu0
        %v1065 = vadd.f32 0.0, %v1064
        %1066 = vmatprep.mubr.bf16.mxu0 0
        %1067 = vmatmul.mubr.bf16.gmra.mxu0 %v743
        %v1068 = vpop.f32.mrf.mxu0
        %v1069 = vadd.f32 0.0, %v1068
        %v1070 = vpop.f32.mrf.mxu0
        %v1071 = vadd.f32 0.0, %v1070
        %v1072 = vpop.f32.mrf.mxu0
        %v1073 = vadd.f32 0.0, %v1072
        %v1074 = vpop.f32.mrf.mxu0
        %v1075 = vadd.f32 0.0, %v1074
        %1076 = vmatprep.mubr.bf16.mxu0 0
        %1077 = vmatmul.mubr.bf16.gmra.mxu0 %v746
        %v1078 = vpop.f32.mrf.mxu0
        %v1079 = vadd.f32 0.0, %v1078
        %v1080 = vpop.f32.mrf.mxu0
        %v1081 = vadd.f32 0.0, %v1080
        %v1082 = vpop.f32.mrf.mxu0
        %v1083 = vadd.f32 0.0, %v1082
        %v1084 = vpop.f32.mrf.mxu0
        %v1085 = vadd.f32 0.0, %v1084
        %1086 = vmatprep.mubr.bf16.mxu0 0
        %1087 = vmatmul.mubr.bf16.gmra.mxu0 %v749
        %v1088 = vpop.f32.mrf.mxu0
        %v1089 = vadd.f32 0.0, %v1088
        %v1090 = vpop.f32.mrf.mxu0
        %v1091 = vadd.f32 0.0, %v1090
        %v1092 = vpop.f32.mrf.mxu0
        %v1093 = vadd.f32 0.0, %v1092
        %v1094 = vpop.f32.mrf.mxu0
        %v1095 = vadd.f32 0.0, %v1094
        %1096 = vmatprep.mubr.bf16.mxu0 0
        %1097 = vmatmul.mubr.bf16.gmra.mxu0 %v752
        %v1098 = vpop.f32.mrf.mxu0
        %v1099 = vadd.f32 0.0, %v1098
        %v1100 = vpop.f32.mrf.mxu0
        %v1101 = vadd.f32 0.0, %v1100
        %v1102 = vpop.f32.mrf.mxu0
        %v1103 = vadd.f32 0.0, %v1102
        %v1104 = vpop.f32.mrf.mxu0
        %v1105 = vadd.f32 0.0, %v1104
        %1106 = vdwg.mxu0
        %v1107 = vmax.f32 %v789, 0.0
        %v1108 = vmax.f32 %v791, 0.0
        %v1109 = vmax.f32 %v793, 0.0
        %v1110 = vmax.f32 %v795, 0.0
        %v1111 = vmax.f32 %v799, 0.0
        %v1112 = vmax.f32 %v801, 0.0
        %v1113 = vmax.f32 %v803, 0.0
        %v1114 = vmax.f32 %v805, 0.0
        %v1115 = vmax.f32 %v809, 0.0
        %v1116 = vmax.f32 %v811, 0.0
        %v1117 = vmax.f32 %v813, 0.0
        %v1118 = vmax.f32 %v815, 0.0
        %v1119 = vmax.f32 %v819, 0.0
        %v1120 = vmax.f32 %v821, 0.0
        %v1121 = vmax.f32 %v823, 0.0
        %v1122 = vmax.f32 %v825, 0.0
        %v1123 = vmax.f32 %v829, 0.0
        %v1124 = vmax.f32 %v831, 0.0
        %v1125 = vmax.f32 %v833, 0.0
        %v1126 = vmax.f32 %v835, 0.0
        %v1127 = vmax.f32 %v839, 0.0
        %v1128 = vmax.f32 %v841, 0.0
        %v1129 = vmax.f32 %v843, 0.0
        %v1130 = vmax.f32 %v845, 0.0
        %v1131 = vmax.f32 %v849, 0.0
        %v1132 = vmax.f32 %v851, 0.0
        %v1133 = vmax.f32 %v853, 0.0
        %v1134 = vmax.f32 %v855, 0.0
        %v1135 = vmax.f32 %v859, 0.0
        %v1136 = vmax.f32 %v861, 0.0
        %v1137 = vmax.f32 %v863, 0.0
        %v1138 = vmax.f32 %v865, 0.0
        %v1139 = vmax.f32 %v869, 0.0
        %v1140 = vmax.f32 %v871, 0.0
        %v1141 = vmax.f32 %v873, 0.0
        %v1142 = vmax.f32 %v875, 0.0
        %v1143 = vmax.f32 %v879, 0.0
        %v1144 = vmax.f32 %v881, 0.0
        %v1145 = vmax.f32 %v883, 0.0
        %v1146 = vmax.f32 %v885, 0.0
        %v1147 = vmax.f32 %v889, 0.0
        %v1148 = vmax.f32 %v891, 0.0
        %v1149 = vmax.f32 %v893, 0.0
        %v1150 = vmax.f32 %v895, 0.0
        %v1151 = vmax.f32 %v899, 0.0
        %v1152 = vmax.f32 %v901, 0.0
        %v1153 = vmax.f32 %v903, 0.0
        %v1154 = vmax.f32 %v905, 0.0
        %v1155 = vmax.f32 %v909, 0.0
        %v1156 = vmax.f32 %v911, 0.0
        %v1157 = vmax.f32 %v913, 0.0
        %v1158 = vmax.f32 %v915, 0.0
        %v1159 = vmax.f32 %v919, 0.0
        %v1160 = vmax.f32 %v921, 0.0
        %v1161 = vmax.f32 %v923, 0.0
        %v1162 = vmax.f32 %v925, 0.0
        %v1163 = vmax.f32 %v929, 0.0
        %v1164 = vmax.f32 %v931, 0.0
        %v1165 = vmax.f32 %v933, 0.0
        %v1166 = vmax.f32 %v935, 0.0
        %v1167 = vmax.f32 %v939, 0.0
        %v1168 = vmax.f32 %v941, 0.0
        %v1169 = vmax.f32 %v943, 0.0
        %v1170 = vmax.f32 %v945, 0.0
        %v1171 = vmax.f32 %v949, 0.0
        %v1172 = vmax.f32 %v951, 0.0
        %v1173 = vmax.f32 %v953, 0.0
        %v1174 = vmax.f32 %v955, 0.0
        %v1175 = vmax.f32 %v959, 0.0
        %v1176 = vmax.f32 %v961, 0.0
        %v1177 = vmax.f32 %v963, 0.0
        %v1178 = vmax.f32 %v965, 0.0
        %v1179 = vmax.f32 %v969, 0.0
        %v1180 = vmax.f32 %v971, 0.0
        %v1181 = vmax.f32 %v973, 0.0
        %v1182 = vmax.f32 %v975, 0.0
        %v1183 = vmax.f32 %v979, 0.0
        %v1184 = vmax.f32 %v981, 0.0
        %v1185 = vmax.f32 %v983, 0.0
        %v1186 = vmax.f32 %v985, 0.0
        %v1187 = vmax.f32 %v989, 0.0
        %v1188 = vmax.f32 %v991, 0.0
        %v1189 = vmax.f32 %v993, 0.0
        %v1190 = vmax.f32 %v995, 0.0
        %v1191 = vmax.f32 %v999, 0.0
        %v1192 = vmax.f32 %v1001, 0.0
        %v1193 = vmax.f32 %v1003, 0.0
        %v1194 = vmax.f32 %v1005, 0.0
        %v1195 = vmax.f32 %v1009, 0.0
        %v1196 = vmax.f32 %v1011, 0.0
        %v1197 = vmax.f32 %v1013, 0.0
        %v1198 = vmax.f32 %v1015, 0.0
        %v1199 = vmax.f32 %v1019, 0.0
        %v1200 = vmax.f32 %v1021, 0.0
        %v1201 = vmax.f32 %v1023, 0.0
        %v1202 = vmax.f32 %v1025, 0.0
        %v1203 = vmax.f32 %v1029, 0.0
        %v1204 = vmax.f32 %v1031, 0.0
        %v1205 = vmax.f32 %v1033, 0.0
        %v1206 = vmax.f32 %v1035, 0.0
        %v1207 = vmax.f32 %v1039, 0.0
        %v1208 = vmax.f32 %v1041, 0.0
        %v1209 = vmax.f32 %v1043, 0.0
        %v1210 = vmax.f32 %v1045, 0.0
        %v1211 = vmax.f32 %v1049, 0.0
        %v1212 = vmax.f32 %v1051, 0.0
        %v1213 = vmax.f32 %v1053, 0.0
        %v1214 = vmax.f32 %v1055, 0.0
        %v1215 = vmax.f32 %v1059, 0.0
        %v1216 = vmax.f32 %v1061, 0.0
        %v1217 = vmax.f32 %v1063, 0.0
        %v1218 = vmax.f32 %v1065, 0.0
        %v1219 = vmax.f32 %v1069, 0.0
        %v1220 = vmax.f32 %v1071, 0.0
        %v1221 = vmax.f32 %v1073, 0.0
        %v1222 = vmax.f32 %v1075, 0.0
        %v1223 = vmax.f32 %v1079, 0.0
        %v1224 = vmax.f32 %v1081, 0.0
        %v1225 = vmax.f32 %v1083, 0.0
        %v1226 = vmax.f32 %v1085, 0.0
        %v1227 = vmax.f32 %v1089, 0.0
        %v1228 = vmax.f32 %v1091, 0.0
        %v1229 = vmax.f32 %v1093, 0.0
        %v1230 = vmax.f32 %v1095, 0.0
        %v1231 = vmax.f32 %v1099, 0.0
        %v1232 = vmax.f32 %v1101, 0.0
        %v1233 = vmax.f32 %v1103, 0.0
        %v1234 = vmax.f32 %v1105, 0.0
        %v1235 = vld [vmem:[%s2] sm:$0xff]
        %v1236 = vld [vmem:[%s2 + $0x8] sm:$0xff]
        %v1237 = vld [vmem:[%s2 + $0x10] sm:$0xff]
        %v1238 = vld [vmem:[%s2 + $0x18] sm:$0xff]
        %v1239 = vld [vmem:[%s2 + $0x20] sm:$0xff]
        %v1240 = vld [vmem:[%s2 + $0x28] sm:$0xff]
        %v1241 = vld [vmem:[%s2 + $0x30] sm:$0xff]
        %v1242 = vld [vmem:[%s2 + $0x38] sm:$0xff]
        %v1243 = vld [vmem:[%s2 + $0x40] sm:$0xff]
        %v1244 = vld [vmem:[%s2 + $0x48] sm:$0xff]
        %v1245 = vld [vmem:[%s2 + $0x50] sm:$0xff]
        %v1246 = vld [vmem:[%s2 + $0x58] sm:$0xff]
        %v1247 = vld [vmem:[%s2 + $0x60] sm:$0xff]
        %v1248 = vld [vmem:[%s2 + $0x68] sm:$0xff]
        %v1249 = vld [vmem:[%s2 + $0x70] sm:$0xff]
        %v1250 = vld [vmem:[%s2 + $0x78] sm:$0xff]
        %v1251 = vld [vmem:[%s2 + $0x80] sm:$0xff]
        %v1252 = vld [vmem:[%s2 + $0x88] sm:$0xff]
        %v1253 = vpack.c.bf16 %v1109, %v1107
        %v1254 = vpack.c.bf16 %v1110, %v1108
        %v1255 = vpack.c.bf16 %v1113, %v1111
        %v1256 = vpack.c.bf16 %v1114, %v1112
        %v1257 = vpack.c.bf16 %v1117, %v1115
        %v1258 = vpack.c.bf16 %v1118, %v1116
        %v1259 = vpack.c.bf16 %v1121, %v1119
        %v1260 = vpack.c.bf16 %v1122, %v1120
        %v1261 = vpack.c.bf16 %v1125, %v1123
        %v1262 = vpack.c.bf16 %v1126, %v1124
        %v1263 = vpack.c.bf16 %v1129, %v1127
        %v1264 = vpack.c.bf16 %v1130, %v1128
        %v1265 = vpack.c.bf16 %v1133, %v1131
        %v1266 = vpack.c.bf16 %v1134, %v1132
        %v1267 = vpack.c.bf16 %v1137, %v1135
        %v1268 = vpack.c.bf16 %v1138, %v1136
        %v1269 = vpack.c.bf16 %v1141, %v1139
        %v1270 = vpack.c.bf16 %v1142, %v1140
        %v1271 = vpack.c.bf16 %v1145, %v1143
        %v1272 = vpack.c.bf16 %v1146, %v1144
        %v1273 = vpack.c.bf16 %v1149, %v1147
        %v1274 = vpack.c.bf16 %v1150, %v1148
        %v1275 = vpack.c.bf16 %v1153, %v1151
        %v1276 = vpack.c.bf16 %v1154, %v1152
        %v1277 = vpack.c.bf16 %v1157, %v1155
        %v1278 = vpack.c.bf16 %v1158, %v1156
        %v1279 = vpack.c.bf16 %v1161, %v1159
        %v1280 = vpack.c.bf16 %v1162, %v1160
        %v1281 = vpack.c.bf16 %v1165, %v1163
        %v1282 = vpack.c.bf16 %v1166, %v1164
        %v1283 = vpack.c.bf16 %v1169, %v1167
        %v1284 = vpack.c.bf16 %v1170, %v1168
        %v1285 = vpack.c.bf16 %v1173, %v1171
        %v1286 = vpack.c.bf16 %v1174, %v1172
        %v1287 = vpack.c.bf16 %v1177, %v1175
        %v1288 = vpack.c.bf16 %v1178, %v1176
        %v1289 = vpack.c.bf16 %v1181, %v1179
        %v1290 = vpack.c.bf16 %v1182, %v1180
        %v1291 = vpack.c.bf16 %v1185, %v1183
        %v1292 = vpack.c.bf16 %v1186, %v1184
        %v1293 = vpack.c.bf16 %v1189, %v1187
        %v1294 = vpack.c.bf16 %v1190, %v1188
        %v1295 = vpack.c.bf16 %v1193, %v1191
        %v1296 = vpack.c.bf16 %v1194, %v1192
        %v1297 = vpack.c.bf16 %v1197, %v1195
        %v1298 = vpack.c.bf16 %v1198, %v1196
        %v1299 = vpack.c.bf16 %v1201, %v1199
        %v1300 = vpack.c.bf16 %v1202, %v1200
        %v1301 = vpack.c.bf16 %v1205, %v1203
        %v1302 = vpack.c.bf16 %v1206, %v1204
        %v1303 = vpack.c.bf16 %v1209, %v1207
        %v1304 = vpack.c.bf16 %v1210, %v1208
        %v1305 = vpack.c.bf16 %v1213, %v1211
        %v1306 = vpack.c.bf16 %v1214, %v1212
        %v1307 = vpack.c.bf16 %v1217, %v1215
        %v1308 = vpack.c.bf16 %v1218, %v1216
        %v1309 = vpack.c.bf16 %v1221, %v1219
        %v1310 = vpack.c.bf16 %v1222, %v1220
        %v1311 = vpack.c.bf16 %v1225, %v1223
        %v1312 = vpack.c.bf16 %v1226, %v1224
        %v1313 = vpack.c.bf16 %v1229, %v1227
        %v1314 = vpack.c.bf16 %v1230, %v1228
        %v1315 = vpack.c.bf16 %v1233, %v1231
        %v1316 = vpack.c.bf16 %v1234, %v1232
        %v1317 = vld [vmem:[%s3] sm:$0xff]
        %v1318 = vld [vmem:[%s3 + $0x8] sm:$0xff]
        %v1319 = vld [vmem:[%s3 + $0x10] sm:$0xff]
        %v1320 = vld [vmem:[%s3 + $0x18] sm:$0xff]
        %v1321 = vld [vmem:[%s3 + $0x20] sm:$0xff]
        %v1322 = vld [vmem:[%s3 + $0x28] sm:$0xff]
        %v1323 = vld [vmem:[%s3 + $0x30] sm:$0xff]
        %v1324 = vld [vmem:[%s3 + $0x38] sm:$0xff]
        %v1325 = vld [vmem:[%s3 + $0x40] sm:$0xff]
        %1327 = vset.pattern.permute.xlu0 0
        %1328 = vperm.xlu0 %1327, %v1317
        %v1329 = vpop.permute.xlu0 %1328
        %1332 = vset.pattern.permute.xlu0 0
        %1333 = vperm.xlu0 %1332, %v1318
        %v1334 = vpop.permute.xlu0 %1333
        %1337 = vset.pattern.permute.xlu0 0
        %1338 = vperm.xlu0 %1337, %v1319
        %v1339 = vpop.permute.xlu0 %1338
        %1342 = vset.pattern.permute.xlu0 0
        %1343 = vperm.xlu0 %1342, %v1320
        %v1344 = vpop.permute.xlu0 %1343
        %1347 = vset.pattern.permute.xlu0 0
        %1348 = vperm.xlu0 %1347, %v1321
        %v1349 = vpop.permute.xlu0 %1348
        %1352 = vset.pattern.permute.xlu0 0
        %1353 = vperm.xlu0 %1352, %v1322
        %v1354 = vpop.permute.xlu0 %1353
        %1357 = vset.pattern.permute.xlu0 0
        %1358 = vperm.xlu0 %1357, %v1323
        %v1359 = vpop.permute.xlu0 %1358
        %1362 = vset.pattern.permute.xlu0 0
        %1363 = vperm.xlu0 %1362, %v1324
        %v1364 = vpop.permute.xlu0 %1363
        %1367 = vset.pattern.permute.xlu0 0
        %1368 = vperm.xlu0 %1367, %v1325
        %v1369 = vpop.permute.xlu0 %1368
        %v1389 = vunpack.c.l.b16 %v1235
        %v1390 = vunpack.c.h.b16 %v1235
        %v1391 = vunpack.c.l.b16 %v1236
        %v1392 = vunpack.c.h.b16 %v1236
        %v1393 = vunpack.c.l.b16 %v1237
        %v1394 = vunpack.c.h.b16 %v1237
        %v1395 = vunpack.c.l.b16 %v1238
        %v1396 = vunpack.c.h.b16 %v1238
        %v1397 = vunpack.c.l.b16 %v1239
        %v1398 = vunpack.c.h.b16 %v1239
        %v1399 = vunpack.c.l.b16 %v1240
        %v1400 = vunpack.c.h.b16 %v1240
        %v1401 = vunpack.c.l.b16 %v1241
        %v1402 = vunpack.c.h.b16 %v1241
        %v1403 = vunpack.c.l.b16 %v1242
        %v1404 = vunpack.c.h.b16 %v1242
        %v1405 = vunpack.c.l.b16 %v1243
        %v1406 = vunpack.c.h.b16 %v1243
        %v1407 = vunpack.c.l.b16 %v1244
        %v1408 = vunpack.c.h.b16 %v1244
        %v1409 = vunpack.c.l.b16 %v1245
        %v1410 = vunpack.c.h.b16 %v1245
        %v1411 = vunpack.c.l.b16 %v1246
        %v1412 = vunpack.c.h.b16 %v1246
        %v1413 = vunpack.c.l.b16 %v1247
        %v1414 = vunpack.c.h.b16 %v1247
        %v1415 = vunpack.c.l.b16 %v1248
        %v1416 = vunpack.c.h.b16 %v1248
        %v1417 = vunpack.c.l.b16 %v1249
        %v1418 = vunpack.c.h.b16 %v1249
        %v1419 = vunpack.c.l.b16 %v1250
        %v1420 = vunpack.c.h.b16 %v1250
        %v1421 = vunpack.c.l.b16 %v1251
        %v1422 = vunpack.c.h.b16 %v1251
        %v1423 = vunpack.c.l.b16 %v1252
        %v1424 = vunpack.c.h.b16 %v1252
        %v1425 = vpack.c.b16 %v1393, %v1389
        %v1426 = vpack.c.b16 %v1394, %v1390
        %v1427 = vpack.c.b16 %v1395, %v1391
        %v1428 = vpack.c.b16 %v1396, %v1392
        %v1429 = vpack.c.b16 %v1401, %v1397
        %v1430 = vpack.c.b16 %v1402, %v1398
        %v1431 = vpack.c.b16 %v1403, %v1399
        %v1432 = vpack.c.b16 %v1404, %v1400
        %v1433 = vpack.c.b16 %v1409, %v1405
        %v1434 = vpack.c.b16 %v1410, %v1406
        %v1435 = vpack.c.b16 %v1411, %v1407
        %v1436 = vpack.c.b16 %v1412, %v1408
        %v1437 = vpack.c.b16 %v1417, %v1413
        %v1438 = vpack.c.b16 %v1418, %v1414
        %v1439 = vpack.c.b16 %v1419, %v1415
        %v1440 = vpack.c.b16 %v1420, %v1416
        %v1441 = vpack.c.b16 %v1421, %v1421
        %v1442 = vpack.c.b16 %v1422, %v1422
        %v1443 = vpack.c.b16 %v1423, %v1423
        %v1444 = vpack.c.b16 %v1424, %v1424
        %1465 = vmatprep.subr.bf16.mxu0 %v1268
        %1466 = vmatpush1.bf16.msra.mxu0 %v1267
        %1467 = vmatprep.subr.bf16.mxu0 %v1266
        %1468 = vmatpush1.bf16.msra.mxu0 %v1265
        %1469 = vmatprep.subr.bf16.mxu0 %v1264
        %1470 = vmatpush1.bf16.msra.mxu0 %v1263
        %1471 = vmatprep.subr.bf16.mxu0 %v1262
        %1472 = vmatpush1.bf16.msra.mxu0 %v1261
        %1473 = vmatprep.subr.bf16.mxu0 %v1260
        %1474 = vmatpush1.bf16.msra.mxu0 %v1259
        %1475 = vmatprep.subr.bf16.mxu0 %v1258
        %1476 = vmatpush1.bf16.msra.mxu0 %v1257
        %1477 = vmatprep.subr.bf16.mxu0 %v1256
        %1478 = vmatpush1.bf16.msra.mxu0 %v1255
        %1479 = vmatprep.subr.bf16.mxu0 %v1254
        %1480 = vmatpush1.bf16.msra.mxu0 %v1253
        %1481 = vmatprep.subr.bf16.mxu0 %v1284
        %1482 = vmatpush2.bf16.msra.mxu0 %v1283
        %1483 = vmatprep.subr.bf16.mxu0 %v1282
        %1484 = vmatpush2.bf16.msra.mxu0 %v1281
        %1485 = vmatprep.subr.bf16.mxu0 %v1280
        %1486 = vmatpush2.bf16.msra.mxu0 %v1279
        %1487 = vmatprep.subr.bf16.mxu0 %v1278
        %1488 = vmatpush2.bf16.msra.mxu0 %v1277
        %1489 = vmatprep.subr.bf16.mxu0 %v1276
        %1490 = vmatpush2.bf16.msra.mxu0 %v1275
        %1491 = vmatprep.subr.bf16.mxu0 %v1274
        %1492 = vmatpush2.bf16.msra.mxu0 %v1273
        %1493 = vmatprep.subr.bf16.mxu0 %v1272
        %1494 = vmatpush2.bf16.msra.mxu0 %v1271
        %1495 = vmatprep.subr.bf16.mxu0 %v1270
        %1496 = vmatpush2.bf16.msra.mxu0 %v1269
        %1497 = vmatprep.mubr.bf16.mxu0 %v1426
        %1498 = vmatmul.mubr.bf16.gmra.mxu0 %v1425
        %v1499 = vpop.f32.mrf.mxu0
        %v1500 = vadd.f32 %v1329, %v1499
        %v1501 = vpop.f32.mrf.mxu0
        %v1502 = vadd.f32 %v1329, %v1501
        %v1503 = vpop.f32.mrf.mxu0
        %v1504 = vadd.f32 %v1334, %v1503
        %v1505 = vpop.f32.mrf.mxu0
        %v1506 = vadd.f32 %v1334, %v1505
        %1507 = vmatprep.mubr.bf16.mxu0 %v1430
        %1508 = vmatmul.mubr.bf16.gmra.mxu0 %v1429
        %v1509 = vpop.f32.mrf.mxu0
        %v1510 = vadd.f32 %v1339, %v1509
        %v1511 = vpop.f32.mrf.mxu0
        %v1512 = vadd.f32 %v1339, %v1511
        %v1513 = vpop.f32.mrf.mxu0
        %v1514 = vadd.f32 %v1344, %v1513
        %v1515 = vpop.f32.mrf.mxu0
        %v1516 = vadd.f32 %v1344, %v1515
        %1517 = vmatprep.mubr.bf16.mxu0 %v1434
        %1518 = vmatmul.mubr.bf16.gmra.mxu0 %v1433
        %v1519 = vpop.f32.mrf.mxu0
        %v1520 = vadd.f32 %v1349, %v1519
        %v1521 = vpop.f32.mrf.mxu0
        %v1522 = vadd.f32 %v1349, %v1521
        %v1523 = vpop.f32.mrf.mxu0
        %v1524 = vadd.f32 %v1354, %v1523
        %v1525 = vpop.f32.mrf.mxu0
        %v1526 = vadd.f32 %v1354, %v1525
        %1527 = vmatprep.mubr.bf16.mxu0 %v1438
        %1528 = vmatmul.mubr.bf16.gmra.mxu0 %v1437
        %v1529 = vpop.f32.mrf.mxu0
        %v1530 = vadd.f32 %v1359, %v1529
        %v1531 = vpop.f32.mrf.mxu0
        %v1532 = vadd.f32 %v1359, %v1531
        %v1533 = vpop.f32.mrf.mxu0
        %v1534 = vadd.f32 %v1364, %v1533
        %v1535 = vpop.f32.mrf.mxu0
        %v1536 = vadd.f32 %v1364, %v1535
        %1537 = vmatprep.mubr.bf16.mxu0 %v1442
        %1538 = vmatmul.mubr.bf16.gmra.mxu0 %v1441
        %v1539 = vpop.f32.mrf.mxu0
        %v1540 = vadd.f32 %v1369, %v1539
        %v1541 = vpop.f32.mrf.mxu0
        %v1542 = vadd.f32 %v1369, %v1541
        %v1543 = vpop.f32.mrf.mxu0
        %v1544 = vpop.f32.mrf.mxu0
        %1545 = vdwg.mxu0
        %1546 = vmatprep.subr.bf16.mxu0 %v1300
        %1547 = vmatpush1.bf16.msra.mxu0 %v1299
        %1548 = vmatprep.subr.bf16.mxu0 %v1298
        %1549 = vmatpush1.bf16.msra.mxu0 %v1297
        %1550 = vmatprep.subr.bf16.mxu0 %v1296
        %1551 = vmatpush1.bf16.msra.mxu0 %v1295
        %1552 = vmatprep.subr.bf16.mxu0 %v1294
        %1553 = vmatpush1.bf16.msra.mxu0 %v1293
        %1554 = vmatprep.subr.bf16.mxu0 %v1292
        %1555 = vmatpush1.bf16.msra.mxu0 %v1291
        %1556 = vmatprep.subr.bf16.mxu0 %v1290
        %1557 = vmatpush1.bf16.msra.mxu0 %v1289
        %1558 = vmatprep.subr.bf16.mxu0 %v1288
        %1559 = vmatpush1.bf16.msra.mxu0 %v1287
        %1560 = vmatprep.subr.bf16.mxu0 %v1286
        %1561 = vmatpush1.bf16.msra.mxu0 %v1285
        %1562 = vmatprep.subr.bf16.mxu0 %v1316
        %1563 = vmatpush2.bf16.msra.mxu0 %v1315
        %1564 = vmatprep.subr.bf16.mxu0 %v1314
        %1565 = vmatpush2.bf16.msra.mxu0 %v1313
        %1566 = vmatprep.subr.bf16.mxu0 %v1312
        %1567 = vmatpush2.bf16.msra.mxu0 %v1311
        %1568 = vmatprep.subr.bf16.mxu0 %v1310
        %1569 = vmatpush2.bf16.msra.mxu0 %v1309
        %1570 = vmatprep.subr.bf16.mxu0 %v1308
        %1571 = vmatpush2.bf16.msra.mxu0 %v1307
        %1572 = vmatprep.subr.bf16.mxu0 %v1306
        %1573 = vmatpush2.bf16.msra.mxu0 %v1305
        %1574 = vmatprep.subr.bf16.mxu0 %v1304
        %1575 = vmatpush2.bf16.msra.mxu0 %v1303
        %1576 = vmatprep.subr.bf16.mxu0 %v1302
        %1577 = vmatpush2.bf16.msra.mxu0 %v1301
        %1578 = vmatprep.mubr.bf16.mxu0 %v1428
        %1579 = vmatmul.mubr.bf16.gmra.mxu0 %v1427
        %v1580 = vpop.f32.mrf.mxu0
        %v1581 = vadd.f32 %v1500, %v1580
        %v1582 = vpop.f32.mrf.mxu0
        %v1583 = vadd.f32 %v1502, %v1582
        %v1584 = vpop.f32.mrf.mxu0
        %v1585 = vadd.f32 %v1504, %v1584
        %v1586 = vpop.f32.mrf.mxu0
        %v1587 = vadd.f32 %v1506, %v1586
        %1588 = vmatprep.mubr.bf16.mxu0 %v1432
        %1589 = vmatmul.mubr.bf16.gmra.mxu0 %v1431
        %v1590 = vpop.f32.mrf.mxu0
        %v1591 = vadd.f32 %v1510, %v1590
        %v1592 = vpop.f32.mrf.mxu0
        %v1593 = vadd.f32 %v1512, %v1592
        %v1594 = vpop.f32.mrf.mxu0
        %v1595 = vadd.f32 %v1514, %v1594
        %v1596 = vpop.f32.mrf.mxu0
        %v1597 = vadd.f32 %v1516, %v1596
        %1598 = vmatprep.mubr.bf16.mxu0 %v1436
        %1599 = vmatmul.mubr.bf16.gmra.mxu0 %v1435
        %v1600 = vpop.f32.mrf.mxu0
        %v1601 = vadd.f32 %v1520, %v1600
        %v1602 = vpop.f32.mrf.mxu0
        %v1603 = vadd.f32 %v1522, %v1602
        %v1604 = vpop.f32.mrf.mxu0
        %v1605 = vadd.f32 %v1524, %v1604
        %v1606 = vpop.f32.mrf.mxu0
        %v1607 = vadd.f32 %v1526, %v1606
        %1608 = vmatprep.mubr.bf16.mxu0 %v1440
        %1609 = vmatmul.mubr.bf16.gmra.mxu0 %v1439
        %v1610 = vpop.f32.mrf.mxu0
        %v1611 = vadd.f32 %v1530, %v1610
        %v1612 = vpop.f32.mrf.mxu0
        %v1613 = vadd.f32 %v1532, %v1612
        %v1614 = vpop.f32.mrf.mxu0
        %v1615 = vadd.f32 %v1534, %v1614
        %v1616 = vpop.f32.mrf.mxu0
        %v1617 = vadd.f32 %v1536, %v1616
        %1618 = vmatprep.mubr.bf16.mxu0 %v1444
        %1619 = vmatmul.mubr.bf16.gmra.mxu0 %v1443
        %v1620 = vpop.f32.mrf.mxu0
        %v1621 = vadd.f32 %v1540, %v1620
        %v1622 = vpop.f32.mrf.mxu0
        %v1623 = vadd.f32 %v1542, %v1622
        %v1624 = vpop.f32.mrf.mxu0
        %v1625 = vpop.f32.mrf.mxu0
        %1626 = vdwg.mxu0
        %v1627 = vmax.f32 %v1581, %v1591
        %v1628 = vmax.f32 %v1583, %v1593
        %v1629 = vmax.f32 %v1585, %v1595
        %v1630 = vmax.f32 %v1587, %v1597
        %v1631 = vsub.f32 %v1581, %v1627
        %v1632 = vsub.f32 %v1583, %v1628
        %v1633 = vsub.f32 %v1585, %v1629
        %v1634 = vsub.f32 %v1587, %v1630
        %v1635 = vmul.f32 %v1631, 1.442695
        %v1636 = vpow.pop %v1635
        %v1637 = vmul.f32 %v1632, 1.442695
        %v1638 = vpow.pop %v1637
        %v1639 = vmul.f32 %v1633, 1.442695
        %v1640 = vpow.pop %v1639
        %v1641 = vmul.f32 %v1634, 1.442695
        %v1642 = vpow.pop %v1641
        %v1643 = vsub.f32 %v1591, %v1627
        %v1644 = vsub.f32 %v1593, %v1628
        %v1645 = vsub.f32 %v1595, %v1629
        %v1646 = vsub.f32 %v1597, %v1630
        %v1647 = vmul.f32 %v1643, 1.442695
        %v1648 = vpow.pop %v1647
        %v1649 = vmul.f32 %v1644, 1.442695
        %v1650 = vpow.pop %v1649
        %v1651 = vmul.f32 %v1645, 1.442695
        %v1652 = vpow.pop %v1651
        %v1653 = vmul.f32 %v1646, 1.442695
        %v1654 = vpow.pop %v1653
        %v1655 = vadd.f32 %v1636, %v1648
        %v1656 = vadd.f32 %v1638, %v1650
        %v1657 = vadd.f32 %v1640, %v1652
        %v1658 = vadd.f32 %v1642, %v1654
        %v1659 = vrcp.pop %v1655
        %v1660 = vrcp.pop %v1656
        %v1661 = vrcp.pop %v1657
        %v1662 = vrcp.pop %v1658
        %1663 = vst [vmem:[%s276] sm:$0xff] %v1581
        %1664 = vst [vmem:[%s276 + $0x8] sm:$0xff] %v1583
        %1665 = vst [vmem:[%s276 + $0x10] sm:$0xff] %v1585
        %1666 = vst [vmem:[%s276 + $0x18] sm:$0xff] %v1587
        %1667 = vst [vmem:[%s276 + $0x20] sm:$0xff] %v1591
        %1668 = vst [vmem:[%s276 + $0x28] sm:$0xff] %v1593
        %1669 = vst [vmem:[%s276 + $0x30] sm:$0xff] %v1595
        %1670 = vst [vmem:[%s276 + $0x38] sm:$0xff] %v1597
        %v1671 = vmul.f32 %v1636, %v1659
        %v1672 = vmul.f32 %v1638, %v1660
        %v1673 = vmul.f32 %v1640, %v1661
        %v1674 = vmul.f32 %v1642, %v1662
        %1675 = vst [vmem:[%s283] sm:$0xff] %v1671
        %1676 = vst [vmem:[%s283 + $0x8] sm:$0xff] %v1672
        %1677 = vst [vmem:[%s283 + $0x10] sm:$0xff] %v1673
        %1678 = vst [vmem:[%s283 + $0x18] sm:$0xff] %v1674
        %v1679 = vmul.f32 %v1648, %v1659
        %v1680 = vmul.f32 %v1650, %v1660
        %v1681 = vmul.f32 %v1652, %v1661
        %v1682 = vmul.f32 %v1654, %v1662
        %1683 = vst [vmem:[%s283 + $0x20] sm:$0xff] %v1679
        %1684 = vst [vmem:[%s283 + $0x28] sm:$0xff] %v1680
        %1685 = vst [vmem:[%s283 + $0x30] sm:$0xff] %v1681
        %1686 = vst [vmem:[%s283 + $0x38] sm:$0xff] %v1682
        %1687 = vst [vmem:[%s290] sm:$0xff] %v1601
        %1688 = vst [vmem:[%s290 + $0x8] sm:$0xff] %v1603
        %1689 = vst [vmem:[%s290 + $0x10] sm:$0xff] %v1605
        %1690 = vst [vmem:[%s290 + $0x18] sm:$0xff] %v1607
        %1691 = vst [vmem:[%s290 + $0x20] sm:$0xff] %v1611
        %1692 = vst [vmem:[%s290 + $0x28] sm:$0xff] %v1613
        %1693 = vst [vmem:[%s290 + $0x30] sm:$0xff] %v1615
        %1694 = vst [vmem:[%s290 + $0x38] sm:$0xff] %v1617
        %1695 = vst [vmem:[%s290 + $0x40] sm:$0xff] %v1621
        %1696 = vst [vmem:[%s290 + $0x48] sm:$0xff] %v1623
        %s1697 = sand.u32 %s137, 1
        %s1698 = scalar_lea.sflag [#allocation3], %s1697
        %s1699 = sand.u32 %s137, 1
        %s1700 = smul.addr %s1699, 64
        %s1701 = scalar_lea.vmem [#allocation2], %s1700
        %s1702 = sand.u32 %s24, 1
        %s1703 = scalar_lea.sflag [#allocation5], %s1702
        %s1704 = sand.u32 %s165, 1
        %s1705 = smul.addr %s1704, 64
        %s1706 = scalar_lea.vmem [#allocation4], %s1705
        %s1707 = sand.u32 %s24, 1
        %s1708 = scalar_lea.sflag [#allocation5], %s1707
        %s1709 = sand.u32 %s193, 1
        %s1710 = smul.addr %s1709, 80
        %s1711 = scalar_lea.vmem [#allocation6], %s1710
        // Predicated region
        $region37: #{tpu_custom_call.1} parent=35 // pred_check
          %p1712 = pneg %p147
        $region38: #{tpu_custom_call.1} parent=35 // pred_check_branch
          %1714 = sbr.rel (%p1712) target = $region40
        $region39: #{tpu_custom_call.1} parent=35 // pred_region
          %s1715 = smul.u32 2, %s29
          %s1717 = ssub.s32 1024, 1024
          %1718 = vsyncadd %s1698, %s1717
          %s1719 = smul.addr %s28, 16
          %s1720 = sadd.s32 %s1715, %s1719
          %s1721 = smul.addr %s1720, 128
          %s1722 = scalar_lea.hbm %s4, %s1721
          %s1723 = sshll.u32 %s1701, 4
          %s1724 = int_to_ptr.vmem [resolvable:$true] %s1723
          %1729 = dma.vmem_to_hbm [thread:$0]  %s1724, 1024, %s1722, %s1698, 256, 512, 16
        $region40: #{tpu_custom_call.1} parent=35 // pred_fallthru
          _
        // Predicated region
        $region41: #{tpu_custom_call.1} parent=35 // pred_check
          %p1730 = pneg %p175
        $region42: #{tpu_custom_call.1} parent=35 // pred_check_branch
          %1732 = sbr.rel (%p1730) target = $region44
        $region43: #{tpu_custom_call.1} parent=35 // pred_region
          %s1733 = smul.u32 2, %s29
          %s1735 = ssub.s32 1024, 1024
          %1736 = vsyncadd %s1703, %s1735
          %s1737 = smul.addr %s28, 16
          %s1738 = sadd.s32 %s1733, %s1737
          %s1739 = smul.addr %s1738, 128
          %s1740 = scalar_lea.hbm %s5, %s1739
          %s1741 = sshll.u32 %s1706, 4
          %s1742 = int_to_ptr.vmem [resolvable:$true] %s1741
          %1747 = dma.vmem_to_hbm [thread:$0]  %s1742, 1024, %s1740, %s1703, 256, 512, 16
        $region44: #{tpu_custom_call.1} parent=35 // pred_fallthru
          _
        // Predicated region
        $region45: #{tpu_custom_call.1} parent=35 // pred_check
          %p1748 = pneg %p203
        $region46: #{tpu_custom_call.1} parent=35 // pred_check_branch
          %1750 = sbr.rel (%p1748) target = $region48
        $region47: #{tpu_custom_call.1} parent=35 // pred_region
          %s1751 = smul.u32 2, %s29
          %s1753 = ssub.s32 1280, 1280
          %1754 = vsyncadd %s1708, %s1753
          %s1755 = smul.addr %s28, 20
          %s1756 = sadd.s32 %s1751, %s1755
          %s1757 = smul.addr %s1756, 128
          %s1758 = scalar_lea.hbm %s6, %s1757
          %s1759 = sshll.u32 %s1711, 4
          %s1760 = int_to_ptr.vmem [resolvable:$true] %s1759
          %1765 = dma.vmem_to_hbm [thread:$0]  %s1760, 1280, %s1758, %s1708, 256, 512, 16
        $region48: #{tpu_custom_call.1} parent=35 // pred_fallthru
          _
      $region36: #{tpu_custom_call.1} parent=5 // pred_fallthru
        _
      %p1766 = scmp.le.s32.totalorder 2, %s19
      // Predicated region
      $region49: #{tpu_custom_call.1} parent=5 // pred_check
        %p1767 = pneg %p1766
      $region50: #{tpu_custom_call.1} parent=5 // pred_check_branch
        %1769 = sbr.rel (%p1767) target = $region52
      $region51: #{tpu_custom_call.1} parent=5 // pred_region
        %s1770 = ssub.s32 %s19, 2
        // Predicated region
        $region53: #{tpu_custom_call.1} parent=51 // pred_check
          %p1771 = pneg %p153
        $region54: #{tpu_custom_call.1} parent=51 // pred_check_branch
          %1773 = sbr.rel (%p1771) target = $region56
        $region55: #{tpu_custom_call.1} parent=51 // pred_region
          %s1774 = sand.u32 %s138, 1
          %s1775 = scalar_lea.sflag [#allocation3], %s1774
          %s1776 = sand.u32 %s138, 1
          %s1777 = smul.addr %s1776, 64
          %s1778 = scalar_lea.vmem [#allocation2], %s1777
          %1779 = dma.done %s1775, 1024
        $region56: #{tpu_custom_call.1} parent=51 // pred_fallthru
          _
        // Predicated region
        $region57: #{tpu_custom_call.1} parent=51 // pred_check
          %p1780 = pneg %p181
        $region58: #{tpu_custom_call.1} parent=51 // pred_check_branch
          %1782 = sbr.rel (%p1780) target = $region60
        $region59: #{tpu_custom_call.1} parent=51 // pred_region
          %s1783 = sand.u32 %s25, 1
          %s1784 = scalar_lea.sflag [#allocation5], %s1783
          %s1785 = sand.u32 %s166, 1
          %s1786 = smul.addr %s1785, 64
          %s1787 = scalar_lea.vmem [#allocation4], %s1786
          %1788 = dma.done %s1784, 1024
        $region60: #{tpu_custom_call.1} parent=51 // pred_fallthru
          _
        // Predicated region
        $region61: #{tpu_custom_call.1} parent=51 // pred_check
          %p1789 = pneg %p209
        $region62: #{tpu_custom_call.1} parent=51 // pred_check_branch
          %1791 = sbr.rel (%p1789) target = $region64
        $region63: #{tpu_custom_call.1} parent=51 // pred_region
          %s1792 = sand.u32 %s25, 1
          %s1793 = scalar_lea.sflag [#allocation5], %s1792
          %s1794 = sand.u32 %s194, 1
          %s1795 = smul.addr %s1794, 80
          %s1796 = scalar_lea.vmem [#allocation6], %s1795
          %1797 = dma.done %s1793, 1280
        $region64: #{tpu_custom_call.1} parent=51 // pred_fallthru
          _
      $region52: #{tpu_custom_call.1} parent=5 // pred_fallthru
        _
    $region6: #{tpu_custom_call.1} parent=1 // loop_footer
      %s23 = sadd.s32 1, %s19
    $region7: #{tpu_custom_call.1} parent=1 // loop_footer_branch
      %18 = sbr.rel target = $region3
    $region8: #{tpu_custom_call.1} parent=1 // loop_exit
      _
    %1798 = vsyncpa [#allocation3], 1
    %s1799 = scalar_lea.sflag [#allocation3], 1
    %1800 = vsyncpa %s1799, 1
    %1801 = vsyncpa [#allocation5], 1
    %s1802 = scalar_lea.sflag [#allocation5], 1
    %1803 = vsyncpa %s1802, 1

</llo_original>
